<compile_context>
chip_gen: v6e
topology: v6e:2x2x1
jax: 0.10.0
libtpu: 0.0.40
codegen_flags: <defaults>
</compile_context>

<pallas_src>
import functools

import jax
import jax.numpy as jnp
import numpy as np
from jax import lax
from jax.experimental import pallas as pl
from jax.experimental.pallas import tpu as pltpu

LANE = 128      # pad every feature dim to a multiple of this (lane-dense stores / full MXU)
TM = 128        # node-row tile (works on v5e/v6e/v7x; sweep 256 on v6e/v7x for big graphs)
_NEG = -1e30


# ----------------------------------------------------------------------------
# small helpers
# ----------------------------------------------------------------------------
def _rup(v, m):
    return (v + m - 1) // m * m


def _pad2(a, rows, cols):
    r, c = a.shape
    return jnp.pad(a, ((0, rows - r), (0, cols - c)))


def _row_spec(f):
    return pl.BlockSpec((TM, f), lambda i: (i, 0))


def _full_spec(r, c):
    # same block index every grid step -> fetched once, stays resident in VMEM
    return pl.BlockSpec((r, c), lambda i: (0, 0))


def _cparams():
    return pltpu.CompilerParams(
        dimension_semantics=("parallel",),          # shard row tiles across TCs (v7x megacore)
        vmem_limit_bytes=48 * 1024 * 1024)          # above 32 MiB default, fits v7x 64 MiB


def _dot(a, b):
    # a @ b on the MXU: bf16 operands, f32 accumulation.
    return lax.dot_general(
        a.astype(jnp.bfloat16), b.astype(jnp.bfloat16),
        dimension_numbers=(((1,), (0,)), ((), ())),
        preferred_element_type=jnp.float32)


def _dot_t(a, b):
    # a @ b.T without materializing the transpose (contract last axes of both operands).
    return lax.dot_general(
        a.astype(jnp.bfloat16), b.astype(jnp.bfloat16),
        dimension_numbers=(((1,), (1,)), ((), ())),
        preferred_element_type=jnp.float32)


def _softmax_masked(logits, n_valid):
    # softmax over the last axis, masking padded columns (>= n_valid) to -inf.
    col = lax.broadcasted_iota(jnp.int32, logits.shape, 1)
    logits = jnp.where(col < n_valid, logits, _NEG)
    m = jnp.max(logits, axis=-1, keepdims=True)
    e = jnp.exp(logits - m)
    return e * pl.reciprocal(jnp.sum(e, axis=-1, keepdims=True), approx=True)


# ----------------------------------------------------------------------------
# Pallas kernels (each one is row-tiled over node tiles of size TM)
# ----------------------------------------------------------------------------
def project_kernel(x_ref, w_ref, z_ref):
    # z = x @ W   (row-local projection before adjacency aggregation)
    z_ref[...] = _dot(x_ref[...], w_ref[...]).astype(z_ref.dtype)


def agg_project_kernel(adj_ref, z_ref, b_ref, wnext_ref, out_ref):
    # h = relu(adj_tile @ Z + b);  out = h @ W_next
    h = jnp.maximum(_dot(adj_ref[...], z_ref[...]) + b_ref[...], 0.0)
    out_ref[...] = _dot(h, wnext_ref[...]).astype(out_ref.dtype)


def agg_qkv_kernel(adj_ref, z_ref, b_ref, wpg_ref, bpg_ref,
                   h_ref, ph_ref, g_ref):
    # h2 = relu(adj_tile @ Z2 + b2);  [phi | g] = h2 @ [Wp | Wg] + [bp | bg]  (one wide MXU matmul)
    h = jnp.maximum(_dot(adj_ref[...], z_ref[...]) + b_ref[...], 0.0)
    h_ref[...] = h.astype(h_ref.dtype)
    pg = _dot(h, wpg_ref[...]) + bpg_ref[...]
    f2 = ph_ref.shape[1]                       # 128-lane aligned split point
    ph_ref[...] = pg[:, :f2].astype(ph_ref.dtype)
    g_ref[...] = pg[:, f2:].astype(g_ref.dtype)


def nonlocal_dense_kernel(h2_ref, ph_ref, g_ref, wt_ref, bt_ref,
                          wd1_ref, bd1_ref, wd2_ref, bd2_ref, wd3_ref, bd3_ref,
                          w3_ref, h3_ref, z3_ref, *, n_valid):
    # theta = h2_tile @ Wt + bt (recomputed locally: no HBM round trip for theta)
    # h3 = softmax(theta @ PHI^T) @ G + h2_tile, then dense1..3 (+relu) and z3 = h6 @ W3
    theta = _dot(h2_ref[...], wt_ref[...]) + bt_ref[...]
    scores = _dot_t(theta, ph_ref[...])                       # [TM, NP] f32
    attn = _softmax_masked(scores, n_valid)                   # mask padded key nodes
    h3 = _dot(attn, g_ref[...]) + h2_ref[...].astype(jnp.float32)
    h3_ref[...] = h3.astype(h3_ref.dtype)
    h = jnp.maximum(_dot(h3, wd1_ref[...]) + bd1_ref[...], 0.0)
    h = jnp.maximum(_dot(h, wd2_ref[...]) + bd2_ref[...], 0.0)
    h = jnp.maximum(_dot(h, wd3_ref[...]) + bd3_ref[...], 0.0)
    z3_ref[...] = _dot(h, w3_ref[...]).astype(z3_ref.dtype)


def gram_agg_kernel(h3row_ref, h3all_ref, adj_ref, z3_ref, b3_ref, w4_ref,
                    aout_ref, z4_ref):
    # Fused: aout_tile = sigmoid(h3_tile @ H3^T)   (lane-dense [TM, NP] bf16 output)
    #        z4_tile   = relu(adj_tile @ Z3 + b3) @ W4   (conv3 relu + conv4 projection)
    aout_ref[...] = jax.nn.sigmoid(
        _dot_t(h3row_ref[...], h3all_ref[...])).astype(aout_ref.dtype)
    h = jnp.maximum(_dot(adj_ref[...], z3_ref[...]) + b3_ref[...], 0.0)
    z4_ref[...] = _dot(h, w4_ref[...]).astype(z4_ref.dtype)


def agg_softmax_kernel(adj_ref, z_ref, b_ref, out_ref, *, n_valid):
    # Att_tile = softmax(adj_tile @ Z4 + b4) over the (masked-padded) class axis
    logits = _dot(adj_ref[...], z_ref[...]) + b_ref[...]
    out_ref[...] = _softmax_masked(logits, n_valid).astype(out_ref.dtype)


# ----------------------------------------------------------------------------
# pallas_call wrappers
# ----------------------------------------------------------------------------
def _project(x, w):
    npad, fin = x.shape
    fout = w.shape[1]
    return pl.pallas_call(
        project_kernel,
        grid=(npad // TM,),
        in_specs=[_row_spec(fin), _full_spec(fin, fout)],
        out_specs=_row_spec(fout),
        out_shape=jax.ShapeDtypeStruct((npad, fout), jnp.bfloat16),
        compiler_params=_cparams(),
    )(x, w)


def _agg_project(adj, z, b, w_next):
    npad, fmid = z.shape
    fout = w_next.shape[1]
    return pl.pallas_call(
        agg_project_kernel,
        grid=(npad // TM,),
        in_specs=[_row_spec(npad), _full_spec(npad, fmid),
                  _full_spec(1, fmid), _full_spec(fmid, fout)],
        out_specs=_row_spec(fout),
        out_shape=jax.ShapeDtypeStruct((npad, fout), jnp.bfloat16),
        compiler_params=_cparams(),
        cost_estimate=pl.CostEstimate(
            flops=2 * npad * npad * fmid + 2 * npad * fmid * fout,
            transcendentals=0,
            bytes_accessed=2 * (npad * npad + npad * fmid + fmid * fout + npad * fout)
                           + 4 * fmid),
    )(adj, z, b, w_next)


def _agg_qkv(adj, z, b, wpg, bpg):
    npad, f2 = z.shape
    return pl.pallas_call(
        agg_qkv_kernel,
        grid=(npad // TM,),
        in_specs=[_row_spec(npad), _full_spec(npad, f2), _full_spec(1, f2),
                  _full_spec(f2, 2 * f2), _full_spec(1, 2 * f2)],
        out_specs=(_row_spec(f2), _row_spec(f2), _row_spec(f2)),
        out_shape=tuple(jax.ShapeDtypeStruct((npad, f2), jnp.bfloat16) for _ in range(3)),
        compiler_params=_cparams(),
        cost_estimate=pl.CostEstimate(
            flops=2 * npad * npad * f2 + 4 * npad * f2 * f2,
            transcendentals=0,
            bytes_accessed=2 * (npad * npad + 4 * npad * f2 + 2 * f2 * f2)
                           + 4 * 3 * f2),
    )(adj, z, b, wpg, bpg)


def _nonlocal_dense(h2, ph, g, wt, bt, wd1, bd1, wd2, bd2, wd3, bd3, w3, n_valid):
    npad, f2 = h2.shape
    f3 = w3.shape[1]
    kern = functools.partial(nonlocal_dense_kernel, n_valid=n_valid)
    return pl.pallas_call(
        kern,
        grid=(npad // TM,),
        in_specs=[_row_spec(f2), _full_spec(npad, f2), _full_spec(npad, f2),
                  _full_spec(f2, f2), _full_spec(1, f2),
                  _full_spec(f2, f2), _full_spec(1, f2),
                  _full_spec(f2, f2), _full_spec(1, f2),
                  _full_spec(f2, f2), _full_spec(1, f2),
                  _full_spec(f2, f3)],
        out_specs=(_row_spec(f2), _row_spec(f3)),
        out_shape=(jax.ShapeDtypeStruct((npad, f2), jnp.bfloat16),
                   jax.ShapeDtypeStruct((npad, f3), jnp.bfloat16)),
        compiler_params=_cparams(),
        cost_estimate=pl.CostEstimate(
            flops=4 * npad * npad * f2 + 2 * npad * f2 * (4 * f2 + f3),
            transcendentals=npad * npad + npad,
            bytes_accessed=2 * (4 * npad * f2 + npad * f3 + 4 * f2 * f2 + f2 * f3)
                           + 4 * 4 * f2),
    )(h2, ph, g, wt, bt, wd1, bd1, wd2, bd2, wd3, bd3, w3)


def _gram_agg(h3, adj, z3, b3, w4):
    npad, f2 = h3.shape
    f3 = z3.shape[1]
    f4 = w4.shape[1]
    return pl.pallas_call(
        gram_agg_kernel,
        grid=(npad // TM,),
        in_specs=[_row_spec(f2), _full_spec(npad, f2),
                  _row_spec(npad), _full_spec(npad, f3),
                  _full_spec(1, f3), _full_spec(f3, f4)],
        out_specs=(_row_spec(npad), _row_spec(f4)),
        out_shape=(jax.ShapeDtypeStruct((npad, npad), jnp.bfloat16),
                   jax.ShapeDtypeStruct((npad, f4), jnp.bfloat16)),
        compiler_params=_cparams(),
        cost_estimate=pl.CostEstimate(
            flops=2 * npad * npad * (f2 + f3) + 2 * npad * f3 * f4,
            transcendentals=npad * npad,
            bytes_accessed=2 * (2 * npad * f2 + 2 * npad * npad + npad * f3
                                + f3 * f4 + npad * f4) + 4 * f3),
    )(h3, h3, adj, z3, b3, w4)


def _agg_softmax(adj, z, b, n_valid):
    npad, f4 = z.shape
    kern = functools.partial(agg_softmax_kernel, n_valid=n_valid)
    return pl.pallas_call(
        kern,
        grid=(npad // TM,),
        in_specs=[_row_spec(npad), _full_spec(npad, f4), _full_spec(1, f4)],
        out_specs=_row_spec(f4),
        out_shape=jax.ShapeDtypeStruct((npad, f4), jnp.float32),
        compiler_params=_cparams(),
        cost_estimate=pl.CostEstimate(
            flops=2 * npad * npad * f4,
            transcendentals=npad * f4 + npad,
            bytes_accessed=2 * (npad * npad + npad * f4) + 4 * (f4 + npad * f4)),
    )(adj, z, b)


# ----------------------------------------------------------------------------
# Forward wrapper (pads to lane-dense shapes, chains the kernels, slices back)
# ----------------------------------------------------------------------------
@jax.jit
def densenet3_forward(adj, x, params):
    n, nfeat = x.shape
    nhid1 = params["w1"].shape[1]
    nhid2 = params["w2"].shape[1]
    nhid3 = params["w3"].shape[1]
    nout = params["w4"].shape[1]

    npad = _rup(n, TM)
    f0, f1, f2 = _rup(nfeat, LANE), _rup(nhid1, LANE), _rup(nhid2, LANE)
    f3, f4 = _rup(nhid3, LANE), _rup(nout, LANE)

    bf = jnp.bfloat16
    adj_p = _pad2(adj, npad, npad).astype(bf)
    x_p = _pad2(x, npad, f0).astype(bf)

    def wpad(name, r, c):
        return _pad2(params[name], r, c).astype(bf)

    def bpad(name, c):
        return _pad2(params[name], 1, c)               # biases stay f32

    w1, b1 = wpad("w1", f0, f1), bpad("b1", f1)
    w2, b2 = wpad("w2", f1, f2), bpad("b2", f2)
    w_t, b_t = wpad("wt", f2, f2), bpad("bt", f2)
    wpg = jnp.concatenate([wpad("wp", f2, f2), wpad("wg", f2, f2)], axis=1)
    bpg = jnp.concatenate([bpad("bp", f2), bpad("bg", f2)], axis=1)
    wd1, bd1 = wpad("wd1", f2, f2), bpad("bd1", f2)
    wd2, bd2 = wpad("wd2", f2, f2), bpad("bd2", f2)
    wd3, bd3 = wpad("wd3", f2, f2), bpad("bd3", f2)
    w3, b3 = wpad("w3", f2, f3), bpad("b3", f3)
    w4, b4 = wpad("w4", f3, f4), bpad("b4", f4)
    # dec2 (wdec/bdec) is dead code in the reference forward -> never DMA'd.

    z1 = _project(x_p, w1)                                        # X @ W1
    z2 = _agg_project(adj_p, z1, b1, w2)                          # relu(A@z1+b1) @ W2
    h2, ph, g = _agg_qkv(adj_p, z2, b2, wpg, bpg)                 # H2 and packed phi/g
    h3, z3 = _nonlocal_dense(h2, ph, g, w_t, b_t,                 # non-local + dense1..3 + @W3
                             wd1, bd1, wd2, bd2, wd3, bd3, w3, n_valid=n)
    a_out, z4 = _gram_agg(h3, adj_p, z3, b3, w4)                  # sigmoid(H3@H3^T) fused with
                                                                  # relu(A@z3+b3) @ W4
    att = _agg_softmax(adj_p, z4, b4, n_valid=nout)               # softmax(A@z4+b4, axis=1)

    return att[:n, :nout], a_out[:n, :n].astype(jnp.float32)


# ----------------------------------------------------------------------------
# Deterministic parameters / adjacency
# ----------------------------------------------------------------------------
def make_params(key, nfeat, nhid1, nhid2, nhid3, nout):
    def linear(k, fin, fout):
        kw, kb = jax.random.split(k)
        scale = 1.0 / np.sqrt(fin)
        w = jax.random.uniform(kw, (fin, fout), jnp.float32, -scale, scale)
        b = jax.random.uniform(kb, (1, fout), jnp.float32, -scale, scale)
        return w, b

    keys = jax.random.split(key, 11)
    p = {}
    p["w1"], p["b1"] = linear(keys[0], nfeat, nhid1)      # conv1
    p["w2"], p["b2"] = linear(keys[1], nhid1, nhid2)      # conv2
    p["wt"], p["bt"] = linear(keys[2], nhid2, nhid2)      # nlgcn theta
    p["wp"], p["bp"] = linear(keys[3], nhid2, nhid2)      # nlgcn phi
    p["wg"], p["bg"] = linear(keys[4], nhid2, nhid2)      # nlgcn g
    p["wdec"], p["bdec"] = linear(keys[5], nhid2, nhid3)  # dec2 (dead code, never used)
    p["wd1"], p["bd1"] = linear(keys[6], nhid2, nhid2)    # dense1
    p["wd2"], p["bd2"] = linear(keys[7], nhid2, nhid2)    # dense2
    p["wd3"], p["bd3"] = linear(keys[8], nhid2, nhid2)    # dense3
    p["w3"], p["b3"] = linear(keys[9], nhid2, nhid3)      # conv3
    p["w4"], p["b4"] = linear(keys[10], nhid3, nout)      # conv4
    return p


def make_adjacency(key, n):
    # random symmetric graph, self loops, symmetric normalization D^-1/2 (A+I) D^-1/2
    a = (jax.random.uniform(key, (n, n)) < 0.3).astype(jnp.float32)
    a = jnp.maximum(a, a.T)
    a = a + jnp.eye(n, dtype=jnp.float32)
    d = jnp.sum(a, axis=1)
    dinv = 1.0 / jnp.sqrt(d)
    return a * dinv[:, None] * dinv[None, :]


# ----------------------------------------------------------------------------
# Pure-JAX f32 reference for a correctness check
# ----------------------------------------------------------------------------
def reference_forward(adj, x, p):
    gcn = lambda h, w, b: adj @ (h @ w) + b
    lin = lambda h, w, b: h @ w + b
    h = jax.nn.relu(gcn(x, p["w1"], p["b1"]))
    h = jax.nn.relu(gcn(h, p["w2"], p["b2"]))
    theta = lin(h, p["wt"], p["bt"])
    phi = lin(h, p["wp"], p["bp"])
    g = lin(h, p["wg"], p["bg"])
    attn = jax.nn.softmax(theta @ phi.T, axis=-1)
    h = attn @ g + h
    a_out = jax.nn.sigmoid(h @ h.T)
    h = jax.nn.relu(lin(h, p["wd1"], p["bd1"]))
    h = jax.nn.relu(lin(h, p["wd2"], p["bd2"]))
    h = jax.nn.relu(lin(h, p["wd3"], p["bd3"]))
    att = jax.nn.relu(gcn(h, p["w3"], p["b3"]))
    att = gcn(att, p["w4"], p["b4"])
    att = jax.nn.softmax(att, axis=1)
    return att, a_out


if __name__ == "__main__":
    # Small shapes: 16 graph nodes, nfeat=8, nhid1=16, nhid2=32, nhid3=16, nout=8
    N, NFEAT, NHID1, NHID2, NHID3, NOUT = 16, 8, 16, 32, 16, 8

    key = jax.random.PRNGKey(0)
    k_x, k_a, k_p = jax.random.split(key, 3)

    x = jax.random.normal(k_x, (N, NFEAT), jnp.float32)
    adj = make_adjacency(k_a, N)
    params = make_params(k_p, NFEAT, NHID1, NHID2, NHID3, NOUT)

    att, a_out = densenet3_forward(adj, x, params)
    jax.block_until_ready((att, a_out))

    # Kernel uses bf16 MXU operands (f32 accumulation) -> loosened tolerance vs f32 reference.
    att_ref, a_ref = reference_forward(adj, x, params)
    np.testing.assert_allclose(np.asarray(att), np.asarray(att_ref), rtol=3e-2, atol=3e-2)
    np.testing.assert_allclose(np.asarray(a_out), np.asarray(a_ref), rtol=3e-2, atol=3e-2)

    print("KERNEL_OK")
</pallas_src>

<mosaic_0001>
module attributes {stable_mosaic.version = 11 : i64} {
  func.func @project_kernel(%arg0: i32, %arg1: memref<128x128xbf16, #tpu.memory_space<vmem>>, %arg2: memref<128x128xbf16, #tpu.memory_space<vmem>>, %arg3: memref<128x128xbf16, #tpu.memory_space<vmem>>) attributes {dimension_semantics = [#tpu.dimension_semantics<parallel>], iteration_bounds = array<i64: 1>, scalar_prefetch = 0 : i64, scratch_operands = 0 : i64, tpu.core_type = #tpu.core_type<tc>, window_params = [{transform_indices = @transform_0, window_bounds = array<i64: 128, 128>}, {pipeline_mode = #tpu.pipeline_mode<synchronous>, transform_indices = @transform_1, window_bounds = array<i64: 128, 128>}, {transform_indices = @transform_2, window_bounds = array<i64: 128, 128>}]} {
    %c0 = arith.constant 0 : index
    %c0_0 = arith.constant 0 : index
    %0 = vector.load %arg1[%c0, %c0_0] : memref<128x128xbf16, #tpu.memory_space<vmem>>, vector<128x128xbf16>
    %c0_1 = arith.constant 0 : index
    %c0_2 = arith.constant 0 : index
    %1 = vector.load %arg2[%c0_1, %c0_2] : memref<128x128xbf16, #tpu.memory_space<vmem>>, vector<128x128xbf16>
    %cst = arith.constant dense<0.000000e+00> : vector<128x128xf32>
    %2 = tpu.matmul %0, %1, %cst {dimension_numbers = #tpu.dot_dimension_numbers<[1], [0], [0], [1], [0, 0, 1, 1], [], []>} : vector<128x128xbf16>, vector<128x128xbf16>, vector<128x128xf32> -> vector<128x128xf32>
    %3 = arith.truncf %2 : vector<128x128xf32> to vector<128x128xbf16>
    %c0_3 = arith.constant 0 : index
    %c0_4 = arith.constant 0 : index
    %4 = vector.load %arg3[%c0_3, %c0_4] : memref<128x128xbf16, #tpu.memory_space<vmem>>, vector<128x128xbf16>
    tpu.vector_store %arg3[%c0_3, %c0_4], %3 {strides = array<i32>} : memref<128x128xbf16, #tpu.memory_space<vmem>>, vector<128x128xbf16>,
    return
  }
  func.func @transform_0(%arg0: i32) -> (i32, i32) {
    %c0_i32 = arith.constant 0 : i32
    %c0_i32_0 = arith.constant 0 : i32
    return %arg0, %c0_i32 : i32, i32
  }
  func.func @transform_1(%arg0: i32) -> (i32, i32) {
    %c0_i32 = arith.constant 0 : i32
    %c0_i32_0 = arith.constant 0 : i32
    %c0_i32_1 = arith.constant 0 : i32
    return %c0_i32, %c0_i32_0 : i32, i32
  }
  func.func @transform_2(%arg0: i32) -> (i32, i32) {
    %c0_i32 = arith.constant 0 : i32
    %c0_i32_0 = arith.constant 0 : i32
    return %arg0, %c0_i32 : i32, i32
  }
}

module attributes {stable_mosaic.version = 11 : i64} {
  func.func @agg_project_kernel(%arg0: i32, %arg1: memref<128x128xbf16, #tpu.memory_space<vmem>>, %arg2: memref<128x128xbf16, #tpu.memory_space<vmem>>, %arg3: memref<1x128xf32, #tpu.memory_space<vmem>>, %arg4: memref<128x128xbf16, #tpu.memory_space<vmem>>, %arg5: memref<128x128xbf16, #tpu.memory_space<vmem>>) attributes {dimension_semantics = [#tpu.dimension_semantics<parallel>], iteration_bounds = array<i64: 1>, scalar_prefetch = 0 : i64, scratch_operands = 0 : i64, tpu.core_type = #tpu.core_type<tc>, window_params = [{transform_indices = @transform_0, window_bounds = array<i64: 128, 128>}, {pipeline_mode = #tpu.pipeline_mode<synchronous>, transform_indices = @transform_1, window_bounds = array<i64: 128, 128>}, {pipeline_mode = #tpu.pipeline_mode<synchronous>, transform_indices = @transform_2, window_bounds = array<i64: 1, 128>}, {pipeline_mode = #tpu.pipeline_mode<synchronous>, transform_indices = @transform_3, window_bounds = array<i64: 128, 128>}, {transform_indices = @transform_4, window_bounds = array<i64: 128, 128>}]} {
    %c0 = arith.constant 0 : index
    %c0_0 = arith.constant 0 : index
    %0 = vector.load %arg1[%c0, %c0_0] : memref<128x128xbf16, #tpu.memory_space<vmem>>, vector<128x128xbf16>
    %c0_1 = arith.constant 0 : index
    %c0_2 = arith.constant 0 : index
    %1 = vector.load %arg2[%c0_1, %c0_2] : memref<128x128xbf16, #tpu.memory_space<vmem>>, vector<128x128xbf16>
    %cst = arith.constant dense<0.000000e+00> : vector<128x128xf32>
    %2 = tpu.matmul %0, %1, %cst {dimension_numbers = #tpu.dot_dimension_numbers<[1], [0], [0], [1], [0, 0, 1, 1], [], []>} : vector<128x128xbf16>, vector<128x128xbf16>, vector<128x128xf32> -> vector<128x128xf32>
    %c0_3 = arith.constant 0 : index
    %c0_4 = arith.constant 0 : index
    %3 = vector.load %arg3[%c0_3, %c0_4] : memref<1x128xf32, #tpu.memory_space<vmem>>, vector<1x128xf32>
    %4 = vector.broadcast %3 : vector<1x128xf32> to vector<128x128xf32>
    %5 = arith.addf %2, %4 : vector<128x128xf32>
    %cst_5 = arith.constant 0.000000e+00 : f32
    %6 = vector.broadcast %cst_5 : f32 to vector<128x128xf32>
    %7 = arith.maximumf %5, %6 : vector<128x128xf32>
    %c0_6 = arith.constant 0 : index
    %c0_7 = arith.constant 0 : index
    %8 = vector.load %arg4[%c0_6, %c0_7] : memref<128x128xbf16, #tpu.memory_space<vmem>>, vector<128x128xbf16>
    %9 = arith.truncf %7 : vector<128x128xf32> to vector<128x128xbf16>
    %cst_8 = arith.constant dense<0.000000e+00> : vector<128x128xf32>
    %10 = tpu.matmul %9, %8, %cst_8 {dimension_numbers = #tpu.dot_dimension_numbers<[1], [0], [0], [1], [0, 0, 1, 1], [], []>} : vector<128x128xbf16>, vector<128x128xbf16>, vector<128x128xf32> -> vector<128x128xf32>
    %11 = arith.truncf %10 : vector<128x128xf32> to vector<128x128xbf16>
    %c0_9 = arith.constant 0 : index
    %c0_10 = arith.constant 0 : index
    %12 = vector.load %arg5[%c0_9, %c0_10] : memref<128x128xbf16, #tpu.memory_space<vmem>>, vector<128x128xbf16>
    tpu.vector_store %arg5[%c0_9, %c0_10], %11 {strides = array<i32>} : memref<128x128xbf16, #tpu.memory_space<vmem>>, vector<128x128xbf16>,
    return
  }
  func.func @transform_0(%arg0: i32) -> (i32, i32) {
    %c0_i32 = arith.constant 0 : i32
    %c0_i32_0 = arith.constant 0 : i32
    return %arg0, %c0_i32 : i32, i32
  }
  func.func @transform_1(%arg0: i32) -> (i32, i32) {
    %c0_i32 = arith.constant 0 : i32
    %c0_i32_0 = arith.constant 0 : i32
    %c0_i32_1 = arith.constant 0 : i32
    return %c0_i32, %c0_i32_0 : i32, i32
  }
  func.func @transform_2(%arg0: i32) -> (i32, i32) {
    %c0_i32 = arith.constant 0 : i32
    %c0_i32_0 = arith.constant 0 : i32
    %c0_i32_1 = arith.constant 0 : i32
    return %c0_i32, %c0_i32_0 : i32, i32
  }
  func.func @transform_3(%arg0: i32) -> (i32, i32) {
    %c0_i32 = arith.constant 0 : i32
    %c0_i32_0 = arith.constant 0 : i32
    %c0_i32_1 = arith.constant 0 : i32
    return %c0_i32, %c0_i32_0 : i32, i32
  }
  func.func @transform_4(%arg0: i32) -> (i32, i32) {
    %c0_i32 = arith.constant 0 : i32
    %c0_i32_0 = arith.constant 0 : i32
    return %arg0, %c0_i32 : i32, i32
  }
}

module attributes {stable_mosaic.version = 11 : i64} {
  func.func @agg_qkv_kernel(%arg0: i32, %arg1: memref<128x128xbf16, #tpu.memory_space<vmem>>, %arg2: memref<128x128xbf16, #tpu.memory_space<vmem>>, %arg3: memref<1x128xf32, #tpu.memory_space<vmem>>, %arg4: memref<128x256xbf16, #tpu.memory_space<vmem>>, %arg5: memref<1x256xf32, #tpu.memory_space<vmem>>, %arg6: memref<128x128xbf16, #tpu.memory_space<vmem>>, %arg7: memref<128x128xbf16, #tpu.memory_space<vmem>>, %arg8: memref<128x128xbf16, #tpu.memory_space<vmem>>) attributes {dimension_semantics = [#tpu.dimension_semantics<parallel>], iteration_bounds = array<i64: 1>, scalar_prefetch = 0 : i64, scratch_operands = 0 : i64, tpu.core_type = #tpu.core_type<tc>, window_params = [{transform_indices = @transform_0, window_bounds = array<i64: 128, 128>}, {pipeline_mode = #tpu.pipeline_mode<synchronous>, transform_indices = @transform_1, window_bounds = array<i64: 128, 128>}, {pipeline_mode = #tpu.pipeline_mode<synchronous>, transform_indices = @transform_2, window_bounds = array<i64: 1, 128>}, {pipeline_mode = #tpu.pipeline_mode<synchronous>, transform_indices = @transform_3, window_bounds = array<i64: 128, 256>}, {pipeline_mode = #tpu.pipeline_mode<synchronous>, transform_indices = @transform_4, window_bounds = array<i64: 1, 256>}, {transform_indices = @transform_5, window_bounds = array<i64: 128, 128>}, {transform_indices = @transform_6, window_bounds = array<i64: 128, 128>}, {transform_indices = @transform_7, window_bounds = array<i64: 128, 128>}]} {
    %c0 = arith.constant 0 : index
    %c0_0 = arith.constant 0 : index
    %0 = vector.load %arg1[%c0, %c0_0] : memref<128x128xbf16, #tpu.memory_space<vmem>>, vector<128x128xbf16>
    %c0_1 = arith.constant 0 : index
    %c0_2 = arith.constant 0 : index
    %1 = vector.load %arg2[%c0_1, %c0_2] : memref<128x128xbf16, #tpu.memory_space<vmem>>, vector<128x128xbf16>
    %cst = arith.constant dense<0.000000e+00> : vector<128x128xf32>
    %2 = tpu.matmul %0, %1, %cst {dimension_numbers = #tpu.dot_dimension_numbers<[1], [0], [0], [1], [0, 0, 1, 1], [], []>} : vector<128x128xbf16>, vector<128x128xbf16>, vector<128x128xf32> -> vector<128x128xf32>
    %c0_3 = arith.constant 0 : index
    %c0_4 = arith.constant 0 : index
    %3 = vector.load %arg3[%c0_3, %c0_4] : memref<1x128xf32, #tpu.memory_space<vmem>>, vector<1x128xf32>
    %4 = vector.broadcast %3 : vector<1x128xf32> to vector<128x128xf32>
    %5 = arith.addf %2, %4 : vector<128x128xf32>
    %cst_5 = arith.constant 0.000000e+00 : f32
    %6 = vector.broadcast %cst_5 : f32 to vector<128x128xf32>
    %7 = arith.maximumf %5, %6 : vector<128x128xf32>
    %8 = arith.truncf %7 : vector<128x128xf32> to vector<128x128xbf16>
    %c0_6 = arith.constant 0 : index
    %c0_7 = arith.constant 0 : index
    %9 = vector.load %arg6[%c0_6, %c0_7] : memref<128x128xbf16, #tpu.memory_space<vmem>>, vector<128x128xbf16>
    tpu.vector_store %arg6[%c0_6, %c0_7], %8 {strides = array<i32>} : memref<128x128xbf16, #tpu.memory_space<vmem>>, vector<128x128xbf16>,
    %c0_8 = arith.constant 0 : index
    %c0_9 = arith.constant 0 : index
    %10 = vector.load %arg4[%c0_8, %c0_9] : memref<128x256xbf16, #tpu.memory_space<vmem>>, vector<128x256xbf16>
    %11 = arith.truncf %7 : vector<128x128xf32> to vector<128x128xbf16>
    %cst_10 = arith.constant dense<0.000000e+00> : vector<128x256xf32>
    %12 = tpu.matmul %11, %10, %cst_10 {dimension_numbers = #tpu.dot_dimension_numbers<[1], [0], [0], [1], [0, 0, 1, 1], [], []>} : vector<128x128xbf16>, vector<128x256xbf16>, vector<128x256xf32> -> vector<128x256xf32>
    %c0_11 = arith.constant 0 : index
    %c0_12 = arith.constant 0 : index
    %13 = vector.load %arg5[%c0_11, %c0_12] : memref<1x256xf32, #tpu.memory_space<vmem>>, vector<1x256xf32>
    %14 = vector.broadcast %13 : vector<1x256xf32> to vector<128x256xf32>
    %15 = arith.addf %12, %14 : vector<128x256xf32>
    %16 = vector.extract_strided_slice %15 {offsets = [0, 0], sizes = [128, 128], strides = [1, 1]} : vector<128x256xf32> to vector<128x128xf32>
    %17 = arith.truncf %16 : vector<128x128xf32> to vector<128x128xbf16>
    %c0_13 = arith.constant 0 : index
    %c0_14 = arith.constant 0 : index
    %18 = vector.load %arg7[%c0_13, %c0_14] : memref<128x128xbf16, #tpu.memory_space<vmem>>, vector<128x128xbf16>
    tpu.vector_store %arg7[%c0_13, %c0_14], %17 {strides = array<i32>} : memref<128x128xbf16, #tpu.memory_space<vmem>>, vector<128x128xbf16>,
    %19 = vector.extract_strided_slice %15 {offsets = [0, 128], sizes = [128, 128], strides = [1, 1]} : vector<128x256xf32> to vector<128x128xf32>
    %20 = arith.truncf %19 : vector<128x128xf32> to vector<128x128xbf16>
    %c0_15 = arith.constant 0 : index
    %c0_16 = arith.constant 0 : index
    %21 = vector.load %arg8[%c0_15, %c0_16] : memref<128x128xbf16, #tpu.memory_space<vmem>>, vector<128x128xbf16>
    tpu.vector_store %arg8[%c0_15, %c0_16], %20 {strides = array<i32>} : memref<128x128xbf16, #tpu.memory_space<vmem>>, vector<128x128xbf16>,
    return
  }
  func.func @transform_0(%arg0: i32) -> (i32, i32) {
    %c0_i32 = arith.constant 0 : i32
    %c0_i32_0 = arith.constant 0 : i32
    return %arg0, %c0_i32 : i32, i32
  }
  func.func @transform_1(%arg0: i32) -> (i32, i32) {
    %c0_i32 = arith.constant 0 : i32
    %c0_i32_0 = arith.constant 0 : i32
    %c0_i32_1 = arith.constant 0 : i32
    return %c0_i32, %c0_i32_0 : i32, i32
  }
  func.func @transform_2(%arg0: i32) -> (i32, i32) {
    %c0_i32 = arith.constant 0 : i32
    %c0_i32_0 = arith.constant 0 : i32
    %c0_i32_1 = arith.constant 0 : i32
    return %c0_i32, %c0_i32_0 : i32, i32
  }
  func.func @transform_3(%arg0: i32) -> (i32, i32) {
    %c0_i32 = arith.constant 0 : i32
    %c0_i32_0 = arith.constant 0 : i32
    %c0_i32_1 = arith.constant 0 : i32
    return %c0_i32, %c0_i32_0 : i32, i32
  }
  func.func @transform_4(%arg0: i32) -> (i32, i32) {
    %c0_i32 = arith.constant 0 : i32
    %c0_i32_0 = arith.constant 0 : i32
    %c0_i32_1 = arith.constant 0 : i32
    return %c0_i32, %c0_i32_0 : i32, i32
  }
  func.func @transform_5(%arg0: i32) -> (i32, i32) {
    %c0_i32 = arith.constant 0 : i32
    %c0_i32_0 = arith.constant 0 : i32
    return %arg0, %c0_i32 : i32, i32
  }
  func.func @transform_6(%arg0: i32) -> (i32, i32) {
    %c0_i32 = arith.constant 0 : i32
    %c0_i32_0 = arith.constant 0 : i32
    return %arg0, %c0_i32 : i32, i32
  }
  func.func @transform_7(%arg0: i32) -> (i32, i32) {
    %c0_i32 = arith.constant 0 : i32
    %c0_i32_0 = arith.constant 0 : i32
    return %arg0, %c0_i32 : i32, i32
  }
}

module attributes {stable_mosaic.version = 11 : i64} {
  func.func @nonlocal_dense_kernel(%arg0: i32, %arg1: memref<128x128xbf16, #tpu.memory_space<vmem>>, %arg2: memref<128x128xbf16, #tpu.memory_space<vmem>>, %arg3: memref<128x128xbf16, #tpu.memory_space<vmem>>, %arg4: memref<128x128xbf16, #tpu.memory_space<vmem>>, %arg5: memref<1x128xf32, #tpu.memory_space<vmem>>, %arg6: memref<128x128xbf16, #tpu.memory_space<vmem>>, %arg7: memref<1x128xf32, #tpu.memory_space<vmem>>, %arg8: memref<128x128xbf16, #tpu.memory_space<vmem>>, %arg9: memref<1x128xf32, #tpu.memory_space<vmem>>, %arg10: memref<128x128xbf16, #tpu.memory_space<vmem>>, %arg11: memref<1x128xf32, #tpu.memory_space<vmem>>, %arg12: memref<128x128xbf16, #tpu.memory_space<vmem>>, %arg13: memref<128x128xbf16, #tpu.memory_space<vmem>>, %arg14: memref<128x128xbf16, #tpu.memory_space<vmem>>) attributes {dimension_semantics = [#tpu.dimension_semantics<parallel>], iteration_bounds = array<i64: 1>, scalar_prefetch = 0 : i64, scratch_operands = 0 : i64, tpu.core_type = #tpu.core_type<tc>, window_params = [{transform_indices = @transform_0, window_bounds = array<i64: 128, 128>}, {pipeline_mode = #tpu.pipeline_mode<synchronous>, transform_indices = @transform_1, window_bounds = array<i64: 128, 128>}, {pipeline_mode = #tpu.pipeline_mode<synchronous>, transform_indices = @transform_2, window_bounds = array<i64: 128, 128>}, {pipeline_mode = #tpu.pipeline_mode<synchronous>, transform_indices = @transform_3, window_bounds = array<i64: 128, 128>}, {pipeline_mode = #tpu.pipeline_mode<synchronous>, transform_indices = @transform_4, window_bounds = array<i64: 1, 128>}, {pipeline_mode = #tpu.pipeline_mode<synchronous>, transform_indices = @transform_5, window_bounds = array<i64: 128, 128>}, {pipeline_mode = #tpu.pipeline_mode<synchronous>, transform_indices = @transform_6, window_bounds = array<i64: 1, 128>}, {pipeline_mode = #tpu.pipeline_mode<synchronous>, transform_indices = @transform_7, window_bounds = array<i64: 128, 128>}, {pipeline_mode = #tpu.pipeline_mode<synchronous>, transform_indices = @transform_8, window_bounds = array<i64: 1, 128>}, {pipeline_mode = #tpu.pipeline_mode<synchronous>, transform_indices = @transform_9, window_bounds = array<i64: 128, 128>}, {pipeline_mode = #tpu.pipeline_mode<synchronous>, transform_indices = @transform_10, window_bounds = array<i64: 1, 128>}, {pipeline_mode = #tpu.pipeline_mode<synchronous>, transform_indices = @transform_11, window_bounds = array<i64: 128, 128>}, {transform_indices = @transform_12, window_bounds = array<i64: 128, 128>}, {transform_indices = @transform_13, window_bounds = array<i64: 128, 128>}]} {
    %c0 = arith.constant 0 : index
    %c0_0 = arith.constant 0 : index
    %0 = vector.load %arg1[%c0, %c0_0] : memref<128x128xbf16, #tpu.memory_space<vmem>>, vector<128x128xbf16>
    %c0_1 = arith.constant 0 : index
    %c0_2 = arith.constant 0 : index
    %1 = vector.load %arg4[%c0_1, %c0_2] : memref<128x128xbf16, #tpu.memory_space<vmem>>, vector<128x128xbf16>
    %cst = arith.constant dense<0.000000e+00> : vector<128x128xf32>
    %2 = tpu.matmul %0, %1, %cst {dimension_numbers = #tpu.dot_dimension_numbers<[1], [0], [0], [1], [0, 0, 1, 1], [], []>} : vector<128x128xbf16>, vector<128x128xbf16>, vector<128x128xf32> -> vector<128x128xf32>
    %c0_3 = arith.constant 0 : index
    %c0_4 = arith.constant 0 : index
    %3 = vector.load %arg5[%c0_3, %c0_4] : memref<1x128xf32, #tpu.memory_space<vmem>>, vector<1x128xf32>
    %4 = vector.broadcast %3 : vector<1x128xf32> to vector<128x128xf32>
    %5 = arith.addf %2, %4 : vector<128x128xf32>
    %c0_5 = arith.constant 0 : index
    %c0_6 = arith.constant 0 : index
    %6 = vector.load %arg2[%c0_5, %c0_6] : memref<128x128xbf16, #tpu.memory_space<vmem>>, vector<128x128xbf16>
    %7 = arith.truncf %5 : vector<128x128xf32> to vector<128x128xbf16>
    %cst_7 = arith.constant dense<0.000000e+00> : vector<128x128xf32>
    %8 = tpu.matmul %7, %6, %cst_7 {dimension_numbers = #tpu.dot_dimension_numbers<[1], [1], [0], [0], [0, 0, 1, 0], [], []>} : vector<128x128xbf16>, vector<128x128xbf16>, vector<128x128xf32> -> vector<128x128xf32>
    %9 = tpu.iota {dimensions = array<i32: 1>} : vector<128x128xi32>
    %c16_i32 = arith.constant 16 : i32
    %10 = vector.broadcast %c16_i32 : i32 to vector<128x128xi32>
    %11 = arith.cmpi slt, %9, %10 : vector<128x128xi32>
    %cst_8 = arith.constant -1.000000e+30 : f32
    %12 = vector.broadcast %cst_8 : f32 to vector<128x128xf32>
    %13 = arith.select %11, %8, %12 : vector<128x128xi1>, vector<128x128xf32>
    %cst_9 = arith.constant dense<0xFF800000> : vector<128xf32>
    %14 = vector.multi_reduction <maximumf>, %13, %cst_9 [1] : vector<128x128xf32> to vector<128xf32>
    %15 = vector.shape_cast %14 : vector<128xf32> to vector<128x1xf32>
    %16 = vector.broadcast %15 : vector<128x1xf32> to vector<128x128xf32>
    %17 = arith.subf %13, %16 : vector<128x128xf32>
    %18 = math.exp %17 : vector<128x128xf32>
    %cst_10 = arith.constant dense<0.000000e+00> : vector<128xf32>
    %19 = vector.multi_reduction <add>, %18, %cst_10 [1] : vector<128x128xf32> to vector<128xf32>
    %20 = vector.shape_cast %19 : vector<128xf32> to vector<128x1xf32>
    %21 = tpu.reciprocal %20 {approx = true} : vector<128x1xf32> -> vector<128x1xf32>
    %22 = vector.broadcast %21 : vector<128x1xf32> to vector<128x128xf32>
    %23 = arith.mulf %18, %22 : vector<128x128xf32>
    %c0_11 = arith.constant 0 : index
    %c0_12 = arith.constant 0 : index
    %24 = vector.load %arg3[%c0_11, %c0_12] : memref<128x128xbf16, #tpu.memory_space<vmem>>, vector<128x128xbf16>
    %25 = arith.truncf %23 : vector<128x128xf32> to vector<128x128xbf16>
    %cst_13 = arith.constant dense<0.000000e+00> : vector<128x128xf32>
    %26 = tpu.matmul %25, %24, %cst_13 {dimension_numbers = #tpu.dot_dimension_numbers<[1], [0], [0], [1], [0, 0, 1, 1], [], []>} : vector<128x128xbf16>, vector<128x128xbf16>, vector<128x128xf32> -> vector<128x128xf32>
    %c0_14 = arith.constant 0 : index
    %c0_15 = arith.constant 0 : index
    %27 = vector.load %arg1[%c0_14, %c0_15] : memref<128x128xbf16, #tpu.memory_space<vmem>>, vector<128x128xbf16>
    %28 = arith.extf %27 : vector<128x128xbf16> to vector<128x128xf32>
    %29 = arith.addf %26, %28 : vector<128x128xf32>
    %30 = arith.truncf %29 : vector<128x128xf32> to vector<128x128xbf16>
    %c0_16 = arith.constant 0 : index
    %c0_17 = arith.constant 0 : index
    %31 = vector.load %arg13[%c0_16, %c0_17] : memref<128x128xbf16, #tpu.memory_space<vmem>>, vector<128x128xbf16>
    tpu.vector_store %arg13[%c0_16, %c0_17], %30 {strides = array<i32>} : memref<128x128xbf16, #tpu.memory_space<vmem>>, vector<128x128xbf16>,
    %c0_18 = arith.constant 0 : index
    %c0_19 = arith.constant 0 : index
    %32 = vector.load %arg6[%c0_18, %c0_19] : memref<128x128xbf16, #tpu.memory_space<vmem>>, vector<128x128xbf16>
    %33 = arith.truncf %29 : vector<128x128xf32> to vector<128x128xbf16>
    %cst_20 = arith.constant dense<0.000000e+00> : vector<128x128xf32>
    %34 = tpu.matmul %33, %32, %cst_20 {dimension_numbers = #tpu.dot_dimension_numbers<[1], [0], [0], [1], [0, 0, 1, 1], [], []>} : vector<128x128xbf16>, vector<128x128xbf16>, vector<128x128xf32> -> vector<128x128xf32>
    %c0_21 = arith.constant 0 : index
    %c0_22 = arith.constant 0 : index
    %35 = vector.load %arg7[%c0_21, %c0_22] : memref<1x128xf32, #tpu.memory_space<vmem>>, vector<1x128xf32>
    %36 = vector.broadcast %35 : vector<1x128xf32> to vector<128x128xf32>
    %37 = arith.addf %34, %36 : vector<128x128xf32>
    %cst_23 = arith.constant 0.000000e+00 : f32
    %38 = vector.broadcast %cst_23 : f32 to vector<128x128xf32>
    %39 = arith.maximumf %37, %38 : vector<128x128xf32>
    %c0_24 = arith.constant 0 : index
    %c0_25 = arith.constant 0 : index
    %40 = vector.load %arg8[%c0_24, %c0_25] : memref<128x128xbf16, #tpu.memory_space<vmem>>, vector<128x128xbf16>
    %41 = arith.truncf %39 : vector<128x128xf32> to vector<128x128xbf16>
    %cst_26 = arith.constant dense<0.000000e+00> : vector<128x128xf32>
    %42 = tpu.matmul %41, %40, %cst_26 {dimension_numbers = #tpu.dot_dimension_numbers<[1], [0], [0], [1], [0, 0, 1, 1], [], []>} : vector<128x128xbf16>, vector<128x128xbf16>, vector<128x128xf32> -> vector<128x128xf32>
    %c0_27 = arith.constant 0 : index
    %c0_28 = arith.constant 0 : index
    %43 = vector.load %arg9[%c0_27, %c0_28] : memref<1x128xf32, #tpu.memory_space<vmem>>, vector<1x128xf32>
    %44 = vector.broadcast %43 : vector<1x128xf32> to vector<128x128xf32>
    %45 = arith.addf %42, %44 : vector<128x128xf32>
    %cst_29 = arith.constant 0.000000e+00 : f32
    %46 = vector.broadcast %cst_29 : f32 to vector<128x128xf32>
    %47 = arith.maximumf %45, %46 : vector<128x128xf32>
    %c0_30 = arith.constant 0 : index
    %c0_31 = arith.constant 0 : index
    %48 = vector.load %arg10[%c0_30, %c0_31] : memref<128x128xbf16, #tpu.memory_space<vmem>>, vector<128x128xbf16>
    %49 = arith.truncf %47 : vector<128x128xf32> to vector<128x128xbf16>
    %cst_32 = arith.constant dense<0.000000e+00> : vector<128x128xf32>
    %50 = tpu.matmul %49, %48, %cst_32 {dimension_numbers = #tpu.dot_dimension_numbers<[1], [0], [0], [1], [0, 0, 1, 1], [], []>} : vector<128x128xbf16>, vector<128x128xbf16>, vector<128x128xf32> -> vector<128x128xf32>
    %c0_33 = arith.constant 0 : index
    %c0_34 = arith.constant 0 : index
    %51 = vector.load %arg11[%c0_33, %c0_34] : memref<1x128xf32, #tpu.memory_space<vmem>>, vector<1x128xf32>
    %52 = vector.broadcast %51 : vector<1x128xf32> to vector<128x128xf32>
    %53 = arith.addf %50, %52 : vector<128x128xf32>
    %cst_35 = arith.constant 0.000000e+00 : f32
    %54 = vector.broadcast %cst_35 : f32 to vector<128x128xf32>
    %55 = arith.maximumf %53, %54 : vector<128x128xf32>
    %c0_36 = arith.constant 0 : index
    %c0_37 = arith.constant 0 : index
    %56 = vector.load %arg12[%c0_36, %c0_37] : memref<128x128xbf16, #tpu.memory_space<vmem>>, vector<128x128xbf16>
    %57 = arith.truncf %55 : vector<128x128xf32> to vector<128x128xbf16>
    %cst_38 = arith.constant dense<0.000000e+00> : vector<128x128xf32>
    %58 = tpu.matmul %57, %56, %cst_38 {dimension_numbers = #tpu.dot_dimension_numbers<[1], [0], [0], [1], [0, 0, 1, 1], [], []>} : vector<128x128xbf16>, vector<128x128xbf16>, vector<128x128xf32> -> vector<128x128xf32>
    %59 = arith.truncf %58 : vector<128x128xf32> to vector<128x128xbf16>
    %c0_39 = arith.constant 0 : index
    %c0_40 = arith.constant 0 : index
    %60 = vector.load %arg14[%c0_39, %c0_40] : memref<128x128xbf16, #tpu.memory_space<vmem>>, vector<128x128xbf16>
    tpu.vector_store %arg14[%c0_39, %c0_40], %59 {strides = array<i32>} : memref<128x128xbf16, #tpu.memory_space<vmem>>, vector<128x128xbf16>,
    return
  }
  func.func @transform_0(%arg0: i32) -> (i32, i32) {
    %c0_i32 = arith.constant 0 : i32
    %c0_i32_0 = arith.constant 0 : i32
    return %arg0, %c0_i32 : i32, i32
  }
  func.func @transform_1(%arg0: i32) -> (i32, i32) {
    %c0_i32 = arith.constant 0 : i32
    %c0_i32_0 = arith.constant 0 : i32
    %c0_i32_1 = arith.constant 0 : i32
    return %c0_i32, %c0_i32_0 : i32, i32
  }
  func.func @transform_2(%arg0: i32) -> (i32, i32) {
    %c0_i32 = arith.constant 0 : i32
    %c0_i32_0 = arith.constant 0 : i32
    %c0_i32_1 = arith.constant 0 : i32
    return %c0_i32, %c0_i32_0 : i32, i32
  }
  func.func @transform_3(%arg0: i32) -> (i32, i32) {
    %c0_i32 = arith.constant 0 : i32
    %c0_i32_0 = arith.constant 0 : i32
    %c0_i32_1 = arith.constant 0 : i32
    return %c0_i32, %c0_i32_0 : i32, i32
  }
  func.func @transform_4(%arg0: i32) -> (i32, i32) {
    %c0_i32 = arith.constant 0 : i32
    %c0_i32_0 = arith.constant 0 : i32
    %c0_i32_1 = arith.constant 0 : i32
    return %c0_i32, %c0_i32_0 : i32, i32
  }
  func.func @transform_5(%arg0: i32) -> (i32, i32) {
    %c0_i32 = arith.constant 0 : i32
    %c0_i32_0 = arith.constant 0 : i32
    %c0_i32_1 = arith.constant 0 : i32
    return %c0_i32, %c0_i32_0 : i32, i32
  }
  func.func @transform_6(%arg0: i32) -> (i32, i32) {
    %c0_i32 = arith.constant 0 : i32
    %c0_i32_0 = arith.constant 0 : i32
    %c0_i32_1 = arith.constant 0 : i32
    return %c0_i32, %c0_i32_0 : i32, i32
  }
  func.func @transform_7(%arg0: i32) -> (i32, i32) {
    %c0_i32 = arith.constant 0 : i32
    %c0_i32_0 = arith.constant 0 : i32
    %c0_i32_1 = arith.constant 0 : i32
    return %c0_i32, %c0_i32_0 : i32, i32
  }
  func.func @transform_8(%arg0: i32) -> (i32, i32) {
    %c0_i32 = arith.constant 0 : i32
    %c0_i32_0 = arith.constant 0 : i32
    %c0_i32_1 = arith.constant 0 : i32
    return %c0_i32, %c0_i32_0 : i32, i32
  }
  func.func @transform_9(%arg0: i32) -> (i32, i32) {
    %c0_i32 = arith.constant 0 : i32
    %c0_i32_0 = arith.constant 0 : i32
    %c0_i32_1 = arith.constant 0 : i32
    return %c0_i32, %c0_i32_0 : i32, i32
  }
  func.func @transform_10(%arg0: i32) -> (i32, i32) {
    %c0_i32 = arith.constant 0 : i32
    %c0_i32_0 = arith.constant 0 : i32
    %c0_i32_1 = arith.constant 0 : i32
    return %c0_i32, %c0_i32_0 : i32, i32
  }
  func.func @transform_11(%arg0: i32) -> (i32, i32) {
    %c0_i32 = arith.constant 0 : i32
    %c0_i32_0 = arith.constant 0 : i32
    %c0_i32_1 = arith.constant 0 : i32
    return %c0_i32, %c0_i32_0 : i32, i32
  }
  func.func @transform_12(%arg0: i32) -> (i32, i32) {
    %c0_i32 = arith.constant 0 : i32
    %c0_i32_0 = arith.constant 0 : i32
    return %arg0, %c0_i32 : i32, i32
  }
  func.func @transform_13(%arg0: i32) -> (i32, i32) {
    %c0_i32 = arith.constant 0 : i32
    %c0_i32_0 = arith.constant 0 : i32
    return %arg0, %c0_i32 : i32, i32
  }
}

module attributes {stable_mosaic.version = 11 : i64} {
  func.func @agg_softmax_kernel(%arg0: i32, %arg1: memref<128x128xbf16, #tpu.memory_space<vmem>>, %arg2: memref<128x128xbf16, #tpu.memory_space<vmem>>, %arg3: memref<1x128xf32, #tpu.memory_space<vmem>>, %arg4: memref<128x128xf32, #tpu.memory_space<vmem>>) attributes {dimension_semantics = [#tpu.dimension_semantics<parallel>], iteration_bounds = array<i64: 1>, scalar_prefetch = 0 : i64, scratch_operands = 0 : i64, tpu.core_type = #tpu.core_type<tc>, window_params = [{transform_indices = @transform_0, window_bounds = array<i64: 128, 128>}, {pipeline_mode = #tpu.pipeline_mode<synchronous>, transform_indices = @transform_1, window_bounds = array<i64: 128, 128>}, {pipeline_mode = #tpu.pipeline_mode<synchronous>, transform_indices = @transform_2, window_bounds = array<i64: 1, 128>}, {transform_indices = @transform_3, window_bounds = array<i64: 128, 128>}]} {
    %c0 = arith.constant 0 : index
    %c0_0 = arith.constant 0 : index
    %0 = vector.load %arg1[%c0, %c0_0] : memref<128x128xbf16, #tpu.memory_space<vmem>>, vector<128x128xbf16>
    %c0_1 = arith.constant 0 : index
    %c0_2 = arith.constant 0 : index
    %1 = vector.load %arg2[%c0_1, %c0_2] : memref<128x128xbf16, #tpu.memory_space<vmem>>, vector<128x128xbf16>
    %cst = arith.constant dense<0.000000e+00> : vector<128x128xf32>
    %2 = tpu.matmul %0, %1, %cst {dimension_numbers = #tpu.dot_dimension_numbers<[1], [0], [0], [1], [0, 0, 1, 1], [], []>} : vector<128x128xbf16>, vector<128x128xbf16>, vector<128x128xf32> -> vector<128x128xf32>
    %c0_3 = arith.constant 0 : index
    %c0_4 = arith.constant 0 : index
    %3 = vector.load %arg3[%c0_3, %c0_4] : memref<1x128xf32, #tpu.memory_space<vmem>>, vector<1x128xf32>
    %4 = vector.broadcast %3 : vector<1x128xf32> to vector<128x128xf32>
    %5 = arith.addf %2, %4 : vector<128x128xf32>
    %6 = tpu.iota {dimensions = array<i32: 1>} : vector<128x128xi32>
    %c8_i32 = arith.constant 8 : i32
    %7 = vector.broadcast %c8_i32 : i32 to vector<128x128xi32>
    %8 = arith.cmpi slt, %6, %7 : vector<128x128xi32>
    %cst_5 = arith.constant -1.000000e+30 : f32
    %9 = vector.broadcast %cst_5 : f32 to vector<128x128xf32>
    %10 = arith.select %8, %5, %9 : vector<128x128xi1>, vector<128x128xf32>
    %cst_6 = arith.constant dense<0xFF800000> : vector<128xf32>
    %11 = vector.multi_reduction <maximumf>, %10, %cst_6 [1] : vector<128x128xf32> to vector<128xf32>
    %12 = vector.shape_cast %11 : vector<128xf32> to vector<128x1xf32>
    %13 = vector.broadcast %12 : vector<128x1xf32> to vector<128x128xf32>
    %14 = arith.subf %10, %13 : vector<128x128xf32>
    %15 = math.exp %14 : vector<128x128xf32>
    %cst_7 = arith.constant dense<0.000000e+00> : vector<128xf32>
    %16 = vector.multi_reduction <add>, %15, %cst_7 [1] : vector<128x128xf32> to vector<128xf32>
    %17 = vector.shape_cast %16 : vector<128xf32> to vector<128x1xf32>
    %18 = tpu.reciprocal %17 {approx = true} : vector<128x1xf32> -> vector<128x1xf32>
    %19 = vector.broadcast %18 : vector<128x1xf32> to vector<128x128xf32>
    %20 = arith.mulf %15, %19 : vector<128x128xf32>
    %c0_8 = arith.constant 0 : index
    %c0_9 = arith.constant 0 : index
    %21 = vector.load %arg4[%c0_8, %c0_9] : memref<128x128xf32, #tpu.memory_space<vmem>>, vector<128x128xf32>
    tpu.vector_store %arg4[%c0_8, %c0_9], %20 {strides = array<i32>} : memref<128x128xf32, #tpu.memory_space<vmem>>, vector<128x128xf32>,
    return
  }
  func.func @transform_0(%arg0: i32) -> (i32, i32) {
    %c0_i32 = arith.constant 0 : i32
    %c0_i32_0 = arith.constant 0 : i32
    return %arg0, %c0_i32 : i32, i32
  }
  func.func @transform_1(%arg0: i32) -> (i32, i32) {
    %c0_i32 = arith.constant 0 : i32
    %c0_i32_0 = arith.constant 0 : i32
    %c0_i32_1 = arith.constant 0 : i32
    return %c0_i32, %c0_i32_0 : i32, i32
  }
  func.func @transform_2(%arg0: i32) -> (i32, i32) {
    %c0_i32 = arith.constant 0 : i32
    %c0_i32_0 = arith.constant 0 : i32
    %c0_i32_1 = arith.constant 0 : i32
    return %c0_i32, %c0_i32_0 : i32, i32
  }
  func.func @transform_3(%arg0: i32) -> (i32, i32) {
    %c0_i32 = arith.constant 0 : i32
    %c0_i32_0 = arith.constant 0 : i32
    return %arg0, %c0_i32 : i32, i32
  }
}

module attributes {stable_mosaic.version = 11 : i64} {
  func.func @gram_agg_kernel(%arg0: i32, %arg1: memref<128x128xbf16, #tpu.memory_space<vmem>>, %arg2: memref<128x128xbf16, #tpu.memory_space<vmem>>, %arg3: memref<128x128xbf16, #tpu.memory_space<vmem>>, %arg4: memref<128x128xbf16, #tpu.memory_space<vmem>>, %arg5: memref<1x128xf32, #tpu.memory_space<vmem>>, %arg6: memref<128x128xbf16, #tpu.memory_space<vmem>>, %arg7: memref<128x128xbf16, #tpu.memory_space<vmem>>, %arg8: memref<128x128xbf16, #tpu.memory_space<vmem>>) attributes {dimension_semantics = [#tpu.dimension_semantics<parallel>], iteration_bounds = array<i64: 1>, scalar_prefetch = 0 : i64, scratch_operands = 0 : i64, tpu.core_type = #tpu.core_type<tc>, window_params = [{transform_indices = @transform_0, window_bounds = array<i64: 128, 128>}, {pipeline_mode = #tpu.pipeline_mode<synchronous>, transform_indices = @transform_1, window_bounds = array<i64: 128, 128>}, {transform_indices = @transform_2, window_bounds = array<i64: 128, 128>}, {pipeline_mode = #tpu.pipeline_mode<synchronous>, transform_indices = @transform_3, window_bounds = array<i64: 128, 128>}, {pipeline_mode = #tpu.pipeline_mode<synchronous>, transform_indices = @transform_4, window_bounds = array<i64: 1, 128>}, {pipeline_mode = #tpu.pipeline_mode<synchronous>, transform_indices = @transform_5, window_bounds = array<i64: 128, 128>}, {transform_indices = @transform_6, window_bounds = array<i64: 128, 128>}, {transform_indices = @transform_7, window_bounds = array<i64: 128, 128>}]} {
    %c0 = arith.constant 0 : index
    %c0_0 = arith.constant 0 : index
    %0 = vector.load %arg1[%c0, %c0_0] : memref<128x128xbf16, #tpu.memory_space<vmem>>, vector<128x128xbf16>
    %c0_1 = arith.constant 0 : index
    %c0_2 = arith.constant 0 : index
    %1 = vector.load %arg2[%c0_1, %c0_2] : memref<128x128xbf16, #tpu.memory_space<vmem>>, vector<128x128xbf16>
    %cst = arith.constant dense<0.000000e+00> : vector<128x128xf32>
    %2 = tpu.matmul %0, %1, %cst {dimension_numbers = #tpu.dot_dimension_numbers<[1], [1], [0], [0], [0, 0, 1, 0], [], []>} : vector<128x128xbf16>, vector<128x128xbf16>, vector<128x128xf32> -> vector<128x128xf32>
    %3 = arith.negf %2 : vector<128x128xf32>
    %4 = math.exp %3 : vector<128x128xf32>
    %cst_3 = arith.constant 1.000000e+00 : f32
    %5 = vector.broadcast %cst_3 : f32 to vector<128x128xf32>
    %6 = arith.addf %5, %4 : vector<128x128xf32>
    %7 = arith.divf %5, %6 : vector<128x128xf32>
    %8 = arith.truncf %7 : vector<128x128xf32> to vector<128x128xbf16>
    %c0_4 = arith.constant 0 : index
    %c0_5 = arith.constant 0 : index
    %9 = vector.load %arg7[%c0_4, %c0_5] : memref<128x128xbf16, #tpu.memory_space<vmem>>, vector<128x128xbf16>
    tpu.vector_store %arg7[%c0_4, %c0_5], %8 {strides = array<i32>} : memref<128x128xbf16, #tpu.memory_space<vmem>>, vector<128x128xbf16>,
    %c0_6 = arith.constant 0 : index
    %c0_7 = arith.constant 0 : index
    %10 = vector.load %arg3[%c0_6, %c0_7] : memref<128x128xbf16, #tpu.memory_space<vmem>>, vector<128x128xbf16>
    %c0_8 = arith.constant 0 : index
    %c0_9 = arith.constant 0 : index
    %11 = vector.load %arg4[%c0_8, %c0_9] : memref<128x128xbf16, #tpu.memory_space<vmem>>, vector<128x128xbf16>
    %cst_10 = arith.constant dense<0.000000e+00> : vector<128x128xf32>
    %12 = tpu.matmul %10, %11, %cst_10 {dimension_numbers = #tpu.dot_dimension_numbers<[1], [0], [0], [1], [0, 0, 1, 1], [], []>} : vector<128x128xbf16>, vector<128x128xbf16>, vector<128x128xf32> -> vector<128x128xf32>
    %c0_11 = arith.constant 0 : index
    %c0_12 = arith.constant 0 : index
    %13 = vector.load %arg5[%c0_11, %c0_12] : memref<1x128xf32, #tpu.memory_space<vmem>>, vector<1x128xf32>
    %14 = vector.broadcast %13 : vector<1x128xf32> to vector<128x128xf32>
    %15 = arith.addf %12, %14 : vector<128x128xf32>
    %cst_13 = arith.constant 0.000000e+00 : f32
    %16 = vector.broadcast %cst_13 : f32 to vector<128x128xf32>
    %17 = arith.maximumf %15, %16 : vector<128x128xf32>
    %c0_14 = arith.constant 0 : index
    %c0_15 = arith.constant 0 : index
    %18 = vector.load %arg6[%c0_14, %c0_15] : memref<128x128xbf16, #tpu.memory_space<vmem>>, vector<128x128xbf16>
    %19 = arith.truncf %17 : vector<128x128xf32> to vector<128x128xbf16>
    %cst_16 = arith.constant dense<0.000000e+00> : vector<128x128xf32>
    %20 = tpu.matmul %19, %18, %cst_16 {dimension_numbers = #tpu.dot_dimension_numbers<[1], [0], [0], [1], [0, 0, 1, 1], [], []>} : vector<128x128xbf16>, vector<128x128xbf16>, vector<128x128xf32> -> vector<128x128xf32>
    %21 = arith.truncf %20 : vector<128x128xf32> to vector<128x128xbf16>
    %c0_17 = arith.constant 0 : index
    %c0_18 = arith.constant 0 : index
    %22 = vector.load %arg8[%c0_17, %c0_18] : memref<128x128xbf16, #tpu.memory_space<vmem>>, vector<128x128xbf16>
    tpu.vector_store %arg8[%c0_17, %c0_18], %21 {strides = array<i32>} : memref<128x128xbf16, #tpu.memory_space<vmem>>, vector<128x128xbf16>,
    return
  }
  func.func @transform_0(%arg0: i32) -> (i32, i32) {
    %c0_i32 = arith.constant 0 : i32
    %c0_i32_0 = arith.constant 0 : i32
    return %arg0, %c0_i32 : i32, i32
  }
  func.func @transform_1(%arg0: i32) -> (i32, i32) {
    %c0_i32 = arith.constant 0 : i32
    %c0_i32_0 = arith.constant 0 : i32
    %c0_i32_1 = arith.constant 0 : i32
    return %c0_i32, %c0_i32_0 : i32, i32
  }
  func.func @transform_2(%arg0: i32) -> (i32, i32) {
    %c0_i32 = arith.constant 0 : i32
    %c0_i32_0 = arith.constant 0 : i32
    return %arg0, %c0_i32 : i32, i32
  }
  func.func @transform_3(%arg0: i32) -> (i32, i32) {
    %c0_i32 = arith.constant 0 : i32
    %c0_i32_0 = arith.constant 0 : i32
    %c0_i32_1 = arith.constant 0 : i32
    return %c0_i32, %c0_i32_0 : i32, i32
  }
  func.func @transform_4(%arg0: i32) -> (i32, i32) {
    %c0_i32 = arith.constant 0 : i32
    %c0_i32_0 = arith.constant 0 : i32
    %c0_i32_1 = arith.constant 0 : i32
    return %c0_i32, %c0_i32_0 : i32, i32
  }
  func.func @transform_5(%arg0: i32) -> (i32, i32) {
    %c0_i32 = arith.constant 0 : i32
    %c0_i32_0 = arith.constant 0 : i32
    %c0_i32_1 = arith.constant 0 : i32
    return %c0_i32, %c0_i32_0 : i32, i32
  }
  func.func @transform_6(%arg0: i32) -> (i32, i32) {
    %c0_i32 = arith.constant 0 : i32
    %c0_i32_0 = arith.constant 0 : i32
    return %arg0, %c0_i32 : i32, i32
  }
  func.func @transform_7(%arg0: i32) -> (i32, i32) {
    %c0_i32 = arith.constant 0 : i32
    %c0_i32_0 = arith.constant 0 : i32
    return %arg0, %c0_i32 : i32, i32
  }
}

</mosaic_0001>

<llo_original>
// kernel: densenet3_forward.6
$region0: #{densenet3_forward.6}
  #allocation0 [shape = 'u32[]', space=smem, size = 0x4, offset = 0x4, fixed_abs, tag = 'smem constant byte address 0x4 - core index']
  #allocation1 [shape = 'u32[144,128]{1,0:T(1,128)}', space=vmem, size = 0x12000, scoped, tag = 'internal scratch']
  %s0 = inlined_call_operand.vmem [shape: bf16[128,128], index: 0, kind: input, shape index: {}]
  %s1 = inlined_call_operand.vmem [shape: bf16[128,128], index: 1, kind: input, shape index: {}]
  %s2 = inlined_call_operand.vmem [shape: bf16[128,128], index: 2, kind: output, shape index: {}]
  %s3 = sld [smem:[#allocation0]]
  $region18: #{densenet3_forward.6} parent=0
    _
  %s5 = ssub.s32 1, %s3
  %s6 = scalar_select 0, %s5, %s3
  // Predicated region
  $region2: #{densenet3_forward.6} parent=0 // pred_check
    _
  $region3: #{densenet3_forward.6} parent=0 // pred_check_branch
    %8 = sbr.rel (0) target = $region5
  $region4: #{densenet3_forward.6} parent=0 // pred_region
    _
  $region5: #{densenet3_forward.6} parent=0 // pred_fallthru
    _
  // Predicated region
  $region6: #{densenet3_forward.6} parent=0 // pred_check
    _
  $region7: #{densenet3_forward.6} parent=0 // pred_check_branch
    %10 = sbr.rel (0) target = $region9
  $region8: #{densenet3_forward.6} parent=0 // pred_region
    _
  $region9: #{densenet3_forward.6} parent=0 // pred_fallthru
    _
  %v12 = vld [vmem:[%s0] sm:$0xf]
  %v13 = vld [vmem:[%s0 + $0x4] sm:$0xf]
  %v14 = vld [vmem:[%s0 + $0x8] sm:$0xf]
  %v15 = vld [vmem:[%s0 + $0xc] sm:$0xf]
  %v16 = vld [vmem:[%s0 + $0x10] sm:$0xf]
  %v17 = vld [vmem:[%s0 + $0x14] sm:$0xf]
  %v18 = vld [vmem:[%s0 + $0x18] sm:$0xf]
  %v19 = vld [vmem:[%s0 + $0x1c] sm:$0xf]
  %v20 = vld [vmem:[%s0 + $0x20] sm:$0xf]
  %v21 = vld [vmem:[%s0 + $0x24] sm:$0xf]
  %v22 = vld [vmem:[%s0 + $0x28] sm:$0xf]
  %v23 = vld [vmem:[%s0 + $0x2c] sm:$0xf]
  %v24 = vld [vmem:[%s0 + $0x30] sm:$0xf]
  %v25 = vld [vmem:[%s0 + $0x34] sm:$0xf]
  %v26 = vld [vmem:[%s0 + $0x38] sm:$0xf]
  %v27 = vld [vmem:[%s0 + $0x3c] sm:$0xf]
  %v28 = vld [vmem:[%s1] sm:$0xf]
  %v29 = vld [vmem:[%s1 + $0x4] sm:$0xf]
  %v30 = vld [vmem:[%s1 + $0x8] sm:$0xf]
  %v31 = vld [vmem:[%s1 + $0xc] sm:$0xf]
  %v32 = vld [vmem:[%s1 + $0x10] sm:$0xf]
  %v33 = vld [vmem:[%s1 + $0x14] sm:$0xf]
  %v34 = vld [vmem:[%s1 + $0x18] sm:$0xf]
  %v35 = vld [vmem:[%s1 + $0x1c] sm:$0xf]
  %v36 = vld [vmem:[%s1 + $0x20] sm:$0xf]
  %v37 = vld [vmem:[%s1 + $0x24] sm:$0xf]
  %v38 = vld [vmem:[%s1 + $0x28] sm:$0xf]
  %v39 = vld [vmem:[%s1 + $0x2c] sm:$0xf]
  %v40 = vld [vmem:[%s1 + $0x30] sm:$0xf]
  %v41 = vld [vmem:[%s1 + $0x34] sm:$0xf]
  %v42 = vld [vmem:[%s1 + $0x38] sm:$0xf]
  %v43 = vld [vmem:[%s1 + $0x3c] sm:$0xf]
  %v60 = vunpack.c.l.b16 %v12
  %v61 = vunpack.c.l.b16 %v13
  %v62 = vunpack.c.l.b16 %v14
  %v63 = vunpack.c.l.b16 %v15
  %v64 = vunpack.c.l.b16 %v16
  %v65 = vunpack.c.l.b16 %v17
  %v66 = vunpack.c.l.b16 %v18
  %v67 = vunpack.c.l.b16 %v19
  %v68 = vunpack.c.l.b16 %v20
  %v69 = vunpack.c.l.b16 %v21
  %v70 = vunpack.c.l.b16 %v22
  %v71 = vunpack.c.l.b16 %v23
  %v72 = vunpack.c.l.b16 %v24
  %v73 = vunpack.c.l.b16 %v25
  %v74 = vunpack.c.l.b16 %v26
  %v75 = vunpack.c.l.b16 %v27
  %v76 = vpack.c.b16 %v61, %v60
  %v77 = vpack.c.b16 %v63, %v62
  %v78 = vpack.c.b16 %v65, %v64
  %v79 = vpack.c.b16 %v67, %v66
  %v80 = vpack.c.b16 %v69, %v68
  %v81 = vpack.c.b16 %v71, %v70
  %v82 = vpack.c.b16 %v73, %v72
  %v83 = vpack.c.b16 %v75, %v74
  %v108 = vunpack.c.l.b16 %v28
  %v109 = vunpack.c.l.b16 %v29
  %v110 = vunpack.c.l.b16 %v30
  %v111 = vunpack.c.l.b16 %v31
  %v112 = vunpack.c.l.b16 %v32
  %v113 = vunpack.c.l.b16 %v33
  %v114 = vunpack.c.l.b16 %v34
  %v115 = vunpack.c.l.b16 %v35
  %v116 = vunpack.c.l.b16 %v36
  %v117 = vunpack.c.l.b16 %v37
  %v118 = vunpack.c.l.b16 %v38
  %v119 = vunpack.c.l.b16 %v39
  %v120 = vunpack.c.l.b16 %v40
  %v121 = vunpack.c.l.b16 %v41
  %v122 = vunpack.c.l.b16 %v42
  %v123 = vunpack.c.l.b16 %v43
  %v124 = vpack.c.b16 %v109, %v108
  %v125 = vpack.c.b16 %v111, %v110
  %v126 = vpack.c.b16 %v113, %v112
  %v127 = vpack.c.b16 %v115, %v114
  %v128 = vpack.c.b16 %v117, %v116
  %v129 = vpack.c.b16 %v119, %v118
  %v130 = vpack.c.b16 %v121, %v120
  %v131 = vpack.c.b16 %v123, %v122
  %140 = vmatprep.subr.bf16.mxu0 0
  %141 = vmatpush1.bf16.msra.mxu0 %v131
  %142 = vmatprep.subr.bf16.mxu0 0
  %143 = vmatpush1.bf16.msra.mxu0 %v130
  %144 = vmatprep.subr.bf16.mxu0 0
  %145 = vmatpush1.bf16.msra.mxu0 %v129
  %146 = vmatprep.subr.bf16.mxu0 0
  %147 = vmatpush1.bf16.msra.mxu0 %v128
  %148 = vmatprep.subr.bf16.mxu0 0
  %149 = vmatpush1.bf16.msra.mxu0 %v127
  %150 = vmatprep.subr.bf16.mxu0 0
  %151 = vmatpush1.bf16.msra.mxu0 %v126
  %152 = vmatprep.subr.bf16.mxu0 0
  %153 = vmatpush1.bf16.msra.mxu0 %v125
  %154 = vmatprep.subr.bf16.mxu0 0
  %155 = vmatpush1.bf16.msra.mxu0 %v124
  %156 = vmatprep.subr.bf16.mxu0 0
  %157 = vmatpush2.bf16.msra.mxu0 0
  %158 = vmatprep.subr.bf16.mxu0 0
  %159 = vmatpush2.bf16.msra.mxu0 0
  %160 = vmatprep.subr.bf16.mxu0 0
  %161 = vmatpush2.bf16.msra.mxu0 0
  %162 = vmatprep.subr.bf16.mxu0 0
  %163 = vmatpush2.bf16.msra.mxu0 0
  %164 = vmatprep.subr.bf16.mxu0 0
  %165 = vmatpush2.bf16.msra.mxu0 0
  %166 = vmatprep.subr.bf16.mxu0 0
  %167 = vmatpush2.bf16.msra.mxu0 0
  %168 = vmatprep.subr.bf16.mxu0 0
  %169 = vmatpush2.bf16.msra.mxu0 0
  %170 = vmatprep.subr.bf16.mxu0 0
  %171 = vmatpush2.bf16.msra.mxu0 0
  %172 = vmatprep.mubr.bf16.mxu0 0
  %173 = vmatmul.mubr.bf16.gmra.mxu0 %v76
  %v174 = vpop.f32.mrf.mxu0
  %v175 = vadd.f32 0.0, %v174
  %v176 = vpop.f32.mrf.mxu0
  %v177 = vpop.f32.mrf.mxu0
  %v178 = vadd.f32 0.0, %v177
  %v179 = vpop.f32.mrf.mxu0
  %180 = vmatprep.mubr.bf16.mxu0 0
  %181 = vmatmul.mubr.bf16.gmra.mxu0 %v77
  %v182 = vpop.f32.mrf.mxu0
  %v183 = vadd.f32 0.0, %v182
  %v184 = vpop.f32.mrf.mxu0
  %v185 = vpop.f32.mrf.mxu0
  %v186 = vadd.f32 0.0, %v185
  %v187 = vpop.f32.mrf.mxu0
  %188 = vmatprep.mubr.bf16.mxu0 0
  %189 = vmatmul.mubr.bf16.gmra.mxu0 %v78
  %v190 = vpop.f32.mrf.mxu0
  %v191 = vadd.f32 0.0, %v190
  %v192 = vpop.f32.mrf.mxu0
  %v193 = vpop.f32.mrf.mxu0
  %v194 = vadd.f32 0.0, %v193
  %v195 = vpop.f32.mrf.mxu0
  %196 = vmatprep.mubr.bf16.mxu0 0
  %197 = vmatmul.mubr.bf16.gmra.mxu0 %v79
  %v198 = vpop.f32.mrf.mxu0
  %v199 = vadd.f32 0.0, %v198
  %v200 = vpop.f32.mrf.mxu0
  %v201 = vpop.f32.mrf.mxu0
  %v202 = vadd.f32 0.0, %v201
  %v203 = vpop.f32.mrf.mxu0
  %204 = vmatprep.mubr.bf16.mxu0 0
  %205 = vmatmul.mubr.bf16.gmra.mxu0 %v80
  %v206 = vpop.f32.mrf.mxu0
  %v207 = vadd.f32 0.0, %v206
  %v208 = vpop.f32.mrf.mxu0
  %v209 = vpop.f32.mrf.mxu0
  %v210 = vadd.f32 0.0, %v209
  %v211 = vpop.f32.mrf.mxu0
  %212 = vmatprep.mubr.bf16.mxu0 0
  %213 = vmatmul.mubr.bf16.gmra.mxu0 %v81
  %v214 = vpop.f32.mrf.mxu0
  %v215 = vadd.f32 0.0, %v214
  %v216 = vpop.f32.mrf.mxu0
  %v217 = vpop.f32.mrf.mxu0
  %v218 = vadd.f32 0.0, %v217
  %v219 = vpop.f32.mrf.mxu0
  %220 = vmatprep.mubr.bf16.mxu0 0
  %221 = vmatmul.mubr.bf16.gmra.mxu0 %v82
  %v222 = vpop.f32.mrf.mxu0
  %v223 = vadd.f32 0.0, %v222
  %v224 = vpop.f32.mrf.mxu0
  %v225 = vpop.f32.mrf.mxu0
  %v226 = vadd.f32 0.0, %v225
  %v227 = vpop.f32.mrf.mxu0
  %228 = vmatprep.mubr.bf16.mxu0 0
  %229 = vmatmul.mubr.bf16.gmra.mxu0 %v83
  %v230 = vpop.f32.mrf.mxu0
  %v231 = vadd.f32 0.0, %v230
  %v232 = vpop.f32.mrf.mxu0
  %v233 = vpop.f32.mrf.mxu0
  %v234 = vadd.f32 0.0, %v233
  %v235 = vpop.f32.mrf.mxu0
  %236 = vdwg.mxu0
  %v237 = vpack.c.bf16 %v178, %v175
  %v238 = vpack.c.bf16 %v186, %v183
  %v239 = vpack.c.bf16 %v194, %v191
  %v240 = vpack.c.bf16 %v202, %v199
  %v241 = vpack.c.bf16 %v210, %v207
  %v242 = vpack.c.bf16 %v218, %v215
  %v243 = vpack.c.bf16 %v226, %v223
  %v244 = vpack.c.bf16 %v234, %v231
  %v253 = vunpack.c.l.b16 %v237
  %v254 = vunpack.c.h.b16 %v237
  %v255 = vunpack.c.l.b16 %v238
  %v256 = vunpack.c.h.b16 %v238
  %v257 = vunpack.c.l.b16 %v239
  %v258 = vunpack.c.h.b16 %v239
  %v259 = vunpack.c.l.b16 %v240
  %v260 = vunpack.c.h.b16 %v240
  %v261 = vunpack.c.l.b16 %v241
  %v262 = vunpack.c.h.b16 %v241
  %v263 = vunpack.c.l.b16 %v242
  %v264 = vunpack.c.h.b16 %v242
  %v265 = vunpack.c.l.b16 %v243
  %v266 = vunpack.c.h.b16 %v243
  %v267 = vunpack.c.l.b16 %v244
  %v268 = vunpack.c.h.b16 %v244
  %v269 = vpack.c.b16 %v253, %v253
  %v270 = vpack.c.b16 %v254, %v254
  %v271 = vpack.c.b16 %v255, %v255
  %v272 = vpack.c.b16 %v256, %v256
  %v273 = vpack.c.b16 %v257, %v257
  %v274 = vpack.c.b16 %v258, %v258
  %v275 = vpack.c.b16 %v259, %v259
  %v276 = vpack.c.b16 %v260, %v260
  %v277 = vpack.c.b16 %v261, %v261
  %v278 = vpack.c.b16 %v262, %v262
  %v279 = vpack.c.b16 %v263, %v263
  %v280 = vpack.c.b16 %v264, %v264
  %v281 = vpack.c.b16 %v265, %v265
  %v282 = vpack.c.b16 %v266, %v266
  %v283 = vpack.c.b16 %v267, %v267
  %v284 = vpack.c.b16 %v268, %v268
  %301 = vst [vmem:[%s2] sm:$0xf] %v269
  %302 = vst [vmem:[%s2 + $0x4] sm:$0xf] %v270
  %303 = vst [vmem:[%s2 + $0x8] sm:$0xf] %v271
  %304 = vst [vmem:[%s2 + $0xc] sm:$0xf] %v272
  %305 = vst [vmem:[%s2 + $0x10] sm:$0xf] %v273
  %306 = vst [vmem:[%s2 + $0x14] sm:$0xf] %v274
  %307 = vst [vmem:[%s2 + $0x18] sm:$0xf] %v275
  %308 = vst [vmem:[%s2 + $0x1c] sm:$0xf] %v276
  %309 = vst [vmem:[%s2 + $0x20] sm:$0xf] %v277
  %310 = vst [vmem:[%s2 + $0x24] sm:$0xf] %v278
  %311 = vst [vmem:[%s2 + $0x28] sm:$0xf] %v279
  %312 = vst [vmem:[%s2 + $0x2c] sm:$0xf] %v280
  %313 = vst [vmem:[%s2 + $0x30] sm:$0xf] %v281
  %314 = vst [vmem:[%s2 + $0x34] sm:$0xf] %v282
  %315 = vst [vmem:[%s2 + $0x38] sm:$0xf] %v283
  %316 = vst [vmem:[%s2 + $0x3c] sm:$0xf] %v284
  // Predicated region
  $region10: #{densenet3_forward.6} parent=0 // pred_check
    _
  $region11: #{densenet3_forward.6} parent=0 // pred_check_branch
    %318 = sbr.rel (0) target = $region13
  $region12: #{densenet3_forward.6} parent=0 // pred_region
    _
  $region13: #{densenet3_forward.6} parent=0 // pred_fallthru
    _
  // Predicated region
  $region14: #{densenet3_forward.6} parent=0 // pred_check
    _
  $region15: #{densenet3_forward.6} parent=0 // pred_check_branch
    %320 = sbr.rel (0) target = $region17
  $region16: #{densenet3_forward.6} parent=0 // pred_region
    _
  $region17: #{densenet3_forward.6} parent=0 // pred_fallthru
    _

// kernel: densenet3_forward.7
$region0: #{densenet3_forward.7}
  #allocation0 [shape = 'u32[]', space=smem, size = 0x4, offset = 0x4, fixed_abs, tag = 'smem constant byte address 0x4 - core index']
  #allocation1 [shape = 'u32[144,128]{1,0:T(1,128)}', space=vmem, size = 0x12000, scoped, tag = 'internal scratch']
  %s0 = inlined_call_operand.vmem [shape: bf16[128,128], index: 0, kind: input, shape index: {}]
  %s1 = inlined_call_operand.vmem [shape: bf16[128,128], index: 1, kind: input, shape index: {}]
  %s2 = inlined_call_operand.vmem [shape: f32[1,128], index: 2, kind: input, shape index: {}]
  %s3 = inlined_call_operand.vmem [shape: bf16[128,128], index: 3, kind: input, shape index: {}]
  %s4 = inlined_call_operand.vmem [shape: bf16[128,128], index: 4, kind: output, shape index: {}]
  %s5 = sld [smem:[#allocation0]]
  $region26: #{densenet3_forward.7} parent=0
    _
  %s7 = ssub.s32 1, %s5
  %s8 = scalar_select 0, %s7, %s5
  // Predicated region
  $region2: #{densenet3_forward.7} parent=0 // pred_check
    _
  $region3: #{densenet3_forward.7} parent=0 // pred_check_branch
    %10 = sbr.rel (0) target = $region5
  $region4: #{densenet3_forward.7} parent=0 // pred_region
    _
  $region5: #{densenet3_forward.7} parent=0 // pred_fallthru
    _
  // Predicated region
  $region6: #{densenet3_forward.7} parent=0 // pred_check
    _
  $region7: #{densenet3_forward.7} parent=0 // pred_check_branch
    %12 = sbr.rel (0) target = $region9
  $region8: #{densenet3_forward.7} parent=0 // pred_region
    _
  $region9: #{densenet3_forward.7} parent=0 // pred_fallthru
    _
  // Predicated region
  $region10: #{densenet3_forward.7} parent=0 // pred_check
    _
  $region11: #{densenet3_forward.7} parent=0 // pred_check_branch
    %14 = sbr.rel (0) target = $region13
  $region12: #{densenet3_forward.7} parent=0 // pred_region
    _
  $region13: #{densenet3_forward.7} parent=0 // pred_fallthru
    _
  // Predicated region
  $region14: #{densenet3_forward.7} parent=0 // pred_check
    _
  $region15: #{densenet3_forward.7} parent=0 // pred_check_branch
    %16 = sbr.rel (0) target = $region17
  $region16: #{densenet3_forward.7} parent=0 // pred_region
    _
  $region17: #{densenet3_forward.7} parent=0 // pred_fallthru
    _
  %v18 = vld [vmem:[%s0] sm:$0xf]
  %v19 = vld [vmem:[%s0 + $0x4] sm:$0xf]
  %v20 = vld [vmem:[%s0 + $0x8] sm:$0xf]
  %v21 = vld [vmem:[%s0 + $0xc] sm:$0xf]
  %v22 = vld [vmem:[%s0 + $0x10] sm:$0xf]
  %v23 = vld [vmem:[%s0 + $0x14] sm:$0xf]
  %v24 = vld [vmem:[%s0 + $0x18] sm:$0xf]
  %v25 = vld [vmem:[%s0 + $0x1c] sm:$0xf]
  %v26 = vld [vmem:[%s0 + $0x20] sm:$0xf]
  %v27 = vld [vmem:[%s0 + $0x24] sm:$0xf]
  %v28 = vld [vmem:[%s0 + $0x28] sm:$0xf]
  %v29 = vld [vmem:[%s0 + $0x2c] sm:$0xf]
  %v30 = vld [vmem:[%s0 + $0x30] sm:$0xf]
  %v31 = vld [vmem:[%s0 + $0x34] sm:$0xf]
  %v32 = vld [vmem:[%s0 + $0x38] sm:$0xf]
  %v33 = vld [vmem:[%s0 + $0x3c] sm:$0xf]
  %v34 = vld [vmem:[%s1] sm:$0xf]
  %v35 = vld [vmem:[%s1 + $0x4] sm:$0xf]
  %v36 = vld [vmem:[%s1 + $0x8] sm:$0xf]
  %v37 = vld [vmem:[%s1 + $0xc] sm:$0xf]
  %v38 = vld [vmem:[%s1 + $0x10] sm:$0xf]
  %v39 = vld [vmem:[%s1 + $0x14] sm:$0xf]
  %v40 = vld [vmem:[%s1 + $0x18] sm:$0xf]
  %v41 = vld [vmem:[%s1 + $0x1c] sm:$0xf]
  %v42 = vld [vmem:[%s1 + $0x20] sm:$0xf]
  %v43 = vld [vmem:[%s1 + $0x24] sm:$0xf]
  %v44 = vld [vmem:[%s1 + $0x28] sm:$0xf]
  %v45 = vld [vmem:[%s1 + $0x2c] sm:$0xf]
  %v46 = vld [vmem:[%s1 + $0x30] sm:$0xf]
  %v47 = vld [vmem:[%s1 + $0x34] sm:$0xf]
  %v48 = vld [vmem:[%s1 + $0x38] sm:$0xf]
  %v49 = vld [vmem:[%s1 + $0x3c] sm:$0xf]
  %v50 = vld [vmem:[%s2] sm:$0x1]
  %v52 = vlaneseq
  %v53 = vshrl.u32 %v52, 7
  %v54 = vsub.s32 0, %v53
  %v55 = vrot.slane %v50, %v54
  %v73 = vunpack.c.l.b16 %v18
  %v74 = vunpack.c.l.b16 %v19
  %v75 = vunpack.c.l.b16 %v20
  %v76 = vunpack.c.l.b16 %v21
  %v77 = vunpack.c.l.b16 %v22
  %v78 = vunpack.c.l.b16 %v23
  %v79 = vunpack.c.l.b16 %v24
  %v80 = vunpack.c.l.b16 %v25
  %v81 = vunpack.c.l.b16 %v26
  %v82 = vunpack.c.l.b16 %v27
  %v83 = vunpack.c.l.b16 %v28
  %v84 = vunpack.c.l.b16 %v29
  %v85 = vunpack.c.l.b16 %v30
  %v86 = vunpack.c.l.b16 %v31
  %v87 = vunpack.c.l.b16 %v32
  %v88 = vunpack.c.l.b16 %v33
  %v89 = vpack.c.b16 %v74, %v73
  %v90 = vpack.c.b16 %v76, %v75
  %v91 = vpack.c.b16 %v78, %v77
  %v92 = vpack.c.b16 %v80, %v79
  %v93 = vpack.c.b16 %v82, %v81
  %v94 = vpack.c.b16 %v84, %v83
  %v95 = vpack.c.b16 %v86, %v85
  %v96 = vpack.c.b16 %v88, %v87
  %v121 = vunpack.c.l.b16 %v34
  %v122 = vunpack.c.l.b16 %v35
  %v123 = vunpack.c.l.b16 %v36
  %v124 = vunpack.c.l.b16 %v37
  %v125 = vunpack.c.l.b16 %v38
  %v126 = vunpack.c.l.b16 %v39
  %v127 = vunpack.c.l.b16 %v40
  %v128 = vunpack.c.l.b16 %v41
  %v129 = vunpack.c.l.b16 %v42
  %v130 = vunpack.c.l.b16 %v43
  %v131 = vunpack.c.l.b16 %v44
  %v132 = vunpack.c.l.b16 %v45
  %v133 = vunpack.c.l.b16 %v46
  %v134 = vunpack.c.l.b16 %v47
  %v135 = vunpack.c.l.b16 %v48
  %v136 = vunpack.c.l.b16 %v49
  %v137 = vpack.c.b16 %v122, %v121
  %v138 = vpack.c.b16 %v124, %v123
  %v139 = vpack.c.b16 %v126, %v125
  %v140 = vpack.c.b16 %v128, %v127
  %v141 = vpack.c.b16 %v130, %v129
  %v142 = vpack.c.b16 %v132, %v131
  %v143 = vpack.c.b16 %v134, %v133
  %v144 = vpack.c.b16 %v136, %v135
  %153 = vmatprep.subr.bf16.mxu0 0
  %154 = vmatpush1.bf16.msra.mxu0 %v144
  %155 = vmatprep.subr.bf16.mxu0 0
  %156 = vmatpush1.bf16.msra.mxu0 %v143
  %157 = vmatprep.subr.bf16.mxu0 0
  %158 = vmatpush1.bf16.msra.mxu0 %v142
  %159 = vmatprep.subr.bf16.mxu0 0
  %160 = vmatpush1.bf16.msra.mxu0 %v141
  %161 = vmatprep.subr.bf16.mxu0 0
  %162 = vmatpush1.bf16.msra.mxu0 %v140
  %163 = vmatprep.subr.bf16.mxu0 0
  %164 = vmatpush1.bf16.msra.mxu0 %v139
  %165 = vmatprep.subr.bf16.mxu0 0
  %166 = vmatpush1.bf16.msra.mxu0 %v138
  %167 = vmatprep.subr.bf16.mxu0 0
  %168 = vmatpush1.bf16.msra.mxu0 %v137
  %169 = vmatprep.subr.bf16.mxu0 0
  %170 = vmatpush2.bf16.msra.mxu0 0
  %171 = vmatprep.subr.bf16.mxu0 0
  %172 = vmatpush2.bf16.msra.mxu0 0
  %173 = vmatprep.subr.bf16.mxu0 0
  %174 = vmatpush2.bf16.msra.mxu0 0
  %175 = vmatprep.subr.bf16.mxu0 0
  %176 = vmatpush2.bf16.msra.mxu0 0
  %177 = vmatprep.subr.bf16.mxu0 0
  %178 = vmatpush2.bf16.msra.mxu0 0
  %179 = vmatprep.subr.bf16.mxu0 0
  %180 = vmatpush2.bf16.msra.mxu0 0
  %181 = vmatprep.subr.bf16.mxu0 0
  %182 = vmatpush2.bf16.msra.mxu0 0
  %183 = vmatprep.subr.bf16.mxu0 0
  %184 = vmatpush2.bf16.msra.mxu0 0
  %185 = vmatprep.mubr.bf16.mxu0 0
  %186 = vmatmul.mubr.bf16.gmra.mxu0 %v89
  %v187 = vpop.f32.mrf.mxu0
  %v188 = vadd.f32 %v55, %v187
  %v189 = vpop.f32.mrf.mxu0
  %v190 = vpop.f32.mrf.mxu0
  %v191 = vadd.f32 %v55, %v190
  %v192 = vpop.f32.mrf.mxu0
  %193 = vmatprep.mubr.bf16.mxu0 0
  %194 = vmatmul.mubr.bf16.gmra.mxu0 %v90
  %v195 = vpop.f32.mrf.mxu0
  %v196 = vadd.f32 %v55, %v195
  %v197 = vpop.f32.mrf.mxu0
  %v198 = vpop.f32.mrf.mxu0
  %v199 = vadd.f32 %v55, %v198
  %v200 = vpop.f32.mrf.mxu0
  %201 = vmatprep.mubr.bf16.mxu0 0
  %202 = vmatmul.mubr.bf16.gmra.mxu0 %v91
  %v203 = vpop.f32.mrf.mxu0
  %v204 = vadd.f32 %v55, %v203
  %v205 = vpop.f32.mrf.mxu0
  %v206 = vpop.f32.mrf.mxu0
  %v207 = vadd.f32 %v55, %v206
  %v208 = vpop.f32.mrf.mxu0
  %209 = vmatprep.mubr.bf16.mxu0 0
  %210 = vmatmul.mubr.bf16.gmra.mxu0 %v92
  %v211 = vpop.f32.mrf.mxu0
  %v212 = vadd.f32 %v55, %v211
  %v213 = vpop.f32.mrf.mxu0
  %v214 = vpop.f32.mrf.mxu0
  %v215 = vadd.f32 %v55, %v214
  %v216 = vpop.f32.mrf.mxu0
  %217 = vmatprep.mubr.bf16.mxu0 0
  %218 = vmatmul.mubr.bf16.gmra.mxu0 %v93
  %v219 = vpop.f32.mrf.mxu0
  %v220 = vadd.f32 %v55, %v219
  %v221 = vpop.f32.mrf.mxu0
  %v222 = vpop.f32.mrf.mxu0
  %v223 = vadd.f32 %v55, %v222
  %v224 = vpop.f32.mrf.mxu0
  %225 = vmatprep.mubr.bf16.mxu0 0
  %226 = vmatmul.mubr.bf16.gmra.mxu0 %v94
  %v227 = vpop.f32.mrf.mxu0
  %v228 = vadd.f32 %v55, %v227
  %v229 = vpop.f32.mrf.mxu0
  %v230 = vpop.f32.mrf.mxu0
  %v231 = vadd.f32 %v55, %v230
  %v232 = vpop.f32.mrf.mxu0
  %233 = vmatprep.mubr.bf16.mxu0 0
  %234 = vmatmul.mubr.bf16.gmra.mxu0 %v95
  %v235 = vpop.f32.mrf.mxu0
  %v236 = vadd.f32 %v55, %v235
  %v237 = vpop.f32.mrf.mxu0
  %v238 = vpop.f32.mrf.mxu0
  %v239 = vadd.f32 %v55, %v238
  %v240 = vpop.f32.mrf.mxu0
  %241 = vmatprep.mubr.bf16.mxu0 0
  %242 = vmatmul.mubr.bf16.gmra.mxu0 %v96
  %v243 = vpop.f32.mrf.mxu0
  %v244 = vadd.f32 %v55, %v243
  %v245 = vpop.f32.mrf.mxu0
  %v246 = vpop.f32.mrf.mxu0
  %v247 = vadd.f32 %v55, %v246
  %v248 = vpop.f32.mrf.mxu0
  %249 = vdwg.mxu0
  %v250 = vmax.f32 %v188, 0.0
  %v251 = vmax.f32 %v191, 0.0
  %v252 = vmax.f32 %v196, 0.0
  %v253 = vmax.f32 %v199, 0.0
  %v254 = vmax.f32 %v204, 0.0
  %v255 = vmax.f32 %v207, 0.0
  %v256 = vmax.f32 %v212, 0.0
  %v257 = vmax.f32 %v215, 0.0
  %v258 = vmax.f32 %v220, 0.0
  %v259 = vmax.f32 %v223, 0.0
  %v260 = vmax.f32 %v228, 0.0
  %v261 = vmax.f32 %v231, 0.0
  %v262 = vmax.f32 %v236, 0.0
  %v263 = vmax.f32 %v239, 0.0
  %v264 = vmax.f32 %v244, 0.0
  %v265 = vmax.f32 %v247, 0.0
  %v266 = vld [vmem:[%s3] sm:$0xf]
  %v267 = vld [vmem:[%s3 + $0x4] sm:$0xf]
  %v268 = vld [vmem:[%s3 + $0x8] sm:$0xf]
  %v269 = vld [vmem:[%s3 + $0xc] sm:$0xf]
  %v270 = vld [vmem:[%s3 + $0x10] sm:$0xf]
  %v271 = vld [vmem:[%s3 + $0x14] sm:$0xf]
  %v272 = vld [vmem:[%s3 + $0x18] sm:$0xf]
  %v273 = vld [vmem:[%s3 + $0x1c] sm:$0xf]
  %v274 = vld [vmem:[%s3 + $0x20] sm:$0xf]
  %v275 = vld [vmem:[%s3 + $0x24] sm:$0xf]
  %v276 = vld [vmem:[%s3 + $0x28] sm:$0xf]
  %v277 = vld [vmem:[%s3 + $0x2c] sm:$0xf]
  %v278 = vld [vmem:[%s3 + $0x30] sm:$0xf]
  %v279 = vld [vmem:[%s3 + $0x34] sm:$0xf]
  %v280 = vld [vmem:[%s3 + $0x38] sm:$0xf]
  %v281 = vld [vmem:[%s3 + $0x3c] sm:$0xf]
  %v282 = vpack.c.bf16 %v251, %v250
  %v283 = vpack.c.bf16 %v253, %v252
  %v284 = vpack.c.bf16 %v255, %v254
  %v285 = vpack.c.bf16 %v257, %v256
  %v286 = vpack.c.bf16 %v259, %v258
  %v287 = vpack.c.bf16 %v261, %v260
  %v288 = vpack.c.bf16 %v263, %v262
  %v289 = vpack.c.bf16 %v265, %v264
  %v306 = vunpack.c.l.b16 %v266
  %v307 = vunpack.c.l.b16 %v267
  %v308 = vunpack.c.l.b16 %v268
  %v309 = vunpack.c.l.b16 %v269
  %v310 = vunpack.c.l.b16 %v270
  %v311 = vunpack.c.l.b16 %v271
  %v312 = vunpack.c.l.b16 %v272
  %v313 = vunpack.c.l.b16 %v273
  %v314 = vunpack.c.l.b16 %v274
  %v315 = vunpack.c.l.b16 %v275
  %v316 = vunpack.c.l.b16 %v276
  %v317 = vunpack.c.l.b16 %v277
  %v318 = vunpack.c.l.b16 %v278
  %v319 = vunpack.c.l.b16 %v279
  %v320 = vunpack.c.l.b16 %v280
  %v321 = vunpack.c.l.b16 %v281
  %v322 = vpack.c.b16 %v307, %v306
  %v323 = vpack.c.b16 %v309, %v308
  %v324 = vpack.c.b16 %v311, %v310
  %v325 = vpack.c.b16 %v313, %v312
  %v326 = vpack.c.b16 %v315, %v314
  %v327 = vpack.c.b16 %v317, %v316
  %v328 = vpack.c.b16 %v319, %v318
  %v329 = vpack.c.b16 %v321, %v320
  %338 = vmatprep.subr.bf16.mxu0 0
  %339 = vmatpush1.bf16.msra.mxu0 %v329
  %340 = vmatprep.subr.bf16.mxu0 0
  %341 = vmatpush1.bf16.msra.mxu0 %v328
  %342 = vmatprep.subr.bf16.mxu0 0
  %343 = vmatpush1.bf16.msra.mxu0 %v327
  %344 = vmatprep.subr.bf16.mxu0 0
  %345 = vmatpush1.bf16.msra.mxu0 %v326
  %346 = vmatprep.subr.bf16.mxu0 0
  %347 = vmatpush1.bf16.msra.mxu0 %v325
  %348 = vmatprep.subr.bf16.mxu0 0
  %349 = vmatpush1.bf16.msra.mxu0 %v324
  %350 = vmatprep.subr.bf16.mxu0 0
  %351 = vmatpush1.bf16.msra.mxu0 %v323
  %352 = vmatprep.subr.bf16.mxu0 0
  %353 = vmatpush1.bf16.msra.mxu0 %v322
  %354 = vmatprep.subr.bf16.mxu0 0
  %355 = vmatpush2.bf16.msra.mxu0 0
  %356 = vmatprep.subr.bf16.mxu0 0
  %357 = vmatpush2.bf16.msra.mxu0 0
  %358 = vmatprep.subr.bf16.mxu0 0
  %359 = vmatpush2.bf16.msra.mxu0 0
  %360 = vmatprep.subr.bf16.mxu0 0
  %361 = vmatpush2.bf16.msra.mxu0 0
  %362 = vmatprep.subr.bf16.mxu0 0
  %363 = vmatpush2.bf16.msra.mxu0 0
  %364 = vmatprep.subr.bf16.mxu0 0
  %365 = vmatpush2.bf16.msra.mxu0 0
  %366 = vmatprep.subr.bf16.mxu0 0
  %367 = vmatpush2.bf16.msra.mxu0 0
  %368 = vmatprep.subr.bf16.mxu0 0
  %369 = vmatpush2.bf16.msra.mxu0 0
  %370 = vmatprep.mubr.bf16.mxu0 0
  %371 = vmatmul.mubr.bf16.gmra.mxu0 %v282
  %v372 = vpop.f32.mrf.mxu0
  %v373 = vadd.f32 0.0, %v372
  %v374 = vpop.f32.mrf.mxu0
  %v375 = vpop.f32.mrf.mxu0
  %v376 = vadd.f32 0.0, %v375
  %v377 = vpop.f32.mrf.mxu0
  %378 = vmatprep.mubr.bf16.mxu0 0
  %379 = vmatmul.mubr.bf16.gmra.mxu0 %v283
  %v380 = vpop.f32.mrf.mxu0
  %v381 = vadd.f32 0.0, %v380
  %v382 = vpop.f32.mrf.mxu0
  %v383 = vpop.f32.mrf.mxu0
  %v384 = vadd.f32 0.0, %v383
  %v385 = vpop.f32.mrf.mxu0
  %386 = vmatprep.mubr.bf16.mxu0 0
  %387 = vmatmul.mubr.bf16.gmra.mxu0 %v284
  %v388 = vpop.f32.mrf.mxu0
  %v389 = vadd.f32 0.0, %v388
  %v390 = vpop.f32.mrf.mxu0
  %v391 = vpop.f32.mrf.mxu0
  %v392 = vadd.f32 0.0, %v391
  %v393 = vpop.f32.mrf.mxu0
  %394 = vmatprep.mubr.bf16.mxu0 0
  %395 = vmatmul.mubr.bf16.gmra.mxu0 %v285
  %v396 = vpop.f32.mrf.mxu0
  %v397 = vadd.f32 0.0, %v396
  %v398 = vpop.f32.mrf.mxu0
  %v399 = vpop.f32.mrf.mxu0
  %v400 = vadd.f32 0.0, %v399
  %v401 = vpop.f32.mrf.mxu0
  %402 = vmatprep.mubr.bf16.mxu0 0
  %403 = vmatmul.mubr.bf16.gmra.mxu0 %v286
  %v404 = vpop.f32.mrf.mxu0
  %v405 = vadd.f32 0.0, %v404
  %v406 = vpop.f32.mrf.mxu0
  %v407 = vpop.f32.mrf.mxu0
  %v408 = vadd.f32 0.0, %v407
  %v409 = vpop.f32.mrf.mxu0
  %410 = vmatprep.mubr.bf16.mxu0 0
  %411 = vmatmul.mubr.bf16.gmra.mxu0 %v287
  %v412 = vpop.f32.mrf.mxu0
  %v413 = vadd.f32 0.0, %v412
  %v414 = vpop.f32.mrf.mxu0
  %v415 = vpop.f32.mrf.mxu0
  %v416 = vadd.f32 0.0, %v415
  %v417 = vpop.f32.mrf.mxu0
  %418 = vmatprep.mubr.bf16.mxu0 0
  %419 = vmatmul.mubr.bf16.gmra.mxu0 %v288
  %v420 = vpop.f32.mrf.mxu0
  %v421 = vadd.f32 0.0, %v420
  %v422 = vpop.f32.mrf.mxu0
  %v423 = vpop.f32.mrf.mxu0
  %v424 = vadd.f32 0.0, %v423
  %v425 = vpop.f32.mrf.mxu0
  %426 = vmatprep.mubr.bf16.mxu0 0
  %427 = vmatmul.mubr.bf16.gmra.mxu0 %v289
  %v428 = vpop.f32.mrf.mxu0
  %v429 = vadd.f32 0.0, %v428
  %v430 = vpop.f32.mrf.mxu0
  %v431 = vpop.f32.mrf.mxu0
  %v432 = vadd.f32 0.0, %v431
  %v433 = vpop.f32.mrf.mxu0
  %434 = vdwg.mxu0
  %v435 = vpack.c.bf16 %v376, %v373
  %v436 = vpack.c.bf16 %v384, %v381
  %v437 = vpack.c.bf16 %v392, %v389
  %v438 = vpack.c.bf16 %v400, %v397
  %v439 = vpack.c.bf16 %v408, %v405
  %v440 = vpack.c.bf16 %v416, %v413
  %v441 = vpack.c.bf16 %v424, %v421
  %v442 = vpack.c.bf16 %v432, %v429
  %v451 = vunpack.c.l.b16 %v435
  %v452 = vunpack.c.h.b16 %v435
  %v453 = vunpack.c.l.b16 %v436
  %v454 = vunpack.c.h.b16 %v436
  %v455 = vunpack.c.l.b16 %v437
  %v456 = vunpack.c.h.b16 %v437
  %v457 = vunpack.c.l.b16 %v438
  %v458 = vunpack.c.h.b16 %v438
  %v459 = vunpack.c.l.b16 %v439
  %v460 = vunpack.c.h.b16 %v439
  %v461 = vunpack.c.l.b16 %v440
  %v462 = vunpack.c.h.b16 %v440
  %v463 = vunpack.c.l.b16 %v441
  %v464 = vunpack.c.h.b16 %v441
  %v465 = vunpack.c.l.b16 %v442
  %v466 = vunpack.c.h.b16 %v442
  %v467 = vpack.c.b16 %v451, %v451
  %v468 = vpack.c.b16 %v452, %v452
  %v469 = vpack.c.b16 %v453, %v453
  %v470 = vpack.c.b16 %v454, %v454
  %v471 = vpack.c.b16 %v455, %v455
  %v472 = vpack.c.b16 %v456, %v456
  %v473 = vpack.c.b16 %v457, %v457
  %v474 = vpack.c.b16 %v458, %v458
  %v475 = vpack.c.b16 %v459, %v459
  %v476 = vpack.c.b16 %v460, %v460
  %v477 = vpack.c.b16 %v461, %v461
  %v478 = vpack.c.b16 %v462, %v462
  %v479 = vpack.c.b16 %v463, %v463
  %v480 = vpack.c.b16 %v464, %v464
  %v481 = vpack.c.b16 %v465, %v465
  %v482 = vpack.c.b16 %v466, %v466
  %499 = vst [vmem:[%s4] sm:$0xf] %v467
  %500 = vst [vmem:[%s4 + $0x4] sm:$0xf] %v468
  %501 = vst [vmem:[%s4 + $0x8] sm:$0xf] %v469
  %502 = vst [vmem:[%s4 + $0xc] sm:$0xf] %v470
  %503 = vst [vmem:[%s4 + $0x10] sm:$0xf] %v471
  %504 = vst [vmem:[%s4 + $0x14] sm:$0xf] %v472
  %505 = vst [vmem:[%s4 + $0x18] sm:$0xf] %v473
  %506 = vst [vmem:[%s4 + $0x1c] sm:$0xf] %v474
  %507 = vst [vmem:[%s4 + $0x20] sm:$0xf] %v475
  %508 = vst [vmem:[%s4 + $0x24] sm:$0xf] %v476
  %509 = vst [vmem:[%s4 + $0x28] sm:$0xf] %v477
  %510 = vst [vmem:[%s4 + $0x2c] sm:$0xf] %v478
  %511 = vst [vmem:[%s4 + $0x30] sm:$0xf] %v479
  %512 = vst [vmem:[%s4 + $0x34] sm:$0xf] %v480
  %513 = vst [vmem:[%s4 + $0x38] sm:$0xf] %v481
  %514 = vst [vmem:[%s4 + $0x3c] sm:$0xf] %v482
  // Predicated region
  $region18: #{densenet3_forward.7} parent=0 // pred_check
    _
  $region19: #{densenet3_forward.7} parent=0 // pred_check_branch
    %516 = sbr.rel (0) target = $region21
  $region20: #{densenet3_forward.7} parent=0 // pred_region
    _
  $region21: #{densenet3_forward.7} parent=0 // pred_fallthru
    _
  // Predicated region
  $region22: #{densenet3_forward.7} parent=0 // pred_check
    _
  $region23: #{densenet3_forward.7} parent=0 // pred_check_branch
    %518 = sbr.rel (0) target = $region25
  $region24: #{densenet3_forward.7} parent=0 // pred_region
    _
  $region25: #{densenet3_forward.7} parent=0 // pred_fallthru
    _

// kernel: densenet3_forward.8
$region0: #{densenet3_forward.8}
  #allocation0 [shape = 'u32[]', space=smem, size = 0x4, offset = 0x4, fixed_abs, tag = 'smem constant byte address 0x4 - core index']
  #allocation1 [shape = 'u32[144,128]{1,0:T(1,128)}', space=vmem, size = 0x12000, scoped, tag = 'internal scratch']
  %s0 = inlined_call_operand.vmem [shape: bf16[128,128], index: 0, kind: input, shape index: {}]
  %s1 = inlined_call_operand.vmem [shape: bf16[128,128], index: 1, kind: input, shape index: {}]
  %s2 = inlined_call_operand.vmem [shape: f32[1,128], index: 2, kind: input, shape index: {}]
  %s3 = inlined_call_operand.vmem [shape: bf16[128,256], index: 3, kind: input, shape index: {}]
  %s4 = inlined_call_operand.vmem [shape: f32[1,256], index: 4, kind: input, shape index: {}]
  %s5 = inlined_call_operand.vmem [shape: bf16[128,128], index: 5, kind: output, shape index: {0}]
  %s6 = inlined_call_operand.vmem [shape: bf16[128,128], index: 6, kind: output, shape index: {1}]
  %s7 = inlined_call_operand.vmem [shape: bf16[128,128], index: 7, kind: output, shape index: {2}]
  %8 = xla_tuple %s5, %s6, %s7
  %s9 = sld [smem:[#allocation0]]
  $region46: #{densenet3_forward.8} parent=0
    _
  %s11 = ssub.s32 1, %s9
  %s12 = scalar_select 0, %s11, %s9
  // Predicated region
  $region2: #{densenet3_forward.8} parent=0 // pred_check
    _
  $region3: #{densenet3_forward.8} parent=0 // pred_check_branch
    %14 = sbr.rel (0) target = $region5
  $region4: #{densenet3_forward.8} parent=0 // pred_region
    _
  $region5: #{densenet3_forward.8} parent=0 // pred_fallthru
    _
  // Predicated region
  $region6: #{densenet3_forward.8} parent=0 // pred_check
    _
  $region7: #{densenet3_forward.8} parent=0 // pred_check_branch
    %16 = sbr.rel (0) target = $region9
  $region8: #{densenet3_forward.8} parent=0 // pred_region
    _
  $region9: #{densenet3_forward.8} parent=0 // pred_fallthru
    _
  // Predicated region
  $region10: #{densenet3_forward.8} parent=0 // pred_check
    _
  $region11: #{densenet3_forward.8} parent=0 // pred_check_branch
    %18 = sbr.rel (0) target = $region13
  $region12: #{densenet3_forward.8} parent=0 // pred_region
    _
  $region13: #{densenet3_forward.8} parent=0 // pred_fallthru
    _
  // Predicated region
  $region14: #{densenet3_forward.8} parent=0 // pred_check
    _
  $region15: #{densenet3_forward.8} parent=0 // pred_check_branch
    %20 = sbr.rel (0) target = $region17
  $region16: #{densenet3_forward.8} parent=0 // pred_region
    _
  $region17: #{densenet3_forward.8} parent=0 // pred_fallthru
    _
  // Predicated region
  $region18: #{densenet3_forward.8} parent=0 // pred_check
    _
  $region19: #{densenet3_forward.8} parent=0 // pred_check_branch
    %22 = sbr.rel (0) target = $region21
  $region20: #{densenet3_forward.8} parent=0 // pred_region
    _
  $region21: #{densenet3_forward.8} parent=0 // pred_fallthru
    _
  %v24 = vld [vmem:[%s0] sm:$0xf]
  %v25 = vld [vmem:[%s0 + $0x4] sm:$0xf]
  %v26 = vld [vmem:[%s0 + $0x8] sm:$0xf]
  %v27 = vld [vmem:[%s0 + $0xc] sm:$0xf]
  %v28 = vld [vmem:[%s0 + $0x10] sm:$0xf]
  %v29 = vld [vmem:[%s0 + $0x14] sm:$0xf]
  %v30 = vld [vmem:[%s0 + $0x18] sm:$0xf]
  %v31 = vld [vmem:[%s0 + $0x1c] sm:$0xf]
  %v32 = vld [vmem:[%s0 + $0x20] sm:$0xf]
  %v33 = vld [vmem:[%s0 + $0x24] sm:$0xf]
  %v34 = vld [vmem:[%s0 + $0x28] sm:$0xf]
  %v35 = vld [vmem:[%s0 + $0x2c] sm:$0xf]
  %v36 = vld [vmem:[%s0 + $0x30] sm:$0xf]
  %v37 = vld [vmem:[%s0 + $0x34] sm:$0xf]
  %v38 = vld [vmem:[%s0 + $0x38] sm:$0xf]
  %v39 = vld [vmem:[%s0 + $0x3c] sm:$0xf]
  %v40 = vld [vmem:[%s1] sm:$0xf]
  %v41 = vld [vmem:[%s1 + $0x4] sm:$0xf]
  %v42 = vld [vmem:[%s1 + $0x8] sm:$0xf]
  %v43 = vld [vmem:[%s1 + $0xc] sm:$0xf]
  %v44 = vld [vmem:[%s1 + $0x10] sm:$0xf]
  %v45 = vld [vmem:[%s1 + $0x14] sm:$0xf]
  %v46 = vld [vmem:[%s1 + $0x18] sm:$0xf]
  %v47 = vld [vmem:[%s1 + $0x1c] sm:$0xf]
  %v48 = vld [vmem:[%s1 + $0x20] sm:$0xf]
  %v49 = vld [vmem:[%s1 + $0x24] sm:$0xf]
  %v50 = vld [vmem:[%s1 + $0x28] sm:$0xf]
  %v51 = vld [vmem:[%s1 + $0x2c] sm:$0xf]
  %v52 = vld [vmem:[%s1 + $0x30] sm:$0xf]
  %v53 = vld [vmem:[%s1 + $0x34] sm:$0xf]
  %v54 = vld [vmem:[%s1 + $0x38] sm:$0xf]
  %v55 = vld [vmem:[%s1 + $0x3c] sm:$0xf]
  %v56 = vld [vmem:[%s2] sm:$0x1]
  %v58 = vlaneseq
  %v59 = vshrl.u32 %v58, 7
  %v60 = vsub.s32 0, %v59
  %v61 = vrot.slane %v56, %v60
  %v79 = vunpack.c.l.b16 %v24
  %v80 = vunpack.c.l.b16 %v25
  %v81 = vunpack.c.l.b16 %v26
  %v82 = vunpack.c.l.b16 %v27
  %v83 = vunpack.c.l.b16 %v28
  %v84 = vunpack.c.l.b16 %v29
  %v85 = vunpack.c.l.b16 %v30
  %v86 = vunpack.c.l.b16 %v31
  %v87 = vunpack.c.l.b16 %v32
  %v88 = vunpack.c.l.b16 %v33
  %v89 = vunpack.c.l.b16 %v34
  %v90 = vunpack.c.l.b16 %v35
  %v91 = vunpack.c.l.b16 %v36
  %v92 = vunpack.c.l.b16 %v37
  %v93 = vunpack.c.l.b16 %v38
  %v94 = vunpack.c.l.b16 %v39
  %v95 = vpack.c.b16 %v80, %v79
  %v96 = vpack.c.b16 %v82, %v81
  %v97 = vpack.c.b16 %v84, %v83
  %v98 = vpack.c.b16 %v86, %v85
  %v99 = vpack.c.b16 %v88, %v87
  %v100 = vpack.c.b16 %v90, %v89
  %v101 = vpack.c.b16 %v92, %v91
  %v102 = vpack.c.b16 %v94, %v93
  %v127 = vunpack.c.l.b16 %v40
  %v128 = vunpack.c.l.b16 %v41
  %v129 = vunpack.c.l.b16 %v42
  %v130 = vunpack.c.l.b16 %v43
  %v131 = vunpack.c.l.b16 %v44
  %v132 = vunpack.c.l.b16 %v45
  %v133 = vunpack.c.l.b16 %v46
  %v134 = vunpack.c.l.b16 %v47
  %v135 = vunpack.c.l.b16 %v48
  %v136 = vunpack.c.l.b16 %v49
  %v137 = vunpack.c.l.b16 %v50
  %v138 = vunpack.c.l.b16 %v51
  %v139 = vunpack.c.l.b16 %v52
  %v140 = vunpack.c.l.b16 %v53
  %v141 = vunpack.c.l.b16 %v54
  %v142 = vunpack.c.l.b16 %v55
  %v143 = vpack.c.b16 %v128, %v127
  %v144 = vpack.c.b16 %v130, %v129
  %v145 = vpack.c.b16 %v132, %v131
  %v146 = vpack.c.b16 %v134, %v133
  %v147 = vpack.c.b16 %v136, %v135
  %v148 = vpack.c.b16 %v138, %v137
  %v149 = vpack.c.b16 %v140, %v139
  %v150 = vpack.c.b16 %v142, %v141
  %159 = vmatprep.subr.bf16.mxu0 0
  %160 = vmatpush1.bf16.msra.mxu0 %v150
  %161 = vmatprep.subr.bf16.mxu0 0
  %162 = vmatpush1.bf16.msra.mxu0 %v149
  %163 = vmatprep.subr.bf16.mxu0 0
  %164 = vmatpush1.bf16.msra.mxu0 %v148
  %165 = vmatprep.subr.bf16.mxu0 0
  %166 = vmatpush1.bf16.msra.mxu0 %v147
  %167 = vmatprep.subr.bf16.mxu0 0
  %168 = vmatpush1.bf16.msra.mxu0 %v146
  %169 = vmatprep.subr.bf16.mxu0 0
  %170 = vmatpush1.bf16.msra.mxu0 %v145
  %171 = vmatprep.subr.bf16.mxu0 0
  %172 = vmatpush1.bf16.msra.mxu0 %v144
  %173 = vmatprep.subr.bf16.mxu0 0
  %174 = vmatpush1.bf16.msra.mxu0 %v143
  %175 = vmatprep.subr.bf16.mxu0 0
  %176 = vmatpush2.bf16.msra.mxu0 0
  %177 = vmatprep.subr.bf16.mxu0 0
  %178 = vmatpush2.bf16.msra.mxu0 0
  %179 = vmatprep.subr.bf16.mxu0 0
  %180 = vmatpush2.bf16.msra.mxu0 0
  %181 = vmatprep.subr.bf16.mxu0 0
  %182 = vmatpush2.bf16.msra.mxu0 0
  %183 = vmatprep.subr.bf16.mxu0 0
  %184 = vmatpush2.bf16.msra.mxu0 0
  %185 = vmatprep.subr.bf16.mxu0 0
  %186 = vmatpush2.bf16.msra.mxu0 0
  %187 = vmatprep.subr.bf16.mxu0 0
  %188 = vmatpush2.bf16.msra.mxu0 0
  %189 = vmatprep.subr.bf16.mxu0 0
  %190 = vmatpush2.bf16.msra.mxu0 0
  %191 = vmatprep.mubr.bf16.mxu0 0
  %192 = vmatmul.mubr.bf16.gmra.mxu0 %v95
  %v193 = vpop.f32.mrf.mxu0
  %v194 = vadd.f32 %v61, %v193
  %v195 = vpop.f32.mrf.mxu0
  %v196 = vpop.f32.mrf.mxu0
  %v197 = vadd.f32 %v61, %v196
  %v198 = vpop.f32.mrf.mxu0
  %199 = vmatprep.mubr.bf16.mxu0 0
  %200 = vmatmul.mubr.bf16.gmra.mxu0 %v96
  %v201 = vpop.f32.mrf.mxu0
  %v202 = vadd.f32 %v61, %v201
  %v203 = vpop.f32.mrf.mxu0
  %v204 = vpop.f32.mrf.mxu0
  %v205 = vadd.f32 %v61, %v204
  %v206 = vpop.f32.mrf.mxu0
  %207 = vmatprep.mubr.bf16.mxu0 0
  %208 = vmatmul.mubr.bf16.gmra.mxu0 %v97
  %v209 = vpop.f32.mrf.mxu0
  %v210 = vadd.f32 %v61, %v209
  %v211 = vpop.f32.mrf.mxu0
  %v212 = vpop.f32.mrf.mxu0
  %v213 = vadd.f32 %v61, %v212
  %v214 = vpop.f32.mrf.mxu0
  %215 = vmatprep.mubr.bf16.mxu0 0
  %216 = vmatmul.mubr.bf16.gmra.mxu0 %v98
  %v217 = vpop.f32.mrf.mxu0
  %v218 = vadd.f32 %v61, %v217
  %v219 = vpop.f32.mrf.mxu0
  %v220 = vpop.f32.mrf.mxu0
  %v221 = vadd.f32 %v61, %v220
  %v222 = vpop.f32.mrf.mxu0
  %223 = vmatprep.mubr.bf16.mxu0 0
  %224 = vmatmul.mubr.bf16.gmra.mxu0 %v99
  %v225 = vpop.f32.mrf.mxu0
  %v226 = vadd.f32 %v61, %v225
  %v227 = vpop.f32.mrf.mxu0
  %v228 = vpop.f32.mrf.mxu0
  %v229 = vadd.f32 %v61, %v228
  %v230 = vpop.f32.mrf.mxu0
  %231 = vmatprep.mubr.bf16.mxu0 0
  %232 = vmatmul.mubr.bf16.gmra.mxu0 %v100
  %v233 = vpop.f32.mrf.mxu0
  %v234 = vadd.f32 %v61, %v233
  %v235 = vpop.f32.mrf.mxu0
  %v236 = vpop.f32.mrf.mxu0
  %v237 = vadd.f32 %v61, %v236
  %v238 = vpop.f32.mrf.mxu0
  %239 = vmatprep.mubr.bf16.mxu0 0
  %240 = vmatmul.mubr.bf16.gmra.mxu0 %v101
  %v241 = vpop.f32.mrf.mxu0
  %v242 = vadd.f32 %v61, %v241
  %v243 = vpop.f32.mrf.mxu0
  %v244 = vpop.f32.mrf.mxu0
  %v245 = vadd.f32 %v61, %v244
  %v246 = vpop.f32.mrf.mxu0
  %247 = vmatprep.mubr.bf16.mxu0 0
  %248 = vmatmul.mubr.bf16.gmra.mxu0 %v102
  %v249 = vpop.f32.mrf.mxu0
  %v250 = vadd.f32 %v61, %v249
  %v251 = vpop.f32.mrf.mxu0
  %v252 = vpop.f32.mrf.mxu0
  %v253 = vadd.f32 %v61, %v252
  %v254 = vpop.f32.mrf.mxu0
  %255 = vdwg.mxu0
  %v256 = vmax.f32 %v194, 0.0
  %v257 = vmax.f32 %v197, 0.0
  %v258 = vmax.f32 %v202, 0.0
  %v259 = vmax.f32 %v205, 0.0
  %v260 = vmax.f32 %v210, 0.0
  %v261 = vmax.f32 %v213, 0.0
  %v262 = vmax.f32 %v218, 0.0
  %v263 = vmax.f32 %v221, 0.0
  %v264 = vmax.f32 %v226, 0.0
  %v265 = vmax.f32 %v229, 0.0
  %v266 = vmax.f32 %v234, 0.0
  %v267 = vmax.f32 %v237, 0.0
  %v268 = vmax.f32 %v242, 0.0
  %v269 = vmax.f32 %v245, 0.0
  %v270 = vmax.f32 %v250, 0.0
  %v271 = vmax.f32 %v253, 0.0
  %v272 = vpack.c.bf16 %v257, %v256
  %v273 = vpack.c.bf16 %v259, %v258
  %v274 = vpack.c.bf16 %v261, %v260
  %v275 = vpack.c.bf16 %v263, %v262
  %v276 = vpack.c.bf16 %v265, %v264
  %v277 = vpack.c.bf16 %v267, %v266
  %v278 = vpack.c.bf16 %v269, %v268
  %v279 = vpack.c.bf16 %v271, %v270
  %v288 = vunpack.c.l.b16 %v272
  %v289 = vunpack.c.h.b16 %v272
  %v290 = vunpack.c.l.b16 %v273
  %v291 = vunpack.c.h.b16 %v273
  %v292 = vunpack.c.l.b16 %v274
  %v293 = vunpack.c.h.b16 %v274
  %v294 = vunpack.c.l.b16 %v275
  %v295 = vunpack.c.h.b16 %v275
  %v296 = vunpack.c.l.b16 %v276
  %v297 = vunpack.c.h.b16 %v276
  %v298 = vunpack.c.l.b16 %v277
  %v299 = vunpack.c.h.b16 %v277
  %v300 = vunpack.c.l.b16 %v278
  %v301 = vunpack.c.h.b16 %v278
  %v302 = vunpack.c.l.b16 %v279
  %v303 = vunpack.c.h.b16 %v279
  %v304 = vpack.c.b16 %v288, %v288
  %v305 = vpack.c.b16 %v289, %v289
  %v306 = vpack.c.b16 %v290, %v290
  %v307 = vpack.c.b16 %v291, %v291
  %v308 = vpack.c.b16 %v292, %v292
  %v309 = vpack.c.b16 %v293, %v293
  %v310 = vpack.c.b16 %v294, %v294
  %v311 = vpack.c.b16 %v295, %v295
  %v312 = vpack.c.b16 %v296, %v296
  %v313 = vpack.c.b16 %v297, %v297
  %v314 = vpack.c.b16 %v298, %v298
  %v315 = vpack.c.b16 %v299, %v299
  %v316 = vpack.c.b16 %v300, %v300
  %v317 = vpack.c.b16 %v301, %v301
  %v318 = vpack.c.b16 %v302, %v302
  %v319 = vpack.c.b16 %v303, %v303
  %336 = vst [vmem:[%s5] sm:$0xf] %v304
  %337 = vst [vmem:[%s5 + $0x4] sm:$0xf] %v305
  %338 = vst [vmem:[%s5 + $0x8] sm:$0xf] %v306
  %339 = vst [vmem:[%s5 + $0xc] sm:$0xf] %v307
  %340 = vst [vmem:[%s5 + $0x10] sm:$0xf] %v308
  %341 = vst [vmem:[%s5 + $0x14] sm:$0xf] %v309
  %342 = vst [vmem:[%s5 + $0x18] sm:$0xf] %v310
  %343 = vst [vmem:[%s5 + $0x1c] sm:$0xf] %v311
  %344 = vst [vmem:[%s5 + $0x20] sm:$0xf] %v312
  %345 = vst [vmem:[%s5 + $0x24] sm:$0xf] %v313
  %346 = vst [vmem:[%s5 + $0x28] sm:$0xf] %v314
  %347 = vst [vmem:[%s5 + $0x2c] sm:$0xf] %v315
  %348 = vst [vmem:[%s5 + $0x30] sm:$0xf] %v316
  %349 = vst [vmem:[%s5 + $0x34] sm:$0xf] %v317
  %350 = vst [vmem:[%s5 + $0x38] sm:$0xf] %v318
  %351 = vst [vmem:[%s5 + $0x3c] sm:$0xf] %v319
  %v352 = vld [vmem:[%s3] sm:$0xff]
  %v353 = vld [vmem:[%s3 + $0x8] sm:$0xff]
  %v354 = vld [vmem:[%s3 + $0x10] sm:$0xff]
  %v355 = vld [vmem:[%s3 + $0x18] sm:$0xff]
  %v356 = vld [vmem:[%s3 + $0x20] sm:$0xff]
  %v357 = vld [vmem:[%s3 + $0x28] sm:$0xff]
  %v358 = vld [vmem:[%s3 + $0x30] sm:$0xff]
  %v359 = vld [vmem:[%s3 + $0x38] sm:$0xff]
  %v360 = vld [vmem:[%s3 + $0x40] sm:$0xff]
  %v361 = vld [vmem:[%s3 + $0x48] sm:$0xff]
  %v362 = vld [vmem:[%s3 + $0x50] sm:$0xff]
  %v363 = vld [vmem:[%s3 + $0x58] sm:$0xff]
  %v364 = vld [vmem:[%s3 + $0x60] sm:$0xff]
  %v365 = vld [vmem:[%s3 + $0x68] sm:$0xff]
  %v366 = vld [vmem:[%s3 + $0x70] sm:$0xff]
  %v367 = vld [vmem:[%s3 + $0x78] sm:$0xff]
  %v368 = vld [vmem:[%s4] sm:$0x3]
  %v370 = vlaneseq
  %v371 = vshrl.u32 %v370, 7
  %v372 = vsub.s32 0, %v371
  %v373 = vrot.slane %v368, %v372
  %v374 = vlaneseq
  %v375 = vshrl.u32 %v374, 7
  %v376 = vsub.s32 1, %v375
  %v377 = vrot.slane %v368, %v376
  %v396 = vunpack.c.l.b16 %v352
  %v397 = vunpack.c.h.b16 %v352
  %v398 = vunpack.c.l.b16 %v353
  %v399 = vunpack.c.h.b16 %v353
  %v400 = vunpack.c.l.b16 %v354
  %v401 = vunpack.c.h.b16 %v354
  %v402 = vunpack.c.l.b16 %v355
  %v403 = vunpack.c.h.b16 %v355
  %v404 = vunpack.c.l.b16 %v356
  %v405 = vunpack.c.h.b16 %v356
  %v406 = vunpack.c.l.b16 %v357
  %v407 = vunpack.c.h.b16 %v357
  %v408 = vunpack.c.l.b16 %v358
  %v409 = vunpack.c.h.b16 %v358
  %v410 = vunpack.c.l.b16 %v359
  %v411 = vunpack.c.h.b16 %v359
  %v412 = vunpack.c.l.b16 %v360
  %v413 = vunpack.c.h.b16 %v360
  %v414 = vunpack.c.l.b16 %v361
  %v415 = vunpack.c.h.b16 %v361
  %v416 = vunpack.c.l.b16 %v362
  %v417 = vunpack.c.h.b16 %v362
  %v418 = vunpack.c.l.b16 %v363
  %v419 = vunpack.c.h.b16 %v363
  %v420 = vunpack.c.l.b16 %v364
  %v421 = vunpack.c.h.b16 %v364
  %v422 = vunpack.c.l.b16 %v365
  %v423 = vunpack.c.h.b16 %v365
  %v424 = vunpack.c.l.b16 %v366
  %v425 = vunpack.c.h.b16 %v366
  %v426 = vunpack.c.l.b16 %v367
  %v427 = vunpack.c.h.b16 %v367
  %v428 = vpack.c.b16 %v398, %v396
  %v429 = vpack.c.b16 %v399, %v397
  %v430 = vpack.c.b16 %v402, %v400
  %v431 = vpack.c.b16 %v403, %v401
  %v432 = vpack.c.b16 %v406, %v404
  %v433 = vpack.c.b16 %v407, %v405
  %v434 = vpack.c.b16 %v410, %v408
  %v435 = vpack.c.b16 %v411, %v409
  %v436 = vpack.c.b16 %v414, %v412
  %v437 = vpack.c.b16 %v415, %v413
  %v438 = vpack.c.b16 %v418, %v416
  %v439 = vpack.c.b16 %v419, %v417
  %v440 = vpack.c.b16 %v422, %v420
  %v441 = vpack.c.b16 %v423, %v421
  %v442 = vpack.c.b16 %v426, %v424
  %v443 = vpack.c.b16 %v427, %v425
  %460 = vmatprep.subr.bf16.mxu0 %v443
  %461 = vmatpush1.bf16.msra.mxu0 %v442
  %462 = vmatprep.subr.bf16.mxu0 %v441
  %463 = vmatpush1.bf16.msra.mxu0 %v440
  %464 = vmatprep.subr.bf16.mxu0 %v439
  %465 = vmatpush1.bf16.msra.mxu0 %v438
  %466 = vmatprep.subr.bf16.mxu0 %v437
  %467 = vmatpush1.bf16.msra.mxu0 %v436
  %468 = vmatprep.subr.bf16.mxu0 %v435
  %469 = vmatpush1.bf16.msra.mxu0 %v434
  %470 = vmatprep.subr.bf16.mxu0 %v433
  %471 = vmatpush1.bf16.msra.mxu0 %v432
  %472 = vmatprep.subr.bf16.mxu0 %v431
  %473 = vmatpush1.bf16.msra.mxu0 %v430
  %474 = vmatprep.subr.bf16.mxu0 %v429
  %475 = vmatpush1.bf16.msra.mxu0 %v428
  %476 = vmatprep.subr.bf16.mxu0 0
  %477 = vmatpush2.bf16.msra.mxu0 0
  %478 = vmatprep.subr.bf16.mxu0 0
  %479 = vmatpush2.bf16.msra.mxu0 0
  %480 = vmatprep.subr.bf16.mxu0 0
  %481 = vmatpush2.bf16.msra.mxu0 0
  %482 = vmatprep.subr.bf16.mxu0 0
  %483 = vmatpush2.bf16.msra.mxu0 0
  %484 = vmatprep.subr.bf16.mxu0 0
  %485 = vmatpush2.bf16.msra.mxu0 0
  %486 = vmatprep.subr.bf16.mxu0 0
  %487 = vmatpush2.bf16.msra.mxu0 0
  %488 = vmatprep.subr.bf16.mxu0 0
  %489 = vmatpush2.bf16.msra.mxu0 0
  %490 = vmatprep.subr.bf16.mxu0 0
  %491 = vmatpush2.bf16.msra.mxu0 0
  %492 = vmatprep.mubr.bf16.mxu0 0
  %493 = vmatmul.mubr.bf16.gmra.mxu0 %v272
  %v494 = vpop.f32.mrf.mxu0
  %v495 = vadd.f32 %v373, %v494
  %v496 = vpop.f32.mrf.mxu0
  %v497 = vadd.f32 %v377, %v496
  %v498 = vpop.f32.mrf.mxu0
  %v499 = vadd.f32 %v373, %v498
  %v500 = vpop.f32.mrf.mxu0
  %v501 = vadd.f32 %v377, %v500
  %502 = vmatprep.mubr.bf16.mxu0 0
  %503 = vmatmul.mubr.bf16.gmra.mxu0 %v273
  %v504 = vpop.f32.mrf.mxu0
  %v505 = vadd.f32 %v373, %v504
  %v506 = vpop.f32.mrf.mxu0
  %v507 = vadd.f32 %v377, %v506
  %v508 = vpop.f32.mrf.mxu0
  %v509 = vadd.f32 %v373, %v508
  %v510 = vpop.f32.mrf.mxu0
  %v511 = vadd.f32 %v377, %v510
  %512 = vmatprep.mubr.bf16.mxu0 0
  %513 = vmatmul.mubr.bf16.gmra.mxu0 %v274
  %v514 = vpop.f32.mrf.mxu0
  %v515 = vadd.f32 %v373, %v514
  %v516 = vpop.f32.mrf.mxu0
  %v517 = vadd.f32 %v377, %v516
  %v518 = vpop.f32.mrf.mxu0
  %v519 = vadd.f32 %v373, %v518
  %v520 = vpop.f32.mrf.mxu0
  %v521 = vadd.f32 %v377, %v520
  %522 = vmatprep.mubr.bf16.mxu0 0
  %523 = vmatmul.mubr.bf16.gmra.mxu0 %v275
  %v524 = vpop.f32.mrf.mxu0
  %v525 = vadd.f32 %v373, %v524
  %v526 = vpop.f32.mrf.mxu0
  %v527 = vadd.f32 %v377, %v526
  %v528 = vpop.f32.mrf.mxu0
  %v529 = vadd.f32 %v373, %v528
  %v530 = vpop.f32.mrf.mxu0
  %v531 = vadd.f32 %v377, %v530
  %532 = vmatprep.mubr.bf16.mxu0 0
  %533 = vmatmul.mubr.bf16.gmra.mxu0 %v276
  %v534 = vpop.f32.mrf.mxu0
  %v535 = vadd.f32 %v373, %v534
  %v536 = vpop.f32.mrf.mxu0
  %v537 = vadd.f32 %v377, %v536
  %v538 = vpop.f32.mrf.mxu0
  %v539 = vadd.f32 %v373, %v538
  %v540 = vpop.f32.mrf.mxu0
  %v541 = vadd.f32 %v377, %v540
  %542 = vmatprep.mubr.bf16.mxu0 0
  %543 = vmatmul.mubr.bf16.gmra.mxu0 %v277
  %v544 = vpop.f32.mrf.mxu0
  %v545 = vadd.f32 %v373, %v544
  %v546 = vpop.f32.mrf.mxu0
  %v547 = vadd.f32 %v377, %v546
  %v548 = vpop.f32.mrf.mxu0
  %v549 = vadd.f32 %v373, %v548
  %v550 = vpop.f32.mrf.mxu0
  %v551 = vadd.f32 %v377, %v550
  %552 = vmatprep.mubr.bf16.mxu0 0
  %553 = vmatmul.mubr.bf16.gmra.mxu0 %v278
  %v554 = vpop.f32.mrf.mxu0
  %v555 = vadd.f32 %v373, %v554
  %v556 = vpop.f32.mrf.mxu0
  %v557 = vadd.f32 %v377, %v556
  %v558 = vpop.f32.mrf.mxu0
  %v559 = vadd.f32 %v373, %v558
  %v560 = vpop.f32.mrf.mxu0
  %v561 = vadd.f32 %v377, %v560
  %562 = vmatprep.mubr.bf16.mxu0 0
  %563 = vmatmul.mubr.bf16.gmra.mxu0 %v279
  %v564 = vpop.f32.mrf.mxu0
  %v565 = vadd.f32 %v373, %v564
  %v566 = vpop.f32.mrf.mxu0
  %v567 = vadd.f32 %v377, %v566
  %v568 = vpop.f32.mrf.mxu0
  %v569 = vadd.f32 %v373, %v568
  %v570 = vpop.f32.mrf.mxu0
  %v571 = vadd.f32 %v377, %v570
  %572 = vdwg.mxu0
  %v573 = vpack.c.bf16 %v499, %v495
  %v574 = vpack.c.bf16 %v509, %v505
  %v575 = vpack.c.bf16 %v519, %v515
  %v576 = vpack.c.bf16 %v529, %v525
  %v577 = vpack.c.bf16 %v539, %v535
  %v578 = vpack.c.bf16 %v549, %v545
  %v579 = vpack.c.bf16 %v559, %v555
  %v580 = vpack.c.bf16 %v569, %v565
  %v589 = vunpack.c.l.b16 %v573
  %v590 = vunpack.c.h.b16 %v573
  %v591 = vunpack.c.l.b16 %v574
  %v592 = vunpack.c.h.b16 %v574
  %v593 = vunpack.c.l.b16 %v575
  %v594 = vunpack.c.h.b16 %v575
  %v595 = vunpack.c.l.b16 %v576
  %v596 = vunpack.c.h.b16 %v576
  %v597 = vunpack.c.l.b16 %v577
  %v598 = vunpack.c.h.b16 %v577
  %v599 = vunpack.c.l.b16 %v578
  %v600 = vunpack.c.h.b16 %v578
  %v601 = vunpack.c.l.b16 %v579
  %v602 = vunpack.c.h.b16 %v579
  %v603 = vunpack.c.l.b16 %v580
  %v604 = vunpack.c.h.b16 %v580
  %v605 = vpack.c.b16 %v589, %v589
  %v606 = vpack.c.b16 %v590, %v590
  %v607 = vpack.c.b16 %v591, %v591
  %v608 = vpack.c.b16 %v592, %v592
  %v609 = vpack.c.b16 %v593, %v593
  %v610 = vpack.c.b16 %v594, %v594
  %v611 = vpack.c.b16 %v595, %v595
  %v612 = vpack.c.b16 %v596, %v596
  %v613 = vpack.c.b16 %v597, %v597
  %v614 = vpack.c.b16 %v598, %v598
  %v615 = vpack.c.b16 %v599, %v599
  %v616 = vpack.c.b16 %v600, %v600
  %v617 = vpack.c.b16 %v601, %v601
  %v618 = vpack.c.b16 %v602, %v602
  %v619 = vpack.c.b16 %v603, %v603
  %v620 = vpack.c.b16 %v604, %v604
  %637 = vst [vmem:[%s6] sm:$0xf] %v605
  %638 = vst [vmem:[%s6 + $0x4] sm:$0xf] %v606
  %639 = vst [vmem:[%s6 + $0x8] sm:$0xf] %v607
  %640 = vst [vmem:[%s6 + $0xc] sm:$0xf] %v608
  %641 = vst [vmem:[%s6 + $0x10] sm:$0xf] %v609
  %642 = vst [vmem:[%s6 + $0x14] sm:$0xf] %v610
  %643 = vst [vmem:[%s6 + $0x18] sm:$0xf] %v611
  %644 = vst [vmem:[%s6 + $0x1c] sm:$0xf] %v612
  %645 = vst [vmem:[%s6 + $0x20] sm:$0xf] %v613
  %646 = vst [vmem:[%s6 + $0x24] sm:$0xf] %v614
  %647 = vst [vmem:[%s6 + $0x28] sm:$0xf] %v615
  %648 = vst [vmem:[%s6 + $0x2c] sm:$0xf] %v616
  %649 = vst [vmem:[%s6 + $0x30] sm:$0xf] %v617
  %650 = vst [vmem:[%s6 + $0x34] sm:$0xf] %v618
  %651 = vst [vmem:[%s6 + $0x38] sm:$0xf] %v619
  %652 = vst [vmem:[%s6 + $0x3c] sm:$0xf] %v620
  %v653 = vpack.c.bf16 %v501, %v497
  %v654 = vpack.c.bf16 %v511, %v507
  %v655 = vpack.c.bf16 %v521, %v517
  %v656 = vpack.c.bf16 %v531, %v527
  %v657 = vpack.c.bf16 %v541, %v537
  %v658 = vpack.c.bf16 %v551, %v547
  %v659 = vpack.c.bf16 %v561, %v557
  %v660 = vpack.c.bf16 %v571, %v567
  %v669 = vunpack.c.l.b16 %v653
  %v670 = vunpack.c.h.b16 %v653
  %v671 = vunpack.c.l.b16 %v654
  %v672 = vunpack.c.h.b16 %v654
  %v673 = vunpack.c.l.b16 %v655
  %v674 = vunpack.c.h.b16 %v655
  %v675 = vunpack.c.l.b16 %v656
  %v676 = vunpack.c.h.b16 %v656
  %v677 = vunpack.c.l.b16 %v657
  %v678 = vunpack.c.h.b16 %v657
  %v679 = vunpack.c.l.b16 %v658
  %v680 = vunpack.c.h.b16 %v658
  %v681 = vunpack.c.l.b16 %v659
  %v682 = vunpack.c.h.b16 %v659
  %v683 = vunpack.c.l.b16 %v660
  %v684 = vunpack.c.h.b16 %v660
  %v685 = vpack.c.b16 %v669, %v669
  %v686 = vpack.c.b16 %v670, %v670
  %v687 = vpack.c.b16 %v671, %v671
  %v688 = vpack.c.b16 %v672, %v672
  %v689 = vpack.c.b16 %v673, %v673
  %v690 = vpack.c.b16 %v674, %v674
  %v691 = vpack.c.b16 %v675, %v675
  %v692 = vpack.c.b16 %v676, %v676
  %v693 = vpack.c.b16 %v677, %v677
  %v694 = vpack.c.b16 %v678, %v678
  %v695 = vpack.c.b16 %v679, %v679
  %v696 = vpack.c.b16 %v680, %v680
  %v697 = vpack.c.b16 %v681, %v681
  %v698 = vpack.c.b16 %v682, %v682
  %v699 = vpack.c.b16 %v683, %v683
  %v700 = vpack.c.b16 %v684, %v684
  %717 = vst [vmem:[%s7] sm:$0xf] %v685
  %718 = vst [vmem:[%s7 + $0x4] sm:$0xf] %v686
  %719 = vst [vmem:[%s7 + $0x8] sm:$0xf] %v687
  %720 = vst [vmem:[%s7 + $0xc] sm:$0xf] %v688
  %721 = vst [vmem:[%s7 + $0x10] sm:$0xf] %v689
  %722 = vst [vmem:[%s7 + $0x14] sm:$0xf] %v690
  %723 = vst [vmem:[%s7 + $0x18] sm:$0xf] %v691
  %724 = vst [vmem:[%s7 + $0x1c] sm:$0xf] %v692
  %725 = vst [vmem:[%s7 + $0x20] sm:$0xf] %v693
  %726 = vst [vmem:[%s7 + $0x24] sm:$0xf] %v694
  %727 = vst [vmem:[%s7 + $0x28] sm:$0xf] %v695
  %728 = vst [vmem:[%s7 + $0x2c] sm:$0xf] %v696
  %729 = vst [vmem:[%s7 + $0x30] sm:$0xf] %v697
  %730 = vst [vmem:[%s7 + $0x34] sm:$0xf] %v698
  %731 = vst [vmem:[%s7 + $0x38] sm:$0xf] %v699
  %732 = vst [vmem:[%s7 + $0x3c] sm:$0xf] %v700
  // Predicated region
  $region22: #{densenet3_forward.8} parent=0 // pred_check
    _
  $region23: #{densenet3_forward.8} parent=0 // pred_check_branch
    %734 = sbr.rel (0) target = $region25
  $region24: #{densenet3_forward.8} parent=0 // pred_region
    _
  $region25: #{densenet3_forward.8} parent=0 // pred_fallthru
    _
  // Predicated region
  $region26: #{densenet3_forward.8} parent=0 // pred_check
    _
  $region27: #{densenet3_forward.8} parent=0 // pred_check_branch
    %736 = sbr.rel (0) target = $region29
  $region28: #{densenet3_forward.8} parent=0 // pred_region
    _
  $region29: #{densenet3_forward.8} parent=0 // pred_fallthru
    _
  // Predicated region
  $region30: #{densenet3_forward.8} parent=0 // pred_check
    _
  $region31: #{densenet3_forward.8} parent=0 // pred_check_branch
    %738 = sbr.rel (0) target = $region33
  $region32: #{densenet3_forward.8} parent=0 // pred_region
    _
  $region33: #{densenet3_forward.8} parent=0 // pred_fallthru
    _
  // Predicated region
  $region34: #{densenet3_forward.8} parent=0 // pred_check
    _
  $region35: #{densenet3_forward.8} parent=0 // pred_check_branch
    %740 = sbr.rel (0) target = $region37
  $region36: #{densenet3_forward.8} parent=0 // pred_region
    _
  $region37: #{densenet3_forward.8} parent=0 // pred_fallthru
    _
  // Predicated region
  $region38: #{densenet3_forward.8} parent=0 // pred_check
    _
  $region39: #{densenet3_forward.8} parent=0 // pred_check_branch
    %742 = sbr.rel (0) target = $region41
  $region40: #{densenet3_forward.8} parent=0 // pred_region
    _
  $region41: #{densenet3_forward.8} parent=0 // pred_fallthru
    _
  // Predicated region
  $region42: #{densenet3_forward.8} parent=0 // pred_check
    _
  $region43: #{densenet3_forward.8} parent=0 // pred_check_branch
    %744 = sbr.rel (0) target = $region45
  $region44: #{densenet3_forward.8} parent=0 // pred_region
    _
  $region45: #{densenet3_forward.8} parent=0 // pred_fallthru
    _

// kernel: densenet3_forward.11
$region0: #{densenet3_forward.11}
  #allocation0 [shape = 'u32[]', space=smem, size = 0x4, offset = 0x4, fixed_abs, tag = 'smem constant byte address 0x4 - core index']
  #allocation1 [shape = 'u32[144,128]{1,0:T(1,128)}', space=vmem, size = 0x12000, scoped, tag = 'internal scratch']
  %s0 = inlined_call_operand.vmem [shape: bf16[128,128], index: 0, kind: input, shape index: {}]
  %s1 = inlined_call_operand.vmem [shape: bf16[128,128], index: 1, kind: input, shape index: {}]
  %s2 = inlined_call_operand.vmem [shape: f32[1,128], index: 2, kind: input, shape index: {}]
  %s3 = inlined_call_operand.vmem [shape: f32[128,128], index: 3, kind: output, shape index: {}]
  %s4 = sld [smem:[#allocation0]]
  $region22: #{densenet3_forward.11} parent=0
    _
  %s6 = ssub.s32 1, %s4
  %s7 = scalar_select 0, %s6, %s4
  // Predicated region
  $region2: #{densenet3_forward.11} parent=0 // pred_check
    _
  $region3: #{densenet3_forward.11} parent=0 // pred_check_branch
    %9 = sbr.rel (0) target = $region5
  $region4: #{densenet3_forward.11} parent=0 // pred_region
    _
  $region5: #{densenet3_forward.11} parent=0 // pred_fallthru
    _
  // Predicated region
  $region6: #{densenet3_forward.11} parent=0 // pred_check
    _
  $region7: #{densenet3_forward.11} parent=0 // pred_check_branch
    %11 = sbr.rel (0) target = $region9
  $region8: #{densenet3_forward.11} parent=0 // pred_region
    _
  $region9: #{densenet3_forward.11} parent=0 // pred_fallthru
    _
  // Predicated region
  $region10: #{densenet3_forward.11} parent=0 // pred_check
    _
  $region11: #{densenet3_forward.11} parent=0 // pred_check_branch
    %13 = sbr.rel (0) target = $region13
  $region12: #{densenet3_forward.11} parent=0 // pred_region
    _
  $region13: #{densenet3_forward.11} parent=0 // pred_fallthru
    _
  %v15 = vld [vmem:[%s0] sm:$0xf]
  %v16 = vld [vmem:[%s0 + $0x4] sm:$0xf]
  %v17 = vld [vmem:[%s0 + $0x8] sm:$0xf]
  %v18 = vld [vmem:[%s0 + $0xc] sm:$0xf]
  %v19 = vld [vmem:[%s0 + $0x10] sm:$0xf]
  %v20 = vld [vmem:[%s0 + $0x14] sm:$0xf]
  %v21 = vld [vmem:[%s0 + $0x18] sm:$0xf]
  %v22 = vld [vmem:[%s0 + $0x1c] sm:$0xf]
  %v23 = vld [vmem:[%s0 + $0x20] sm:$0xf]
  %v24 = vld [vmem:[%s0 + $0x24] sm:$0xf]
  %v25 = vld [vmem:[%s0 + $0x28] sm:$0xf]
  %v26 = vld [vmem:[%s0 + $0x2c] sm:$0xf]
  %v27 = vld [vmem:[%s0 + $0x30] sm:$0xf]
  %v28 = vld [vmem:[%s0 + $0x34] sm:$0xf]
  %v29 = vld [vmem:[%s0 + $0x38] sm:$0xf]
  %v30 = vld [vmem:[%s0 + $0x3c] sm:$0xf]
  %v31 = vld [vmem:[%s1] sm:$0xf]
  %v32 = vld [vmem:[%s1 + $0x4] sm:$0xf]
  %v33 = vld [vmem:[%s1 + $0x8] sm:$0xf]
  %v34 = vld [vmem:[%s1 + $0xc] sm:$0xf]
  %v35 = vld [vmem:[%s1 + $0x10] sm:$0xf]
  %v36 = vld [vmem:[%s1 + $0x14] sm:$0xf]
  %v37 = vld [vmem:[%s1 + $0x18] sm:$0xf]
  %v38 = vld [vmem:[%s1 + $0x1c] sm:$0xf]
  %v39 = vld [vmem:[%s1 + $0x20] sm:$0xf]
  %v40 = vld [vmem:[%s1 + $0x24] sm:$0xf]
  %v41 = vld [vmem:[%s1 + $0x28] sm:$0xf]
  %v42 = vld [vmem:[%s1 + $0x2c] sm:$0xf]
  %v43 = vld [vmem:[%s1 + $0x30] sm:$0xf]
  %v44 = vld [vmem:[%s1 + $0x34] sm:$0xf]
  %v45 = vld [vmem:[%s1 + $0x38] sm:$0xf]
  %v46 = vld [vmem:[%s1 + $0x3c] sm:$0xf]
  %v47 = vld [vmem:[%s2] sm:$0x1]
  %v49 = vlaneseq
  %v50 = vshrl.u32 %v49, 7
  %v51 = vsub.s32 0, %v50
  %v52 = vrot.slane %v47, %v51
  %v70 = vunpack.c.l.b16 %v15
  %v71 = vunpack.c.l.b16 %v16
  %v72 = vunpack.c.l.b16 %v17
  %v73 = vunpack.c.l.b16 %v18
  %v74 = vunpack.c.l.b16 %v19
  %v75 = vunpack.c.l.b16 %v20
  %v76 = vunpack.c.l.b16 %v21
  %v77 = vunpack.c.l.b16 %v22
  %v78 = vunpack.c.l.b16 %v23
  %v79 = vunpack.c.l.b16 %v24
  %v80 = vunpack.c.l.b16 %v25
  %v81 = vunpack.c.l.b16 %v26
  %v82 = vunpack.c.l.b16 %v27
  %v83 = vunpack.c.l.b16 %v28
  %v84 = vunpack.c.l.b16 %v29
  %v85 = vunpack.c.l.b16 %v30
  %v86 = vpack.c.b16 %v71, %v70
  %v87 = vpack.c.b16 %v73, %v72
  %v88 = vpack.c.b16 %v75, %v74
  %v89 = vpack.c.b16 %v77, %v76
  %v90 = vpack.c.b16 %v79, %v78
  %v91 = vpack.c.b16 %v81, %v80
  %v92 = vpack.c.b16 %v83, %v82
  %v93 = vpack.c.b16 %v85, %v84
  %v118 = vunpack.c.l.b16 %v31
  %v119 = vunpack.c.l.b16 %v32
  %v120 = vunpack.c.l.b16 %v33
  %v121 = vunpack.c.l.b16 %v34
  %v122 = vunpack.c.l.b16 %v35
  %v123 = vunpack.c.l.b16 %v36
  %v124 = vunpack.c.l.b16 %v37
  %v125 = vunpack.c.l.b16 %v38
  %v126 = vunpack.c.l.b16 %v39
  %v127 = vunpack.c.l.b16 %v40
  %v128 = vunpack.c.l.b16 %v41
  %v129 = vunpack.c.l.b16 %v42
  %v130 = vunpack.c.l.b16 %v43
  %v131 = vunpack.c.l.b16 %v44
  %v132 = vunpack.c.l.b16 %v45
  %v133 = vunpack.c.l.b16 %v46
  %v134 = vpack.c.b16 %v119, %v118
  %v135 = vpack.c.b16 %v121, %v120
  %v136 = vpack.c.b16 %v123, %v122
  %v137 = vpack.c.b16 %v125, %v124
  %v138 = vpack.c.b16 %v127, %v126
  %v139 = vpack.c.b16 %v129, %v128
  %v140 = vpack.c.b16 %v131, %v130
  %v141 = vpack.c.b16 %v133, %v132
  %150 = vmatprep.subr.bf16.mxu0 0
  %151 = vmatpush1.bf16.msra.mxu0 %v141
  %152 = vmatprep.subr.bf16.mxu0 0
  %153 = vmatpush1.bf16.msra.mxu0 %v140
  %154 = vmatprep.subr.bf16.mxu0 0
  %155 = vmatpush1.bf16.msra.mxu0 %v139
  %156 = vmatprep.subr.bf16.mxu0 0
  %157 = vmatpush1.bf16.msra.mxu0 %v138
  %158 = vmatprep.subr.bf16.mxu0 0
  %159 = vmatpush1.bf16.msra.mxu0 %v137
  %160 = vmatprep.subr.bf16.mxu0 0
  %161 = vmatpush1.bf16.msra.mxu0 %v136
  %162 = vmatprep.subr.bf16.mxu0 0
  %163 = vmatpush1.bf16.msra.mxu0 %v135
  %164 = vmatprep.subr.bf16.mxu0 0
  %165 = vmatpush1.bf16.msra.mxu0 %v134
  %166 = vmatprep.subr.bf16.mxu0 0
  %167 = vmatpush2.bf16.msra.mxu0 0
  %168 = vmatprep.subr.bf16.mxu0 0
  %169 = vmatpush2.bf16.msra.mxu0 0
  %170 = vmatprep.subr.bf16.mxu0 0
  %171 = vmatpush2.bf16.msra.mxu0 0
  %172 = vmatprep.subr.bf16.mxu0 0
  %173 = vmatpush2.bf16.msra.mxu0 0
  %174 = vmatprep.subr.bf16.mxu0 0
  %175 = vmatpush2.bf16.msra.mxu0 0
  %176 = vmatprep.subr.bf16.mxu0 0
  %177 = vmatpush2.bf16.msra.mxu0 0
  %178 = vmatprep.subr.bf16.mxu0 0
  %179 = vmatpush2.bf16.msra.mxu0 0
  %180 = vmatprep.subr.bf16.mxu0 0
  %181 = vmatpush2.bf16.msra.mxu0 0
  %182 = vmatprep.mubr.bf16.mxu0 0
  %183 = vmatmul.mubr.bf16.gmra.mxu0 %v86
  %v184 = vpop.f32.mrf.mxu0
  %v185 = vadd.f32 %v52, %v184
  %v186 = vpop.f32.mrf.mxu0
  %v187 = vpop.f32.mrf.mxu0
  %v188 = vadd.f32 %v52, %v187
  %v189 = vpop.f32.mrf.mxu0
  %190 = vmatprep.mubr.bf16.mxu0 0
  %191 = vmatmul.mubr.bf16.gmra.mxu0 %v87
  %v192 = vpop.f32.mrf.mxu0
  %v193 = vadd.f32 %v52, %v192
  %v194 = vpop.f32.mrf.mxu0
  %v195 = vpop.f32.mrf.mxu0
  %v196 = vadd.f32 %v52, %v195
  %v197 = vpop.f32.mrf.mxu0
  %198 = vmatprep.mubr.bf16.mxu0 0
  %199 = vmatmul.mubr.bf16.gmra.mxu0 %v88
  %v200 = vpop.f32.mrf.mxu0
  %v201 = vadd.f32 %v52, %v200
  %v202 = vpop.f32.mrf.mxu0
  %v203 = vpop.f32.mrf.mxu0
  %v204 = vadd.f32 %v52, %v203
  %v205 = vpop.f32.mrf.mxu0
  %206 = vmatprep.mubr.bf16.mxu0 0
  %207 = vmatmul.mubr.bf16.gmra.mxu0 %v89
  %v208 = vpop.f32.mrf.mxu0
  %v209 = vadd.f32 %v52, %v208
  %v210 = vpop.f32.mrf.mxu0
  %v211 = vpop.f32.mrf.mxu0
  %v212 = vadd.f32 %v52, %v211
  %v213 = vpop.f32.mrf.mxu0
  %214 = vmatprep.mubr.bf16.mxu0 0
  %215 = vmatmul.mubr.bf16.gmra.mxu0 %v90
  %v216 = vpop.f32.mrf.mxu0
  %v217 = vadd.f32 %v52, %v216
  %v218 = vpop.f32.mrf.mxu0
  %v219 = vpop.f32.mrf.mxu0
  %v220 = vadd.f32 %v52, %v219
  %v221 = vpop.f32.mrf.mxu0
  %222 = vmatprep.mubr.bf16.mxu0 0
  %223 = vmatmul.mubr.bf16.gmra.mxu0 %v91
  %v224 = vpop.f32.mrf.mxu0
  %v225 = vadd.f32 %v52, %v224
  %v226 = vpop.f32.mrf.mxu0
  %v227 = vpop.f32.mrf.mxu0
  %v228 = vadd.f32 %v52, %v227
  %v229 = vpop.f32.mrf.mxu0
  %230 = vmatprep.mubr.bf16.mxu0 0
  %231 = vmatmul.mubr.bf16.gmra.mxu0 %v92
  %v232 = vpop.f32.mrf.mxu0
  %v233 = vadd.f32 %v52, %v232
  %v234 = vpop.f32.mrf.mxu0
  %v235 = vpop.f32.mrf.mxu0
  %v236 = vadd.f32 %v52, %v235
  %v237 = vpop.f32.mrf.mxu0
  %238 = vmatprep.mubr.bf16.mxu0 0
  %239 = vmatmul.mubr.bf16.gmra.mxu0 %v93
  %v240 = vpop.f32.mrf.mxu0
  %v241 = vadd.f32 %v52, %v240
  %v242 = vpop.f32.mrf.mxu0
  %v243 = vpop.f32.mrf.mxu0
  %v244 = vadd.f32 %v52, %v243
  %v245 = vpop.f32.mrf.mxu0
  %246 = vdwg.mxu0
  %v247 = vlaneseq
  %v248 = vand.u32 %v247, 127
  %vm249 = vcmp.lt.s32.totalorder %v248, 8
  %v250 = vsel %vm249, %v185, -1e+30
  %v251 = vsel %vm249, %v188, -1e+30
  %v252 = vsel %vm249, %v193, -1e+30
  %v253 = vsel %vm249, %v196, -1e+30
  %v254 = vsel %vm249, %v201, -1e+30
  %v255 = vsel %vm249, %v204, -1e+30
  %v256 = vsel %vm249, %v209, -1e+30
  %v257 = vsel %vm249, %v212, -1e+30
  %v258 = vsel %vm249, %v217, -1e+30
  %v259 = vsel %vm249, %v220, -1e+30
  %v260 = vsel %vm249, %v225, -1e+30
  %v261 = vsel %vm249, %v228, -1e+30
  %v262 = vsel %vm249, %v233, -1e+30
  %v263 = vsel %vm249, %v236, -1e+30
  %v264 = vsel %vm249, %v241, -1e+30
  %v265 = vsel %vm249, %v244, -1e+30
  %266 = vmax.xlane.f32.xlu0 %v250
  %v267 = vpop.xlane.xlu0 %266
  %268 = vmax.xlane.f32.xlu0 %v251
  %v269 = vpop.xlane.xlu0 %268
  %270 = vmax.xlane.f32.xlu0 %v252
  %v271 = vpop.xlane.xlu0 %270
  %272 = vmax.xlane.f32.xlu0 %v253
  %v273 = vpop.xlane.xlu0 %272
  %274 = vmax.xlane.f32.xlu0 %v254
  %v275 = vpop.xlane.xlu0 %274
  %276 = vmax.xlane.f32.xlu0 %v255
  %v277 = vpop.xlane.xlu0 %276
  %278 = vmax.xlane.f32.xlu0 %v256
  %v279 = vpop.xlane.xlu0 %278
  %280 = vmax.xlane.f32.xlu0 %v257
  %v281 = vpop.xlane.xlu0 %280
  %282 = vmax.xlane.f32.xlu0 %v258
  %v283 = vpop.xlane.xlu0 %282
  %284 = vmax.xlane.f32.xlu0 %v259
  %v285 = vpop.xlane.xlu0 %284
  %286 = vmax.xlane.f32.xlu0 %v260
  %v287 = vpop.xlane.xlu0 %286
  %288 = vmax.xlane.f32.xlu0 %v261
  %v289 = vpop.xlane.xlu0 %288
  %290 = vmax.xlane.f32.xlu0 %v262
  %v291 = vpop.xlane.xlu0 %290
  %292 = vmax.xlane.f32.xlu0 %v263
  %v293 = vpop.xlane.xlu0 %292
  %294 = vmax.xlane.f32.xlu0 %v264
  %v295 = vpop.xlane.xlu0 %294
  %296 = vmax.xlane.f32.xlu0 %v265
  %v297 = vpop.xlane.xlu0 %296
  %v298 = vsub.f32 %v250, %v267
  %v299 = vsub.f32 %v251, %v269
  %v300 = vsub.f32 %v252, %v271
  %v301 = vsub.f32 %v253, %v273
  %v302 = vsub.f32 %v254, %v275
  %v303 = vsub.f32 %v255, %v277
  %v304 = vsub.f32 %v256, %v279
  %v305 = vsub.f32 %v257, %v281
  %v306 = vsub.f32 %v258, %v283
  %v307 = vsub.f32 %v259, %v285
  %v308 = vsub.f32 %v260, %v287
  %v309 = vsub.f32 %v261, %v289
  %v310 = vsub.f32 %v262, %v291
  %v311 = vsub.f32 %v263, %v293
  %v312 = vsub.f32 %v264, %v295
  %v313 = vsub.f32 %v265, %v297
  %v314 = vmul.f32 %v298, 1.442695
  %v315 = vpow.pop %v314
  %v316 = vmul.f32 %v299, 1.442695
  %v317 = vpow.pop %v316
  %v318 = vmul.f32 %v300, 1.442695
  %v319 = vpow.pop %v318
  %v320 = vmul.f32 %v301, 1.442695
  %v321 = vpow.pop %v320
  %v322 = vmul.f32 %v302, 1.442695
  %v323 = vpow.pop %v322
  %v324 = vmul.f32 %v303, 1.442695
  %v325 = vpow.pop %v324
  %v326 = vmul.f32 %v304, 1.442695
  %v327 = vpow.pop %v326
  %v328 = vmul.f32 %v305, 1.442695
  %v329 = vpow.pop %v328
  %v330 = vmul.f32 %v306, 1.442695
  %v331 = vpow.pop %v330
  %v332 = vmul.f32 %v307, 1.442695
  %v333 = vpow.pop %v332
  %v334 = vmul.f32 %v308, 1.442695
  %v335 = vpow.pop %v334
  %v336 = vmul.f32 %v309, 1.442695
  %v337 = vpow.pop %v336
  %v338 = vmul.f32 %v310, 1.442695
  %v339 = vpow.pop %v338
  %v340 = vmul.f32 %v311, 1.442695
  %v341 = vpow.pop %v340
  %v342 = vmul.f32 %v312, 1.442695
  %v343 = vpow.pop %v342
  %v344 = vmul.f32 %v313, 1.442695
  %v345 = vpow.pop %v344
  %346 = vadd.xlane.f32.xlu0 %v315
  %v347 = vpop.xlane.xlu0 %346
  %348 = vadd.xlane.f32.xlu0 %v317
  %v349 = vpop.xlane.xlu0 %348
  %350 = vadd.xlane.f32.xlu0 %v319
  %v351 = vpop.xlane.xlu0 %350
  %352 = vadd.xlane.f32.xlu0 %v321
  %v353 = vpop.xlane.xlu0 %352
  %354 = vadd.xlane.f32.xlu0 %v323
  %v355 = vpop.xlane.xlu0 %354
  %356 = vadd.xlane.f32.xlu0 %v325
  %v357 = vpop.xlane.xlu0 %356
  %358 = vadd.xlane.f32.xlu0 %v327
  %v359 = vpop.xlane.xlu0 %358
  %360 = vadd.xlane.f32.xlu0 %v329
  %v361 = vpop.xlane.xlu0 %360
  %362 = vadd.xlane.f32.xlu0 %v331
  %v363 = vpop.xlane.xlu0 %362
  %364 = vadd.xlane.f32.xlu0 %v333
  %v365 = vpop.xlane.xlu0 %364
  %366 = vadd.xlane.f32.xlu0 %v335
  %v367 = vpop.xlane.xlu0 %366
  %368 = vadd.xlane.f32.xlu0 %v337
  %v369 = vpop.xlane.xlu0 %368
  %370 = vadd.xlane.f32.xlu0 %v339
  %v371 = vpop.xlane.xlu0 %370
  %372 = vadd.xlane.f32.xlu0 %v341
  %v373 = vpop.xlane.xlu0 %372
  %374 = vadd.xlane.f32.xlu0 %v343
  %v375 = vpop.xlane.xlu0 %374
  %376 = vadd.xlane.f32.xlu0 %v345
  %v377 = vpop.xlane.xlu0 %376
  %v378 = vrcp.pop %v347
  %v379 = vrcp.pop %v349
  %v380 = vrcp.pop %v351
  %v381 = vrcp.pop %v353
  %v382 = vrcp.pop %v355
  %v383 = vrcp.pop %v357
  %v384 = vrcp.pop %v359
  %v385 = vrcp.pop %v361
  %v386 = vrcp.pop %v363
  %v387 = vrcp.pop %v365
  %v388 = vrcp.pop %v367
  %v389 = vrcp.pop %v369
  %v390 = vrcp.pop %v371
  %v391 = vrcp.pop %v373
  %v392 = vrcp.pop %v375
  %v393 = vrcp.pop %v377
  %v394 = vmul.f32 %v315, %v378
  %v395 = vmul.f32 %v317, %v379
  %v396 = vmul.f32 %v319, %v380
  %v397 = vmul.f32 %v321, %v381
  %v398 = vmul.f32 %v323, %v382
  %v399 = vmul.f32 %v325, %v383
  %v400 = vmul.f32 %v327, %v384
  %v401 = vmul.f32 %v329, %v385
  %v402 = vmul.f32 %v331, %v386
  %v403 = vmul.f32 %v333, %v387
  %v404 = vmul.f32 %v335, %v388
  %v405 = vmul.f32 %v337, %v389
  %v406 = vmul.f32 %v339, %v390
  %v407 = vmul.f32 %v341, %v391
  %v408 = vmul.f32 %v343, %v392
  %v409 = vmul.f32 %v345, %v393
  %410 = vst [vmem:[%s3] sm:$0xff] %v394
  %411 = vst [vmem:[%s3 + $0x8] sm:$0xff] %v395
  %412 = vst [vmem:[%s3 + $0x10] sm:$0xff] %v396
  %413 = vst [vmem:[%s3 + $0x18] sm:$0xff] %v397
  %414 = vst [vmem:[%s3 + $0x20] sm:$0xff] %v398
  %415 = vst [vmem:[%s3 + $0x28] sm:$0xff] %v399
  %416 = vst [vmem:[%s3 + $0x30] sm:$0xff] %v400
  %417 = vst [vmem:[%s3 + $0x38] sm:$0xff] %v401
  %418 = vst [vmem:[%s3 + $0x40] sm:$0xff] %v402
  %419 = vst [vmem:[%s3 + $0x48] sm:$0xff] %v403
  %420 = vst [vmem:[%s3 + $0x50] sm:$0xff] %v404
  %421 = vst [vmem:[%s3 + $0x58] sm:$0xff] %v405
  %422 = vst [vmem:[%s3 + $0x60] sm:$0xff] %v406
  %423 = vst [vmem:[%s3 + $0x68] sm:$0xff] %v407
  %424 = vst [vmem:[%s3 + $0x70] sm:$0xff] %v408
  %425 = vst [vmem:[%s3 + $0x78] sm:$0xff] %v409
  // Predicated region
  $region14: #{densenet3_forward.11} parent=0 // pred_check
    _
  $region15: #{densenet3_forward.11} parent=0 // pred_check_branch
    %427 = sbr.rel (0) target = $region17
  $region16: #{densenet3_forward.11} parent=0 // pred_region
    _
  $region17: #{densenet3_forward.11} parent=0 // pred_fallthru
    _
  // Predicated region
  $region18: #{densenet3_forward.11} parent=0 // pred_check
    _
  $region19: #{densenet3_forward.11} parent=0 // pred_check_branch
    %429 = sbr.rel (0) target = $region21
  $region20: #{densenet3_forward.11} parent=0 // pred_region
    _
  $region21: #{densenet3_forward.11} parent=0 // pred_fallthru
    _

// kernel: densenet3_forward.10
$region0: #{densenet3_forward.10}
  #allocation0 [shape = 'u32[]', space=smem, size = 0x4, offset = 0x4, fixed_abs, tag = 'smem constant byte address 0x4 - core index']
  #allocation1 [shape = 'u32[144,128]{1,0:T(1,128)}', space=vmem, size = 0x12000, scoped, tag = 'internal scratch']
  %s0 = inlined_call_operand.vmem [shape: bf16[128,128], index: 0, kind: input, shape index: {}, may-alias: {0,1}]
  %s1 = inlined_call_operand.vmem [shape: bf16[128,128], index: 1, kind: input, shape index: {}, may-alias: {0,1}]
  %s2 = inlined_call_operand.vmem [shape: bf16[128,128], index: 2, kind: input, shape index: {}]
  %s3 = inlined_call_operand.vmem [shape: bf16[128,128], index: 3, kind: input, shape index: {}]
  %s4 = inlined_call_operand.vmem [shape: f32[1,128], index: 4, kind: input, shape index: {}]
  %s5 = inlined_call_operand.vmem [shape: bf16[128,128], index: 5, kind: input, shape index: {}]
  %s6 = inlined_call_operand.vmem [shape: bf16[128,128], index: 6, kind: output, shape index: {0}]
  %s7 = inlined_call_operand.vmem [shape: bf16[128,128], index: 7, kind: output, shape index: {1}]
  %8 = xla_tuple %s6, %s7
  %s9 = sld [smem:[#allocation0]]
  $region42: #{densenet3_forward.10} parent=0
    _
  %s11 = ssub.s32 1, %s9
  %s12 = scalar_select 0, %s11, %s9
  // Predicated region
  $region2: #{densenet3_forward.10} parent=0 // pred_check
    _
  $region3: #{densenet3_forward.10} parent=0 // pred_check_branch
    %14 = sbr.rel (0) target = $region5
  $region4: #{densenet3_forward.10} parent=0 // pred_region
    _
  $region5: #{densenet3_forward.10} parent=0 // pred_fallthru
    _
  // Predicated region
  $region6: #{densenet3_forward.10} parent=0 // pred_check
    _
  $region7: #{densenet3_forward.10} parent=0 // pred_check_branch
    %16 = sbr.rel (0) target = $region9
  $region8: #{densenet3_forward.10} parent=0 // pred_region
    _
  $region9: #{densenet3_forward.10} parent=0 // pred_fallthru
    _
  // Predicated region
  $region10: #{densenet3_forward.10} parent=0 // pred_check
    _
  $region11: #{densenet3_forward.10} parent=0 // pred_check_branch
    %18 = sbr.rel (0) target = $region13
  $region12: #{densenet3_forward.10} parent=0 // pred_region
    _
  $region13: #{densenet3_forward.10} parent=0 // pred_fallthru
    _
  // Predicated region
  $region14: #{densenet3_forward.10} parent=0 // pred_check
    _
  $region15: #{densenet3_forward.10} parent=0 // pred_check_branch
    %20 = sbr.rel (0) target = $region17
  $region16: #{densenet3_forward.10} parent=0 // pred_region
    _
  $region17: #{densenet3_forward.10} parent=0 // pred_fallthru
    _
  // Predicated region
  $region18: #{densenet3_forward.10} parent=0 // pred_check
    _
  $region19: #{densenet3_forward.10} parent=0 // pred_check_branch
    %22 = sbr.rel (0) target = $region21
  $region20: #{densenet3_forward.10} parent=0 // pred_region
    _
  $region21: #{densenet3_forward.10} parent=0 // pred_fallthru
    _
  // Predicated region
  $region22: #{densenet3_forward.10} parent=0 // pred_check
    _
  $region23: #{densenet3_forward.10} parent=0 // pred_check_branch
    %24 = sbr.rel (0) target = $region25
  $region24: #{densenet3_forward.10} parent=0 // pred_region
    _
  $region25: #{densenet3_forward.10} parent=0 // pred_fallthru
    _
  %v26 = vld [vmem:[%s0] sm:$0xf]
  %v27 = vld [vmem:[%s0 + $0x4] sm:$0xf]
  %v28 = vld [vmem:[%s0 + $0x8] sm:$0xf]
  %v29 = vld [vmem:[%s0 + $0xc] sm:$0xf]
  %v30 = vld [vmem:[%s0 + $0x10] sm:$0xf]
  %v31 = vld [vmem:[%s0 + $0x14] sm:$0xf]
  %v32 = vld [vmem:[%s0 + $0x18] sm:$0xf]
  %v33 = vld [vmem:[%s0 + $0x1c] sm:$0xf]
  %v34 = vld [vmem:[%s0 + $0x20] sm:$0xf]
  %v35 = vld [vmem:[%s0 + $0x24] sm:$0xf]
  %v36 = vld [vmem:[%s0 + $0x28] sm:$0xf]
  %v37 = vld [vmem:[%s0 + $0x2c] sm:$0xf]
  %v38 = vld [vmem:[%s0 + $0x30] sm:$0xf]
  %v39 = vld [vmem:[%s0 + $0x34] sm:$0xf]
  %v40 = vld [vmem:[%s0 + $0x38] sm:$0xf]
  %v41 = vld [vmem:[%s0 + $0x3c] sm:$0xf]
  %v42 = vld [vmem:[%s1] sm:$0xf]
  %v43 = vld [vmem:[%s1 + $0x4] sm:$0xf]
  %v44 = vld [vmem:[%s1 + $0x8] sm:$0xf]
  %v45 = vld [vmem:[%s1 + $0xc] sm:$0xf]
  %v46 = vld [vmem:[%s1 + $0x10] sm:$0xf]
  %v47 = vld [vmem:[%s1 + $0x14] sm:$0xf]
  %v48 = vld [vmem:[%s1 + $0x18] sm:$0xf]
  %v49 = vld [vmem:[%s1 + $0x1c] sm:$0xf]
  %v50 = vld [vmem:[%s1 + $0x20] sm:$0xf]
  %v51 = vld [vmem:[%s1 + $0x24] sm:$0xf]
  %v52 = vld [vmem:[%s1 + $0x28] sm:$0xf]
  %v53 = vld [vmem:[%s1 + $0x2c] sm:$0xf]
  %v54 = vld [vmem:[%s1 + $0x30] sm:$0xf]
  %v55 = vld [vmem:[%s1 + $0x34] sm:$0xf]
  %v56 = vld [vmem:[%s1 + $0x38] sm:$0xf]
  %v57 = vld [vmem:[%s1 + $0x3c] sm:$0xf]
  %v74 = vunpack.c.l.b16 %v26
  %v75 = vunpack.c.l.b16 %v27
  %v76 = vunpack.c.l.b16 %v28
  %v77 = vunpack.c.l.b16 %v29
  %v78 = vunpack.c.l.b16 %v30
  %v79 = vunpack.c.l.b16 %v31
  %v80 = vunpack.c.l.b16 %v32
  %v81 = vunpack.c.l.b16 %v33
  %v82 = vunpack.c.l.b16 %v34
  %v83 = vunpack.c.l.b16 %v35
  %v84 = vunpack.c.l.b16 %v36
  %v85 = vunpack.c.l.b16 %v37
  %v86 = vunpack.c.l.b16 %v38
  %v87 = vunpack.c.l.b16 %v39
  %v88 = vunpack.c.l.b16 %v40
  %v89 = vunpack.c.l.b16 %v41
  %v90 = vpack.c.b16 %v75, %v74
  %v91 = vpack.c.b16 %v77, %v76
  %v92 = vpack.c.b16 %v79, %v78
  %v93 = vpack.c.b16 %v81, %v80
  %v94 = vpack.c.b16 %v83, %v82
  %v95 = vpack.c.b16 %v85, %v84
  %v96 = vpack.c.b16 %v87, %v86
  %v97 = vpack.c.b16 %v89, %v88
  %v122 = vunpack.c.l.b16 %v42
  %v123 = vunpack.c.l.b16 %v43
  %v124 = vunpack.c.l.b16 %v44
  %v125 = vunpack.c.l.b16 %v45
  %v126 = vunpack.c.l.b16 %v46
  %v127 = vunpack.c.l.b16 %v47
  %v128 = vunpack.c.l.b16 %v48
  %v129 = vunpack.c.l.b16 %v49
  %v130 = vunpack.c.l.b16 %v50
  %v131 = vunpack.c.l.b16 %v51
  %v132 = vunpack.c.l.b16 %v52
  %v133 = vunpack.c.l.b16 %v53
  %v134 = vunpack.c.l.b16 %v54
  %v135 = vunpack.c.l.b16 %v55
  %v136 = vunpack.c.l.b16 %v56
  %v137 = vunpack.c.l.b16 %v57
  %v138 = vpack.c.b16 %v123, %v122
  %v139 = vpack.c.b16 %v125, %v124
  %v140 = vpack.c.b16 %v127, %v126
  %v141 = vpack.c.b16 %v129, %v128
  %v142 = vpack.c.b16 %v131, %v130
  %v143 = vpack.c.b16 %v133, %v132
  %v144 = vpack.c.b16 %v135, %v134
  %v145 = vpack.c.b16 %v137, %v136
  %154 = vmatprep.subr.bf16.mxu0 0
  %155 = vmatpush1.bf16.xpose.msra.mxu0 %v145
  %156 = vmatprep.subr.bf16.mxu0 0
  %157 = vmatpush1.bf16.xpose.msra.mxu0 %v144
  %158 = vmatprep.subr.bf16.mxu0 0
  %159 = vmatpush1.bf16.xpose.msra.mxu0 %v143
  %160 = vmatprep.subr.bf16.mxu0 0
  %161 = vmatpush1.bf16.xpose.msra.mxu0 %v142
  %162 = vmatprep.subr.bf16.mxu0 0
  %163 = vmatpush1.bf16.xpose.msra.mxu0 %v141
  %164 = vmatprep.subr.bf16.mxu0 0
  %165 = vmatpush1.bf16.xpose.msra.mxu0 %v140
  %166 = vmatprep.subr.bf16.mxu0 0
  %167 = vmatpush1.bf16.xpose.msra.mxu0 %v139
  %168 = vmatprep.subr.bf16.mxu0 0
  %169 = vmatpush1.bf16.xpose.msra.mxu0 %v138
  %170 = vmatprep.subr.bf16.mxu0 0
  %171 = vmatpush2.bf16.xpose.msra.mxu0 0
  %172 = vmatprep.subr.bf16.mxu0 0
  %173 = vmatpush2.bf16.xpose.msra.mxu0 0
  %174 = vmatprep.subr.bf16.mxu0 0
  %175 = vmatpush2.bf16.xpose.msra.mxu0 0
  %176 = vmatprep.subr.bf16.mxu0 0
  %177 = vmatpush2.bf16.xpose.msra.mxu0 0
  %178 = vmatprep.subr.bf16.mxu0 0
  %179 = vmatpush2.bf16.xpose.msra.mxu0 0
  %180 = vmatprep.subr.bf16.mxu0 0
  %181 = vmatpush2.bf16.xpose.msra.mxu0 0
  %182 = vmatprep.subr.bf16.mxu0 0
  %183 = vmatpush2.bf16.xpose.msra.mxu0 0
  %184 = vmatprep.subr.bf16.mxu0 0
  %185 = vmatpush2.bf16.xpose.msra.mxu0 0
  %186 = vmatprep.mubr.bf16.mxu0 0
  %187 = vmatmul.mubr.bf16.gmra.mxu0 %v90
  %v188 = vpop.f32.mrf.mxu0
  %v189 = vadd.f32 0.0, %v188
  %v190 = vpop.f32.mrf.mxu0
  %v191 = vpop.f32.mrf.mxu0
  %v192 = vadd.f32 0.0, %v191
  %v193 = vpop.f32.mrf.mxu0
  %194 = vmatprep.mubr.bf16.mxu0 0
  %195 = vmatmul.mubr.bf16.gmra.mxu0 %v91
  %v196 = vpop.f32.mrf.mxu0
  %v197 = vadd.f32 0.0, %v196
  %v198 = vpop.f32.mrf.mxu0
  %v199 = vpop.f32.mrf.mxu0
  %v200 = vadd.f32 0.0, %v199
  %v201 = vpop.f32.mrf.mxu0
  %202 = vmatprep.mubr.bf16.mxu0 0
  %203 = vmatmul.mubr.bf16.gmra.mxu0 %v92
  %v204 = vpop.f32.mrf.mxu0
  %v205 = vadd.f32 0.0, %v204
  %v206 = vpop.f32.mrf.mxu0
  %v207 = vpop.f32.mrf.mxu0
  %v208 = vadd.f32 0.0, %v207
  %v209 = vpop.f32.mrf.mxu0
  %210 = vmatprep.mubr.bf16.mxu0 0
  %211 = vmatmul.mubr.bf16.gmra.mxu0 %v93
  %v212 = vpop.f32.mrf.mxu0
  %v213 = vadd.f32 0.0, %v212
  %v214 = vpop.f32.mrf.mxu0
  %v215 = vpop.f32.mrf.mxu0
  %v216 = vadd.f32 0.0, %v215
  %v217 = vpop.f32.mrf.mxu0
  %218 = vmatprep.mubr.bf16.mxu0 0
  %219 = vmatmul.mubr.bf16.gmra.mxu0 %v94
  %v220 = vpop.f32.mrf.mxu0
  %v221 = vadd.f32 0.0, %v220
  %v222 = vpop.f32.mrf.mxu0
  %v223 = vpop.f32.mrf.mxu0
  %v224 = vadd.f32 0.0, %v223
  %v225 = vpop.f32.mrf.mxu0
  %226 = vmatprep.mubr.bf16.mxu0 0
  %227 = vmatmul.mubr.bf16.gmra.mxu0 %v95
  %v228 = vpop.f32.mrf.mxu0
  %v229 = vadd.f32 0.0, %v228
  %v230 = vpop.f32.mrf.mxu0
  %v231 = vpop.f32.mrf.mxu0
  %v232 = vadd.f32 0.0, %v231
  %v233 = vpop.f32.mrf.mxu0
  %234 = vmatprep.mubr.bf16.mxu0 0
  %235 = vmatmul.mubr.bf16.gmra.mxu0 %v96
  %v236 = vpop.f32.mrf.mxu0
  %v237 = vadd.f32 0.0, %v236
  %v238 = vpop.f32.mrf.mxu0
  %v239 = vpop.f32.mrf.mxu0
  %v240 = vadd.f32 0.0, %v239
  %v241 = vpop.f32.mrf.mxu0
  %242 = vmatprep.mubr.bf16.mxu0 0
  %243 = vmatmul.mubr.bf16.gmra.mxu0 %v97
  %v244 = vpop.f32.mrf.mxu0
  %v245 = vadd.f32 0.0, %v244
  %v246 = vpop.f32.mrf.mxu0
  %v247 = vpop.f32.mrf.mxu0
  %v248 = vadd.f32 0.0, %v247
  %v249 = vpop.f32.mrf.mxu0
  %250 = vdwg.mxu0
  %v251 = vxor.u32 %v189, 2147483648
  %v252 = vxor.u32 %v192, 2147483648
  %v253 = vxor.u32 %v197, 2147483648
  %v254 = vxor.u32 %v200, 2147483648
  %v255 = vxor.u32 %v205, 2147483648
  %v256 = vxor.u32 %v208, 2147483648
  %v257 = vxor.u32 %v213, 2147483648
  %v258 = vxor.u32 %v216, 2147483648
  %v259 = vxor.u32 %v221, 2147483648
  %v260 = vxor.u32 %v224, 2147483648
  %v261 = vxor.u32 %v229, 2147483648
  %v262 = vxor.u32 %v232, 2147483648
  %v263 = vxor.u32 %v237, 2147483648
  %v264 = vxor.u32 %v240, 2147483648
  %v265 = vxor.u32 %v245, 2147483648
  %v266 = vxor.u32 %v248, 2147483648
  %v267 = vmul.f32 %v251, 1.442695
  %v268 = vpow.pop %v267
  %v269 = vmul.f32 %v252, 1.442695
  %v270 = vpow.pop %v269
  %v271 = vmul.f32 %v253, 1.442695
  %v272 = vpow.pop %v271
  %v273 = vmul.f32 %v254, 1.442695
  %v274 = vpow.pop %v273
  %v275 = vmul.f32 %v255, 1.442695
  %v276 = vpow.pop %v275
  %v277 = vmul.f32 %v256, 1.442695
  %v278 = vpow.pop %v277
  %v279 = vmul.f32 %v257, 1.442695
  %v280 = vpow.pop %v279
  %v281 = vmul.f32 %v258, 1.442695
  %v282 = vpow.pop %v281
  %v283 = vmul.f32 %v259, 1.442695
  %v284 = vpow.pop %v283
  %v285 = vmul.f32 %v260, 1.442695
  %v286 = vpow.pop %v285
  %v287 = vmul.f32 %v261, 1.442695
  %v288 = vpow.pop %v287
  %v289 = vmul.f32 %v262, 1.442695
  %v290 = vpow.pop %v289
  %v291 = vmul.f32 %v263, 1.442695
  %v292 = vpow.pop %v291
  %v293 = vmul.f32 %v264, 1.442695
  %v294 = vpow.pop %v293
  %v295 = vmul.f32 %v265, 1.442695
  %v296 = vpow.pop %v295
  %v297 = vmul.f32 %v266, 1.442695
  %v298 = vpow.pop %v297
  %v299 = vadd.f32 %v268, 1.0
  %v300 = vadd.f32 %v270, 1.0
  %v301 = vadd.f32 %v272, 1.0
  %v302 = vadd.f32 %v274, 1.0
  %v303 = vadd.f32 %v276, 1.0
  %v304 = vadd.f32 %v278, 1.0
  %v305 = vadd.f32 %v280, 1.0
  %v306 = vadd.f32 %v282, 1.0
  %v307 = vadd.f32 %v284, 1.0
  %v308 = vadd.f32 %v286, 1.0
  %v309 = vadd.f32 %v288, 1.0
  %v310 = vadd.f32 %v290, 1.0
  %v311 = vadd.f32 %v292, 1.0
  %v312 = vadd.f32 %v294, 1.0
  %v313 = vadd.f32 %v296, 1.0
  %v314 = vadd.f32 %v298, 1.0
  %v315 = vrcp.pop %v299
  %v316 = vmul.f32 1.0, %v315
  %v317 = vrcp.pop %v300
  %v318 = vmul.f32 1.0, %v317
  %v319 = vrcp.pop %v301
  %v320 = vmul.f32 1.0, %v319
  %v321 = vrcp.pop %v302
  %v322 = vmul.f32 1.0, %v321
  %v323 = vrcp.pop %v303
  %v324 = vmul.f32 1.0, %v323
  %v325 = vrcp.pop %v304
  %v326 = vmul.f32 1.0, %v325
  %v327 = vrcp.pop %v305
  %v328 = vmul.f32 1.0, %v327
  %v329 = vrcp.pop %v306
  %v330 = vmul.f32 1.0, %v329
  %v331 = vrcp.pop %v307
  %v332 = vmul.f32 1.0, %v331
  %v333 = vrcp.pop %v308
  %v334 = vmul.f32 1.0, %v333
  %v335 = vrcp.pop %v309
  %v336 = vmul.f32 1.0, %v335
  %v337 = vrcp.pop %v310
  %v338 = vmul.f32 1.0, %v337
  %v339 = vrcp.pop %v311
  %v340 = vmul.f32 1.0, %v339
  %v341 = vrcp.pop %v312
  %v342 = vmul.f32 1.0, %v341
  %v343 = vrcp.pop %v313
  %v344 = vmul.f32 1.0, %v343
  %v345 = vrcp.pop %v314
  %v346 = vmul.f32 1.0, %v345
  %v347 = vpack.c.bf16 %v318, %v316
  %v348 = vpack.c.bf16 %v322, %v320
  %v349 = vpack.c.bf16 %v326, %v324
  %v350 = vpack.c.bf16 %v330, %v328
  %v351 = vpack.c.bf16 %v334, %v332
  %v352 = vpack.c.bf16 %v338, %v336
  %v353 = vpack.c.bf16 %v342, %v340
  %v354 = vpack.c.bf16 %v346, %v344
  %v363 = vunpack.c.l.b16 %v347
  %v364 = vunpack.c.h.b16 %v347
  %v365 = vunpack.c.l.b16 %v348
  %v366 = vunpack.c.h.b16 %v348
  %v367 = vunpack.c.l.b16 %v349
  %v368 = vunpack.c.h.b16 %v349
  %v369 = vunpack.c.l.b16 %v350
  %v370 = vunpack.c.h.b16 %v350
  %v371 = vunpack.c.l.b16 %v351
  %v372 = vunpack.c.h.b16 %v351
  %v373 = vunpack.c.l.b16 %v352
  %v374 = vunpack.c.h.b16 %v352
  %v375 = vunpack.c.l.b16 %v353
  %v376 = vunpack.c.h.b16 %v353
  %v377 = vunpack.c.l.b16 %v354
  %v378 = vunpack.c.h.b16 %v354
  %v379 = vpack.c.b16 %v363, %v363
  %v380 = vpack.c.b16 %v364, %v364
  %v381 = vpack.c.b16 %v365, %v365
  %v382 = vpack.c.b16 %v366, %v366
  %v383 = vpack.c.b16 %v367, %v367
  %v384 = vpack.c.b16 %v368, %v368
  %v385 = vpack.c.b16 %v369, %v369
  %v386 = vpack.c.b16 %v370, %v370
  %v387 = vpack.c.b16 %v371, %v371
  %v388 = vpack.c.b16 %v372, %v372
  %v389 = vpack.c.b16 %v373, %v373
  %v390 = vpack.c.b16 %v374, %v374
  %v391 = vpack.c.b16 %v375, %v375
  %v392 = vpack.c.b16 %v376, %v376
  %v393 = vpack.c.b16 %v377, %v377
  %v394 = vpack.c.b16 %v378, %v378
  %411 = vst [vmem:[%s6] sm:$0xf] %v379
  %412 = vst [vmem:[%s6 + $0x4] sm:$0xf] %v380
  %413 = vst [vmem:[%s6 + $0x8] sm:$0xf] %v381
  %414 = vst [vmem:[%s6 + $0xc] sm:$0xf] %v382
  %415 = vst [vmem:[%s6 + $0x10] sm:$0xf] %v383
  %416 = vst [vmem:[%s6 + $0x14] sm:$0xf] %v384
  %417 = vst [vmem:[%s6 + $0x18] sm:$0xf] %v385
  %418 = vst [vmem:[%s6 + $0x1c] sm:$0xf] %v386
  %419 = vst [vmem:[%s6 + $0x20] sm:$0xf] %v387
  %420 = vst [vmem:[%s6 + $0x24] sm:$0xf] %v388
  %421 = vst [vmem:[%s6 + $0x28] sm:$0xf] %v389
  %422 = vst [vmem:[%s6 + $0x2c] sm:$0xf] %v390
  %423 = vst [vmem:[%s6 + $0x30] sm:$0xf] %v391
  %424 = vst [vmem:[%s6 + $0x34] sm:$0xf] %v392
  %425 = vst [vmem:[%s6 + $0x38] sm:$0xf] %v393
  %426 = vst [vmem:[%s6 + $0x3c] sm:$0xf] %v394
  %v427 = vld [vmem:[%s2] sm:$0xf]
  %v428 = vld [vmem:[%s2 + $0x4] sm:$0xf]
  %v429 = vld [vmem:[%s2 + $0x8] sm:$0xf]
  %v430 = vld [vmem:[%s2 + $0xc] sm:$0xf]
  %v431 = vld [vmem:[%s2 + $0x10] sm:$0xf]
  %v432 = vld [vmem:[%s2 + $0x14] sm:$0xf]
  %v433 = vld [vmem:[%s2 + $0x18] sm:$0xf]
  %v434 = vld [vmem:[%s2 + $0x1c] sm:$0xf]
  %v435 = vld [vmem:[%s2 + $0x20] sm:$0xf]
  %v436 = vld [vmem:[%s2 + $0x24] sm:$0xf]
  %v437 = vld [vmem:[%s2 + $0x28] sm:$0xf]
  %v438 = vld [vmem:[%s2 + $0x2c] sm:$0xf]
  %v439 = vld [vmem:[%s2 + $0x30] sm:$0xf]
  %v440 = vld [vmem:[%s2 + $0x34] sm:$0xf]
  %v441 = vld [vmem:[%s2 + $0x38] sm:$0xf]
  %v442 = vld [vmem:[%s2 + $0x3c] sm:$0xf]
  %v443 = vld [vmem:[%s3] sm:$0xf]
  %v444 = vld [vmem:[%s3 + $0x4] sm:$0xf]
  %v445 = vld [vmem:[%s3 + $0x8] sm:$0xf]
  %v446 = vld [vmem:[%s3 + $0xc] sm:$0xf]
  %v447 = vld [vmem:[%s3 + $0x10] sm:$0xf]
  %v448 = vld [vmem:[%s3 + $0x14] sm:$0xf]
  %v449 = vld [vmem:[%s3 + $0x18] sm:$0xf]
  %v450 = vld [vmem:[%s3 + $0x1c] sm:$0xf]
  %v451 = vld [vmem:[%s3 + $0x20] sm:$0xf]
  %v452 = vld [vmem:[%s3 + $0x24] sm:$0xf]
  %v453 = vld [vmem:[%s3 + $0x28] sm:$0xf]
  %v454 = vld [vmem:[%s3 + $0x2c] sm:$0xf]
  %v455 = vld [vmem:[%s3 + $0x30] sm:$0xf]
  %v456 = vld [vmem:[%s3 + $0x34] sm:$0xf]
  %v457 = vld [vmem:[%s3 + $0x38] sm:$0xf]
  %v458 = vld [vmem:[%s3 + $0x3c] sm:$0xf]
  %v459 = vld [vmem:[%s4] sm:$0x1]
  %v461 = vlaneseq
  %v462 = vshrl.u32 %v461, 7
  %v463 = vsub.s32 0, %v462
  %v464 = vrot.slane %v459, %v463
  %v482 = vunpack.c.l.b16 %v427
  %v483 = vunpack.c.l.b16 %v428
  %v484 = vunpack.c.l.b16 %v429
  %v485 = vunpack.c.l.b16 %v430
  %v486 = vunpack.c.l.b16 %v431
  %v487 = vunpack.c.l.b16 %v432
  %v488 = vunpack.c.l.b16 %v433
  %v489 = vunpack.c.l.b16 %v434
  %v490 = vunpack.c.l.b16 %v435
  %v491 = vunpack.c.l.b16 %v436
  %v492 = vunpack.c.l.b16 %v437
  %v493 = vunpack.c.l.b16 %v438
  %v494 = vunpack.c.l.b16 %v439
  %v495 = vunpack.c.l.b16 %v440
  %v496 = vunpack.c.l.b16 %v441
  %v497 = vunpack.c.l.b16 %v442
  %v498 = vpack.c.b16 %v483, %v482
  %v499 = vpack.c.b16 %v485, %v484
  %v500 = vpack.c.b16 %v487, %v486
  %v501 = vpack.c.b16 %v489, %v488
  %v502 = vpack.c.b16 %v491, %v490
  %v503 = vpack.c.b16 %v493, %v492
  %v504 = vpack.c.b16 %v495, %v494
  %v505 = vpack.c.b16 %v497, %v496
  %v530 = vunpack.c.l.b16 %v443
  %v531 = vunpack.c.l.b16 %v444
  %v532 = vunpack.c.l.b16 %v445
  %v533 = vunpack.c.l.b16 %v446
  %v534 = vunpack.c.l.b16 %v447
  %v535 = vunpack.c.l.b16 %v448
  %v536 = vunpack.c.l.b16 %v449
  %v537 = vunpack.c.l.b16 %v450
  %v538 = vunpack.c.l.b16 %v451
  %v539 = vunpack.c.l.b16 %v452
  %v540 = vunpack.c.l.b16 %v453
  %v541 = vunpack.c.l.b16 %v454
  %v542 = vunpack.c.l.b16 %v455
  %v543 = vunpack.c.l.b16 %v456
  %v544 = vunpack.c.l.b16 %v457
  %v545 = vunpack.c.l.b16 %v458
  %v546 = vpack.c.b16 %v531, %v530
  %v547 = vpack.c.b16 %v533, %v532
  %v548 = vpack.c.b16 %v535, %v534
  %v549 = vpack.c.b16 %v537, %v536
  %v550 = vpack.c.b16 %v539, %v538
  %v551 = vpack.c.b16 %v541, %v540
  %v552 = vpack.c.b16 %v543, %v542
  %v553 = vpack.c.b16 %v545, %v544
  %562 = vmatprep.subr.bf16.mxu0 0
  %563 = vmatpush1.bf16.msra.mxu0 %v553
  %564 = vmatprep.subr.bf16.mxu0 0
  %565 = vmatpush1.bf16.msra.mxu0 %v552
  %566 = vmatprep.subr.bf16.mxu0 0
  %567 = vmatpush1.bf16.msra.mxu0 %v551
  %568 = vmatprep.subr.bf16.mxu0 0
  %569 = vmatpush1.bf16.msra.mxu0 %v550
  %570 = vmatprep.subr.bf16.mxu0 0
  %571 = vmatpush1.bf16.msra.mxu0 %v549
  %572 = vmatprep.subr.bf16.mxu0 0
  %573 = vmatpush1.bf16.msra.mxu0 %v548
  %574 = vmatprep.subr.bf16.mxu0 0
  %575 = vmatpush1.bf16.msra.mxu0 %v547
  %576 = vmatprep.subr.bf16.mxu0 0
  %577 = vmatpush1.bf16.msra.mxu0 %v546
  %578 = vmatprep.subr.bf16.mxu0 0
  %579 = vmatpush2.bf16.msra.mxu0 0
  %580 = vmatprep.subr.bf16.mxu0 0
  %581 = vmatpush2.bf16.msra.mxu0 0
  %582 = vmatprep.subr.bf16.mxu0 0
  %583 = vmatpush2.bf16.msra.mxu0 0
  %584 = vmatprep.subr.bf16.mxu0 0
  %585 = vmatpush2.bf16.msra.mxu0 0
  %586 = vmatprep.subr.bf16.mxu0 0
  %587 = vmatpush2.bf16.msra.mxu0 0
  %588 = vmatprep.subr.bf16.mxu0 0
  %589 = vmatpush2.bf16.msra.mxu0 0
  %590 = vmatprep.subr.bf16.mxu0 0
  %591 = vmatpush2.bf16.msra.mxu0 0
  %592 = vmatprep.subr.bf16.mxu0 0
  %593 = vmatpush2.bf16.msra.mxu0 0
  %594 = vmatprep.mubr.bf16.mxu0 0
  %595 = vmatmul.mubr.bf16.gmra.mxu0 %v498
  %v596 = vpop.f32.mrf.mxu0
  %v597 = vadd.f32 %v464, %v596
  %v598 = vpop.f32.mrf.mxu0
  %v599 = vpop.f32.mrf.mxu0
  %v600 = vadd.f32 %v464, %v599
  %v601 = vpop.f32.mrf.mxu0
  %602 = vmatprep.mubr.bf16.mxu0 0
  %603 = vmatmul.mubr.bf16.gmra.mxu0 %v499
  %v604 = vpop.f32.mrf.mxu0
  %v605 = vadd.f32 %v464, %v604
  %v606 = vpop.f32.mrf.mxu0
  %v607 = vpop.f32.mrf.mxu0
  %v608 = vadd.f32 %v464, %v607
  %v609 = vpop.f32.mrf.mxu0
  %610 = vmatprep.mubr.bf16.mxu0 0
  %611 = vmatmul.mubr.bf16.gmra.mxu0 %v500
  %v612 = vpop.f32.mrf.mxu0
  %v613 = vadd.f32 %v464, %v612
  %v614 = vpop.f32.mrf.mxu0
  %v615 = vpop.f32.mrf.mxu0
  %v616 = vadd.f32 %v464, %v615
  %v617 = vpop.f32.mrf.mxu0
  %618 = vmatprep.mubr.bf16.mxu0 0
  %619 = vmatmul.mubr.bf16.gmra.mxu0 %v501
  %v620 = vpop.f32.mrf.mxu0
  %v621 = vadd.f32 %v464, %v620
  %v622 = vpop.f32.mrf.mxu0
  %v623 = vpop.f32.mrf.mxu0
  %v624 = vadd.f32 %v464, %v623
  %v625 = vpop.f32.mrf.mxu0
  %626 = vmatprep.mubr.bf16.mxu0 0
  %627 = vmatmul.mubr.bf16.gmra.mxu0 %v502
  %v628 = vpop.f32.mrf.mxu0
  %v629 = vadd.f32 %v464, %v628
  %v630 = vpop.f32.mrf.mxu0
  %v631 = vpop.f32.mrf.mxu0
  %v632 = vadd.f32 %v464, %v631
  %v633 = vpop.f32.mrf.mxu0
  %634 = vmatprep.mubr.bf16.mxu0 0
  %635 = vmatmul.mubr.bf16.gmra.mxu0 %v503
  %v636 = vpop.f32.mrf.mxu0
  %v637 = vadd.f32 %v464, %v636
  %v638 = vpop.f32.mrf.mxu0
  %v639 = vpop.f32.mrf.mxu0
  %v640 = vadd.f32 %v464, %v639
  %v641 = vpop.f32.mrf.mxu0
  %642 = vmatprep.mubr.bf16.mxu0 0
  %643 = vmatmul.mubr.bf16.gmra.mxu0 %v504
  %v644 = vpop.f32.mrf.mxu0
  %v645 = vadd.f32 %v464, %v644
  %v646 = vpop.f32.mrf.mxu0
  %v647 = vpop.f32.mrf.mxu0
  %v648 = vadd.f32 %v464, %v647
  %v649 = vpop.f32.mrf.mxu0
  %650 = vmatprep.mubr.bf16.mxu0 0
  %651 = vmatmul.mubr.bf16.gmra.mxu0 %v505
  %v652 = vpop.f32.mrf.mxu0
  %v653 = vadd.f32 %v464, %v652
  %v654 = vpop.f32.mrf.mxu0
  %v655 = vpop.f32.mrf.mxu0
  %v656 = vadd.f32 %v464, %v655
  %v657 = vpop.f32.mrf.mxu0
  %658 = vdwg.mxu0
  %v659 = vmax.f32 %v597, 0.0
  %v660 = vmax.f32 %v600, 0.0
  %v661 = vmax.f32 %v605, 0.0
  %v662 = vmax.f32 %v608, 0.0
  %v663 = vmax.f32 %v613, 0.0
  %v664 = vmax.f32 %v616, 0.0
  %v665 = vmax.f32 %v621, 0.0
  %v666 = vmax.f32 %v624, 0.0
  %v667 = vmax.f32 %v629, 0.0
  %v668 = vmax.f32 %v632, 0.0
  %v669 = vmax.f32 %v637, 0.0
  %v670 = vmax.f32 %v640, 0.0
  %v671 = vmax.f32 %v645, 0.0
  %v672 = vmax.f32 %v648, 0.0
  %v673 = vmax.f32 %v653, 0.0
  %v674 = vmax.f32 %v656, 0.0
  %v675 = vld [vmem:[%s5] sm:$0xf]
  %v676 = vld [vmem:[%s5 + $0x4] sm:$0xf]
  %v677 = vld [vmem:[%s5 + $0x8] sm:$0xf]
  %v678 = vld [vmem:[%s5 + $0xc] sm:$0xf]
  %v679 = vld [vmem:[%s5 + $0x10] sm:$0xf]
  %v680 = vld [vmem:[%s5 + $0x14] sm:$0xf]
  %v681 = vld [vmem:[%s5 + $0x18] sm:$0xf]
  %v682 = vld [vmem:[%s5 + $0x1c] sm:$0xf]
  %v683 = vld [vmem:[%s5 + $0x20] sm:$0xf]
  %v684 = vld [vmem:[%s5 + $0x24] sm:$0xf]
  %v685 = vld [vmem:[%s5 + $0x28] sm:$0xf]
  %v686 = vld [vmem:[%s5 + $0x2c] sm:$0xf]
  %v687 = vld [vmem:[%s5 + $0x30] sm:$0xf]
  %v688 = vld [vmem:[%s5 + $0x34] sm:$0xf]
  %v689 = vld [vmem:[%s5 + $0x38] sm:$0xf]
  %v690 = vld [vmem:[%s5 + $0x3c] sm:$0xf]
  %v691 = vpack.c.bf16 %v660, %v659
  %v692 = vpack.c.bf16 %v662, %v661
  %v693 = vpack.c.bf16 %v664, %v663
  %v694 = vpack.c.bf16 %v666, %v665
  %v695 = vpack.c.bf16 %v668, %v667
  %v696 = vpack.c.bf16 %v670, %v669
  %v697 = vpack.c.bf16 %v672, %v671
  %v698 = vpack.c.bf16 %v674, %v673
  %v715 = vunpack.c.l.b16 %v675
  %v716 = vunpack.c.l.b16 %v676
  %v717 = vunpack.c.l.b16 %v677
  %v718 = vunpack.c.l.b16 %v678
  %v719 = vunpack.c.l.b16 %v679
  %v720 = vunpack.c.l.b16 %v680
  %v721 = vunpack.c.l.b16 %v681
  %v722 = vunpack.c.l.b16 %v682
  %v723 = vunpack.c.l.b16 %v683
  %v724 = vunpack.c.l.b16 %v684
  %v725 = vunpack.c.l.b16 %v685
  %v726 = vunpack.c.l.b16 %v686
  %v727 = vunpack.c.l.b16 %v687
  %v728 = vunpack.c.l.b16 %v688
  %v729 = vunpack.c.l.b16 %v689
  %v730 = vunpack.c.l.b16 %v690
  %v731 = vpack.c.b16 %v716, %v715
  %v732 = vpack.c.b16 %v718, %v717
  %v733 = vpack.c.b16 %v720, %v719
  %v734 = vpack.c.b16 %v722, %v721
  %v735 = vpack.c.b16 %v724, %v723
  %v736 = vpack.c.b16 %v726, %v725
  %v737 = vpack.c.b16 %v728, %v727
  %v738 = vpack.c.b16 %v730, %v729
  %747 = vmatprep.subr.bf16.mxu0 0
  %748 = vmatpush1.bf16.msra.mxu0 %v738
  %749 = vmatprep.subr.bf16.mxu0 0
  %750 = vmatpush1.bf16.msra.mxu0 %v737
  %751 = vmatprep.subr.bf16.mxu0 0
  %752 = vmatpush1.bf16.msra.mxu0 %v736
  %753 = vmatprep.subr.bf16.mxu0 0
  %754 = vmatpush1.bf16.msra.mxu0 %v735
  %755 = vmatprep.subr.bf16.mxu0 0
  %756 = vmatpush1.bf16.msra.mxu0 %v734
  %757 = vmatprep.subr.bf16.mxu0 0
  %758 = vmatpush1.bf16.msra.mxu0 %v733
  %759 = vmatprep.subr.bf16.mxu0 0
  %760 = vmatpush1.bf16.msra.mxu0 %v732
  %761 = vmatprep.subr.bf16.mxu0 0
  %762 = vmatpush1.bf16.msra.mxu0 %v731
  %763 = vmatprep.subr.bf16.mxu0 0
  %764 = vmatpush2.bf16.msra.mxu0 0
  %765 = vmatprep.subr.bf16.mxu0 0
  %766 = vmatpush2.bf16.msra.mxu0 0
  %767 = vmatprep.subr.bf16.mxu0 0
  %768 = vmatpush2.bf16.msra.mxu0 0
  %769 = vmatprep.subr.bf16.mxu0 0
  %770 = vmatpush2.bf16.msra.mxu0 0
  %771 = vmatprep.subr.bf16.mxu0 0
  %772 = vmatpush2.bf16.msra.mxu0 0
  %773 = vmatprep.subr.bf16.mxu0 0
  %774 = vmatpush2.bf16.msra.mxu0 0
  %775 = vmatprep.subr.bf16.mxu0 0
  %776 = vmatpush2.bf16.msra.mxu0 0
  %777 = vmatprep.subr.bf16.mxu0 0
  %778 = vmatpush2.bf16.msra.mxu0 0
  %779 = vmatprep.mubr.bf16.mxu0 0
  %780 = vmatmul.mubr.bf16.gmra.mxu0 %v691
  %v781 = vpop.f32.mrf.mxu0
  %v782 = vadd.f32 0.0, %v781
  %v783 = vpop.f32.mrf.mxu0
  %v784 = vpop.f32.mrf.mxu0
  %v785 = vadd.f32 0.0, %v784
  %v786 = vpop.f32.mrf.mxu0
  %787 = vmatprep.mubr.bf16.mxu0 0
  %788 = vmatmul.mubr.bf16.gmra.mxu0 %v692
  %v789 = vpop.f32.mrf.mxu0
  %v790 = vadd.f32 0.0, %v789
  %v791 = vpop.f32.mrf.mxu0
  %v792 = vpop.f32.mrf.mxu0
  %v793 = vadd.f32 0.0, %v792
  %v794 = vpop.f32.mrf.mxu0
  %795 = vmatprep.mubr.bf16.mxu0 0
  %796 = vmatmul.mubr.bf16.gmra.mxu0 %v693
  %v797 = vpop.f32.mrf.mxu0
  %v798 = vadd.f32 0.0, %v797
  %v799 = vpop.f32.mrf.mxu0
  %v800 = vpop.f32.mrf.mxu0
  %v801 = vadd.f32 0.0, %v800
  %v802 = vpop.f32.mrf.mxu0
  %803 = vmatprep.mubr.bf16.mxu0 0
  %804 = vmatmul.mubr.bf16.gmra.mxu0 %v694
  %v805 = vpop.f32.mrf.mxu0
  %v806 = vadd.f32 0.0, %v805
  %v807 = vpop.f32.mrf.mxu0
  %v808 = vpop.f32.mrf.mxu0
  %v809 = vadd.f32 0.0, %v808
  %v810 = vpop.f32.mrf.mxu0
  %811 = vmatprep.mubr.bf16.mxu0 0
  %812 = vmatmul.mubr.bf16.gmra.mxu0 %v695
  %v813 = vpop.f32.mrf.mxu0
  %v814 = vadd.f32 0.0, %v813
  %v815 = vpop.f32.mrf.mxu0
  %v816 = vpop.f32.mrf.mxu0
  %v817 = vadd.f32 0.0, %v816
  %v818 = vpop.f32.mrf.mxu0
  %819 = vmatprep.mubr.bf16.mxu0 0
  %820 = vmatmul.mubr.bf16.gmra.mxu0 %v696
  %v821 = vpop.f32.mrf.mxu0
  %v822 = vadd.f32 0.0, %v821
  %v823 = vpop.f32.mrf.mxu0
  %v824 = vpop.f32.mrf.mxu0
  %v825 = vadd.f32 0.0, %v824
  %v826 = vpop.f32.mrf.mxu0
  %827 = vmatprep.mubr.bf16.mxu0 0
  %828 = vmatmul.mubr.bf16.gmra.mxu0 %v697
  %v829 = vpop.f32.mrf.mxu0
  %v830 = vadd.f32 0.0, %v829
  %v831 = vpop.f32.mrf.mxu0
  %v832 = vpop.f32.mrf.mxu0
  %v833 = vadd.f32 0.0, %v832
  %v834 = vpop.f32.mrf.mxu0
  %835 = vmatprep.mubr.bf16.mxu0 0
  %836 = vmatmul.mubr.bf16.gmra.mxu0 %v698
  %v837 = vpop.f32.mrf.mxu0
  %v838 = vadd.f32 0.0, %v837
  %v839 = vpop.f32.mrf.mxu0
  %v840 = vpop.f32.mrf.mxu0
  %v841 = vadd.f32 0.0, %v840
  %v842 = vpop.f32.mrf.mxu0
  %843 = vdwg.mxu0
  %v844 = vpack.c.bf16 %v785, %v782
  %v845 = vpack.c.bf16 %v793, %v790
  %v846 = vpack.c.bf16 %v801, %v798
  %v847 = vpack.c.bf16 %v809, %v806
  %v848 = vpack.c.bf16 %v817, %v814
  %v849 = vpack.c.bf16 %v825, %v822
  %v850 = vpack.c.bf16 %v833, %v830
  %v851 = vpack.c.bf16 %v841, %v838
  %v860 = vunpack.c.l.b16 %v844
  %v861 = vunpack.c.h.b16 %v844
  %v862 = vunpack.c.l.b16 %v845
  %v863 = vunpack.c.h.b16 %v845
  %v864 = vunpack.c.l.b16 %v846
  %v865 = vunpack.c.h.b16 %v846
  %v866 = vunpack.c.l.b16 %v847
  %v867 = vunpack.c.h.b16 %v847
  %v868 = vunpack.c.l.b16 %v848
  %v869 = vunpack.c.h.b16 %v848
  %v870 = vunpack.c.l.b16 %v849
  %v871 = vunpack.c.h.b16 %v849
  %v872 = vunpack.c.l.b16 %v850
  %v873 = vunpack.c.h.b16 %v850
  %v874 = vunpack.c.l.b16 %v851
  %v875 = vunpack.c.h.b16 %v851
  %v876 = vpack.c.b16 %v860, %v860
  %v877 = vpack.c.b16 %v861, %v861
  %v878 = vpack.c.b16 %v862, %v862
  %v879 = vpack.c.b16 %v863, %v863
  %v880 = vpack.c.b16 %v864, %v864
  %v881 = vpack.c.b16 %v865, %v865
  %v882 = vpack.c.b16 %v866, %v866
  %v883 = vpack.c.b16 %v867, %v867
  %v884 = vpack.c.b16 %v868, %v868
  %v885 = vpack.c.b16 %v869, %v869
  %v886 = vpack.c.b16 %v870, %v870
  %v887 = vpack.c.b16 %v871, %v871
  %v888 = vpack.c.b16 %v872, %v872
  %v889 = vpack.c.b16 %v873, %v873
  %v890 = vpack.c.b16 %v874, %v874
  %v891 = vpack.c.b16 %v875, %v875
  %908 = vst [vmem:[%s7] sm:$0xf] %v876
  %909 = vst [vmem:[%s7 + $0x4] sm:$0xf] %v877
  %910 = vst [vmem:[%s7 + $0x8] sm:$0xf] %v878
  %911 = vst [vmem:[%s7 + $0xc] sm:$0xf] %v879
  %912 = vst [vmem:[%s7 + $0x10] sm:$0xf] %v880
  %913 = vst [vmem:[%s7 + $0x14] sm:$0xf] %v881
  %914 = vst [vmem:[%s7 + $0x18] sm:$0xf] %v882
  %915 = vst [vmem:[%s7 + $0x1c] sm:$0xf] %v883
  %916 = vst [vmem:[%s7 + $0x20] sm:$0xf] %v884
  %917 = vst [vmem:[%s7 + $0x24] sm:$0xf] %v885
  %918 = vst [vmem:[%s7 + $0x28] sm:$0xf] %v886
  %919 = vst [vmem:[%s7 + $0x2c] sm:$0xf] %v887
  %920 = vst [vmem:[%s7 + $0x30] sm:$0xf] %v888
  %921 = vst [vmem:[%s7 + $0x34] sm:$0xf] %v889
  %922 = vst [vmem:[%s7 + $0x38] sm:$0xf] %v890
  %923 = vst [vmem:[%s7 + $0x3c] sm:$0xf] %v891
  // Predicated region
  $region26: #{densenet3_forward.10} parent=0 // pred_check
    _
  $region27: #{densenet3_forward.10} parent=0 // pred_check_branch
    %925 = sbr.rel (0) target = $region29
  $region28: #{densenet3_forward.10} parent=0 // pred_region
    _
  $region29: #{densenet3_forward.10} parent=0 // pred_fallthru
    _
  // Predicated region
  $region30: #{densenet3_forward.10} parent=0 // pred_check
    _
  $region31: #{densenet3_forward.10} parent=0 // pred_check_branch
    %927 = sbr.rel (0) target = $region33
  $region32: #{densenet3_forward.10} parent=0 // pred_region
    _
  $region33: #{densenet3_forward.10} parent=0 // pred_fallthru
    _
  // Predicated region
  $region34: #{densenet3_forward.10} parent=0 // pred_check
    _
  $region35: #{densenet3_forward.10} parent=0 // pred_check_branch
    %929 = sbr.rel (0) target = $region37
  $region36: #{densenet3_forward.10} parent=0 // pred_region
    _
  $region37: #{densenet3_forward.10} parent=0 // pred_fallthru
    _
  // Predicated region
  $region38: #{densenet3_forward.10} parent=0 // pred_check
    _
  $region39: #{densenet3_forward.10} parent=0 // pred_check_branch
    %931 = sbr.rel (0) target = $region41
  $region40: #{densenet3_forward.10} parent=0 // pred_region
    _
  $region41: #{densenet3_forward.10} parent=0 // pred_fallthru
    _

// kernel: densenet3_forward.9
$region0: #{densenet3_forward.9}
  #allocation0 [shape = 'u32[]', space=smem, size = 0x4, offset = 0x4, fixed_abs, tag = 'smem constant byte address 0x4 - core index']
  #allocation1 [shape = 'u32[144,128]{1,0:T(1,128)}', space=vmem, size = 0x12000, scoped, tag = 'internal scratch']
  %s0 = inlined_call_operand.vmem [shape: bf16[128,128], index: 0, kind: input, shape index: {}]
  %s1 = inlined_call_operand.vmem [shape: bf16[128,128], index: 1, kind: input, shape index: {}]
  %s2 = inlined_call_operand.vmem [shape: bf16[128,128], index: 2, kind: input, shape index: {}]
  %s3 = inlined_call_operand.vmem [shape: bf16[128,128], index: 3, kind: input, shape index: {}]
  %s4 = inlined_call_operand.vmem [shape: f32[1,128], index: 4, kind: input, shape index: {}]
  %s5 = inlined_call_operand.vmem [shape: bf16[128,128], index: 5, kind: input, shape index: {}]
  %s6 = inlined_call_operand.vmem [shape: f32[1,128], index: 6, kind: input, shape index: {}]
  %s7 = inlined_call_operand.vmem [shape: bf16[128,128], index: 7, kind: input, shape index: {}]
  %s8 = inlined_call_operand.vmem [shape: f32[1,128], index: 8, kind: input, shape index: {}]
  %s9 = inlined_call_operand.vmem [shape: bf16[128,128], index: 9, kind: input, shape index: {}]
  %s10 = inlined_call_operand.vmem [shape: f32[1,128], index: 10, kind: input, shape index: {}]
  %s11 = inlined_call_operand.vmem [shape: bf16[128,128], index: 11, kind: input, shape index: {}]
  %s12 = inlined_call_operand.vmem [shape: bf16[128,128], index: 12, kind: output, shape index: {0}]
  %s13 = inlined_call_operand.vmem [shape: bf16[128,128], index: 13, kind: output, shape index: {1}]
  %14 = xla_tuple %s12, %s13
  %s15 = sld [smem:[#allocation0]]
  $region66: #{densenet3_forward.9} parent=0
    _
  %s17 = ssub.s32 1, %s15
  %s18 = scalar_select 0, %s17, %s15
  // Predicated region
  $region2: #{densenet3_forward.9} parent=0 // pred_check
    _
  $region3: #{densenet3_forward.9} parent=0 // pred_check_branch
    %20 = sbr.rel (0) target = $region5
  $region4: #{densenet3_forward.9} parent=0 // pred_region
    _
  $region5: #{densenet3_forward.9} parent=0 // pred_fallthru
    _
  // Predicated region
  $region6: #{densenet3_forward.9} parent=0 // pred_check
    _
  $region7: #{densenet3_forward.9} parent=0 // pred_check_branch
    %22 = sbr.rel (0) target = $region9
  $region8: #{densenet3_forward.9} parent=0 // pred_region
    _
  $region9: #{densenet3_forward.9} parent=0 // pred_fallthru
    _
  // Predicated region
  $region10: #{densenet3_forward.9} parent=0 // pred_check
    _
  $region11: #{densenet3_forward.9} parent=0 // pred_check_branch
    %24 = sbr.rel (0) target = $region13
  $region12: #{densenet3_forward.9} parent=0 // pred_region
    _
  $region13: #{densenet3_forward.9} parent=0 // pred_fallthru
    _
  // Predicated region
  $region14: #{densenet3_forward.9} parent=0 // pred_check
    _
  $region15: #{densenet3_forward.9} parent=0 // pred_check_branch
    %26 = sbr.rel (0) target = $region17
  $region16: #{densenet3_forward.9} parent=0 // pred_region
    _
  $region17: #{densenet3_forward.9} parent=0 // pred_fallthru
    _
  // Predicated region
  $region18: #{densenet3_forward.9} parent=0 // pred_check
    _
  $region19: #{densenet3_forward.9} parent=0 // pred_check_branch
    %28 = sbr.rel (0) target = $region21
  $region20: #{densenet3_forward.9} parent=0 // pred_region
    _
  $region21: #{densenet3_forward.9} parent=0 // pred_fallthru
    _
  // Predicated region
  $region22: #{densenet3_forward.9} parent=0 // pred_check
    _
  $region23: #{densenet3_forward.9} parent=0 // pred_check_branch
    %30 = sbr.rel (0) target = $region25
  $region24: #{densenet3_forward.9} parent=0 // pred_region
    _
  $region25: #{densenet3_forward.9} parent=0 // pred_fallthru
    _
  // Predicated region
  $region26: #{densenet3_forward.9} parent=0 // pred_check
    _
  $region27: #{densenet3_forward.9} parent=0 // pred_check_branch
    %32 = sbr.rel (0) target = $region29
  $region28: #{densenet3_forward.9} parent=0 // pred_region
    _
  $region29: #{densenet3_forward.9} parent=0 // pred_fallthru
    _
  // Predicated region
  $region30: #{densenet3_forward.9} parent=0 // pred_check
    _
  $region31: #{densenet3_forward.9} parent=0 // pred_check_branch
    %34 = sbr.rel (0) target = $region33
  $region32: #{densenet3_forward.9} parent=0 // pred_region
    _
  $region33: #{densenet3_forward.9} parent=0 // pred_fallthru
    _
  // Predicated region
  $region34: #{densenet3_forward.9} parent=0 // pred_check
    _
  $region35: #{densenet3_forward.9} parent=0 // pred_check_branch
    %36 = sbr.rel (0) target = $region37
  $region36: #{densenet3_forward.9} parent=0 // pred_region
    _
  $region37: #{densenet3_forward.9} parent=0 // pred_fallthru
    _
  // Predicated region
  $region38: #{densenet3_forward.9} parent=0 // pred_check
    _
  $region39: #{densenet3_forward.9} parent=0 // pred_check_branch
    %38 = sbr.rel (0) target = $region41
  $region40: #{densenet3_forward.9} parent=0 // pred_region
    _
  $region41: #{densenet3_forward.9} parent=0 // pred_fallthru
    _
  // Predicated region
  $region42: #{densenet3_forward.9} parent=0 // pred_check
    _
  $region43: #{densenet3_forward.9} parent=0 // pred_check_branch
    %40 = sbr.rel (0) target = $region45
  $region44: #{densenet3_forward.9} parent=0 // pred_region
    _
  $region45: #{densenet3_forward.9} parent=0 // pred_fallthru
    _
  // Predicated region
  $region46: #{densenet3_forward.9} parent=0 // pred_check
    _
  $region47: #{densenet3_forward.9} parent=0 // pred_check_branch
    %42 = sbr.rel (0) target = $region49
  $region48: #{densenet3_forward.9} parent=0 // pred_region
    _
  $region49: #{densenet3_forward.9} parent=0 // pred_fallthru
    _
  %v44 = vld [vmem:[%s0] sm:$0xf]
  %v45 = vld [vmem:[%s0 + $0x4] sm:$0xf]
  %v46 = vld [vmem:[%s0 + $0x8] sm:$0xf]
  %v47 = vld [vmem:[%s0 + $0xc] sm:$0xf]
  %v48 = vld [vmem:[%s0 + $0x10] sm:$0xf]
  %v49 = vld [vmem:[%s0 + $0x14] sm:$0xf]
  %v50 = vld [vmem:[%s0 + $0x18] sm:$0xf]
  %v51 = vld [vmem:[%s0 + $0x1c] sm:$0xf]
  %v52 = vld [vmem:[%s0 + $0x20] sm:$0xf]
  %v53 = vld [vmem:[%s0 + $0x24] sm:$0xf]
  %v54 = vld [vmem:[%s0 + $0x28] sm:$0xf]
  %v55 = vld [vmem:[%s0 + $0x2c] sm:$0xf]
  %v56 = vld [vmem:[%s0 + $0x30] sm:$0xf]
  %v57 = vld [vmem:[%s0 + $0x34] sm:$0xf]
  %v58 = vld [vmem:[%s0 + $0x38] sm:$0xf]
  %v59 = vld [vmem:[%s0 + $0x3c] sm:$0xf]
  %v60 = vld [vmem:[%s3] sm:$0xf]
  %v61 = vld [vmem:[%s3 + $0x4] sm:$0xf]
  %v62 = vld [vmem:[%s3 + $0x8] sm:$0xf]
  %v63 = vld [vmem:[%s3 + $0xc] sm:$0xf]
  %v64 = vld [vmem:[%s3 + $0x10] sm:$0xf]
  %v65 = vld [vmem:[%s3 + $0x14] sm:$0xf]
  %v66 = vld [vmem:[%s3 + $0x18] sm:$0xf]
  %v67 = vld [vmem:[%s3 + $0x1c] sm:$0xf]
  %v68 = vld [vmem:[%s3 + $0x20] sm:$0xf]
  %v69 = vld [vmem:[%s3 + $0x24] sm:$0xf]
  %v70 = vld [vmem:[%s3 + $0x28] sm:$0xf]
  %v71 = vld [vmem:[%s3 + $0x2c] sm:$0xf]
  %v72 = vld [vmem:[%s3 + $0x30] sm:$0xf]
  %v73 = vld [vmem:[%s3 + $0x34] sm:$0xf]
  %v74 = vld [vmem:[%s3 + $0x38] sm:$0xf]
  %v75 = vld [vmem:[%s3 + $0x3c] sm:$0xf]
  %v76 = vld [vmem:[%s4] sm:$0x1]
  %v78 = vlaneseq
  %v79 = vshrl.u32 %v78, 7
  %v80 = vsub.s32 0, %v79
  %v81 = vrot.slane %v76, %v80
  %v99 = vunpack.c.l.b16 %v44
  %v100 = vunpack.c.l.b16 %v45
  %v101 = vunpack.c.l.b16 %v46
  %v102 = vunpack.c.l.b16 %v47
  %v103 = vunpack.c.l.b16 %v48
  %v104 = vunpack.c.l.b16 %v49
  %v105 = vunpack.c.l.b16 %v50
  %v106 = vunpack.c.l.b16 %v51
  %v107 = vunpack.c.l.b16 %v52
  %v108 = vunpack.c.l.b16 %v53
  %v109 = vunpack.c.l.b16 %v54
  %v110 = vunpack.c.l.b16 %v55
  %v111 = vunpack.c.l.b16 %v56
  %v112 = vunpack.c.l.b16 %v57
  %v113 = vunpack.c.l.b16 %v58
  %v114 = vunpack.c.l.b16 %v59
  %v115 = vpack.c.b16 %v100, %v99
  %v116 = vpack.c.b16 %v102, %v101
  %v117 = vpack.c.b16 %v104, %v103
  %v118 = vpack.c.b16 %v106, %v105
  %v119 = vpack.c.b16 %v108, %v107
  %v120 = vpack.c.b16 %v110, %v109
  %v121 = vpack.c.b16 %v112, %v111
  %v122 = vpack.c.b16 %v114, %v113
  %v147 = vunpack.c.l.b16 %v60
  %v148 = vunpack.c.l.b16 %v61
  %v149 = vunpack.c.l.b16 %v62
  %v150 = vunpack.c.l.b16 %v63
  %v151 = vunpack.c.l.b16 %v64
  %v152 = vunpack.c.l.b16 %v65
  %v153 = vunpack.c.l.b16 %v66
  %v154 = vunpack.c.l.b16 %v67
  %v155 = vunpack.c.l.b16 %v68
  %v156 = vunpack.c.l.b16 %v69
  %v157 = vunpack.c.l.b16 %v70
  %v158 = vunpack.c.l.b16 %v71
  %v159 = vunpack.c.l.b16 %v72
  %v160 = vunpack.c.l.b16 %v73
  %v161 = vunpack.c.l.b16 %v74
  %v162 = vunpack.c.l.b16 %v75
  %v163 = vpack.c.b16 %v148, %v147
  %v164 = vpack.c.b16 %v150, %v149
  %v165 = vpack.c.b16 %v152, %v151
  %v166 = vpack.c.b16 %v154, %v153
  %v167 = vpack.c.b16 %v156, %v155
  %v168 = vpack.c.b16 %v158, %v157
  %v169 = vpack.c.b16 %v160, %v159
  %v170 = vpack.c.b16 %v162, %v161
  %179 = vmatprep.subr.bf16.mxu0 0
  %180 = vmatpush1.bf16.msra.mxu0 %v170
  %181 = vmatprep.subr.bf16.mxu0 0
  %182 = vmatpush1.bf16.msra.mxu0 %v169
  %183 = vmatprep.subr.bf16.mxu0 0
  %184 = vmatpush1.bf16.msra.mxu0 %v168
  %185 = vmatprep.subr.bf16.mxu0 0
  %186 = vmatpush1.bf16.msra.mxu0 %v167
  %187 = vmatprep.subr.bf16.mxu0 0
  %188 = vmatpush1.bf16.msra.mxu0 %v166
  %189 = vmatprep.subr.bf16.mxu0 0
  %190 = vmatpush1.bf16.msra.mxu0 %v165
  %191 = vmatprep.subr.bf16.mxu0 0
  %192 = vmatpush1.bf16.msra.mxu0 %v164
  %193 = vmatprep.subr.bf16.mxu0 0
  %194 = vmatpush1.bf16.msra.mxu0 %v163
  %195 = vmatprep.subr.bf16.mxu0 0
  %196 = vmatpush2.bf16.msra.mxu0 0
  %197 = vmatprep.subr.bf16.mxu0 0
  %198 = vmatpush2.bf16.msra.mxu0 0
  %199 = vmatprep.subr.bf16.mxu0 0
  %200 = vmatpush2.bf16.msra.mxu0 0
  %201 = vmatprep.subr.bf16.mxu0 0
  %202 = vmatpush2.bf16.msra.mxu0 0
  %203 = vmatprep.subr.bf16.mxu0 0
  %204 = vmatpush2.bf16.msra.mxu0 0
  %205 = vmatprep.subr.bf16.mxu0 0
  %206 = vmatpush2.bf16.msra.mxu0 0
  %207 = vmatprep.subr.bf16.mxu0 0
  %208 = vmatpush2.bf16.msra.mxu0 0
  %209 = vmatprep.subr.bf16.mxu0 0
  %210 = vmatpush2.bf16.msra.mxu0 0
  %211 = vmatprep.mubr.bf16.mxu0 0
  %212 = vmatmul.mubr.bf16.gmra.mxu0 %v115
  %v213 = vpop.f32.mrf.mxu0
  %v214 = vadd.f32 %v81, %v213
  %v215 = vpop.f32.mrf.mxu0
  %v216 = vpop.f32.mrf.mxu0
  %v217 = vadd.f32 %v81, %v216
  %v218 = vpop.f32.mrf.mxu0
  %219 = vmatprep.mubr.bf16.mxu0 0
  %220 = vmatmul.mubr.bf16.gmra.mxu0 %v116
  %v221 = vpop.f32.mrf.mxu0
  %v222 = vadd.f32 %v81, %v221
  %v223 = vpop.f32.mrf.mxu0
  %v224 = vpop.f32.mrf.mxu0
  %v225 = vadd.f32 %v81, %v224
  %v226 = vpop.f32.mrf.mxu0
  %227 = vmatprep.mubr.bf16.mxu0 0
  %228 = vmatmul.mubr.bf16.gmra.mxu0 %v117
  %v229 = vpop.f32.mrf.mxu0
  %v230 = vadd.f32 %v81, %v229
  %v231 = vpop.f32.mrf.mxu0
  %v232 = vpop.f32.mrf.mxu0
  %v233 = vadd.f32 %v81, %v232
  %v234 = vpop.f32.mrf.mxu0
  %235 = vmatprep.mubr.bf16.mxu0 0
  %236 = vmatmul.mubr.bf16.gmra.mxu0 %v118
  %v237 = vpop.f32.mrf.mxu0
  %v238 = vadd.f32 %v81, %v237
  %v239 = vpop.f32.mrf.mxu0
  %v240 = vpop.f32.mrf.mxu0
  %v241 = vadd.f32 %v81, %v240
  %v242 = vpop.f32.mrf.mxu0
  %243 = vmatprep.mubr.bf16.mxu0 0
  %244 = vmatmul.mubr.bf16.gmra.mxu0 %v119
  %v245 = vpop.f32.mrf.mxu0
  %v246 = vadd.f32 %v81, %v245
  %v247 = vpop.f32.mrf.mxu0
  %v248 = vpop.f32.mrf.mxu0
  %v249 = vadd.f32 %v81, %v248
  %v250 = vpop.f32.mrf.mxu0
  %251 = vmatprep.mubr.bf16.mxu0 0
  %252 = vmatmul.mubr.bf16.gmra.mxu0 %v120
  %v253 = vpop.f32.mrf.mxu0
  %v254 = vadd.f32 %v81, %v253
  %v255 = vpop.f32.mrf.mxu0
  %v256 = vpop.f32.mrf.mxu0
  %v257 = vadd.f32 %v81, %v256
  %v258 = vpop.f32.mrf.mxu0
  %259 = vmatprep.mubr.bf16.mxu0 0
  %260 = vmatmul.mubr.bf16.gmra.mxu0 %v121
  %v261 = vpop.f32.mrf.mxu0
  %v262 = vadd.f32 %v81, %v261
  %v263 = vpop.f32.mrf.mxu0
  %v264 = vpop.f32.mrf.mxu0
  %v265 = vadd.f32 %v81, %v264
  %v266 = vpop.f32.mrf.mxu0
  %267 = vmatprep.mubr.bf16.mxu0 0
  %268 = vmatmul.mubr.bf16.gmra.mxu0 %v122
  %v269 = vpop.f32.mrf.mxu0
  %v270 = vadd.f32 %v81, %v269
  %v271 = vpop.f32.mrf.mxu0
  %v272 = vpop.f32.mrf.mxu0
  %v273 = vadd.f32 %v81, %v272
  %v274 = vpop.f32.mrf.mxu0
  %275 = vdwg.mxu0
  %v276 = vld [vmem:[%s1] sm:$0xf]
  %v277 = vld [vmem:[%s1 + $0x4] sm:$0xf]
  %v278 = vld [vmem:[%s1 + $0x8] sm:$0xf]
  %v279 = vld [vmem:[%s1 + $0xc] sm:$0xf]
  %v280 = vld [vmem:[%s1 + $0x10] sm:$0xf]
  %v281 = vld [vmem:[%s1 + $0x14] sm:$0xf]
  %v282 = vld [vmem:[%s1 + $0x18] sm:$0xf]
  %v283 = vld [vmem:[%s1 + $0x1c] sm:$0xf]
  %v284 = vld [vmem:[%s1 + $0x20] sm:$0xf]
  %v285 = vld [vmem:[%s1 + $0x24] sm:$0xf]
  %v286 = vld [vmem:[%s1 + $0x28] sm:$0xf]
  %v287 = vld [vmem:[%s1 + $0x2c] sm:$0xf]
  %v288 = vld [vmem:[%s1 + $0x30] sm:$0xf]
  %v289 = vld [vmem:[%s1 + $0x34] sm:$0xf]
  %v290 = vld [vmem:[%s1 + $0x38] sm:$0xf]
  %v291 = vld [vmem:[%s1 + $0x3c] sm:$0xf]
  %v292 = vpack.c.bf16 %v217, %v214
  %v293 = vpack.c.bf16 %v225, %v222
  %v294 = vpack.c.bf16 %v233, %v230
  %v295 = vpack.c.bf16 %v241, %v238
  %v296 = vpack.c.bf16 %v249, %v246
  %v297 = vpack.c.bf16 %v257, %v254
  %v298 = vpack.c.bf16 %v265, %v262
  %v299 = vpack.c.bf16 %v273, %v270
  %v316 = vunpack.c.l.b16 %v276
  %v317 = vunpack.c.l.b16 %v277
  %v318 = vunpack.c.l.b16 %v278
  %v319 = vunpack.c.l.b16 %v279
  %v320 = vunpack.c.l.b16 %v280
  %v321 = vunpack.c.l.b16 %v281
  %v322 = vunpack.c.l.b16 %v282
  %v323 = vunpack.c.l.b16 %v283
  %v324 = vunpack.c.l.b16 %v284
  %v325 = vunpack.c.l.b16 %v285
  %v326 = vunpack.c.l.b16 %v286
  %v327 = vunpack.c.l.b16 %v287
  %v328 = vunpack.c.l.b16 %v288
  %v329 = vunpack.c.l.b16 %v289
  %v330 = vunpack.c.l.b16 %v290
  %v331 = vunpack.c.l.b16 %v291
  %v332 = vpack.c.b16 %v317, %v316
  %v333 = vpack.c.b16 %v319, %v318
  %v334 = vpack.c.b16 %v321, %v320
  %v335 = vpack.c.b16 %v323, %v322
  %v336 = vpack.c.b16 %v325, %v324
  %v337 = vpack.c.b16 %v327, %v326
  %v338 = vpack.c.b16 %v329, %v328
  %v339 = vpack.c.b16 %v331, %v330
  %348 = vmatprep.subr.bf16.mxu0 0
  %349 = vmatpush1.bf16.xpose.msra.mxu0 %v339
  %350 = vmatprep.subr.bf16.mxu0 0
  %351 = vmatpush1.bf16.xpose.msra.mxu0 %v338
  %352 = vmatprep.subr.bf16.mxu0 0
  %353 = vmatpush1.bf16.xpose.msra.mxu0 %v337
  %354 = vmatprep.subr.bf16.mxu0 0
  %355 = vmatpush1.bf16.xpose.msra.mxu0 %v336
  %356 = vmatprep.subr.bf16.mxu0 0
  %357 = vmatpush1.bf16.xpose.msra.mxu0 %v335
  %358 = vmatprep.subr.bf16.mxu0 0
  %359 = vmatpush1.bf16.xpose.msra.mxu0 %v334
  %360 = vmatprep.subr.bf16.mxu0 0
  %361 = vmatpush1.bf16.xpose.msra.mxu0 %v333
  %362 = vmatprep.subr.bf16.mxu0 0
  %363 = vmatpush1.bf16.xpose.msra.mxu0 %v332
  %364 = vmatprep.subr.bf16.mxu0 0
  %365 = vmatpush2.bf16.xpose.msra.mxu0 0
  %366 = vmatprep.subr.bf16.mxu0 0
  %367 = vmatpush2.bf16.xpose.msra.mxu0 0
  %368 = vmatprep.subr.bf16.mxu0 0
  %369 = vmatpush2.bf16.xpose.msra.mxu0 0
  %370 = vmatprep.subr.bf16.mxu0 0
  %371 = vmatpush2.bf16.xpose.msra.mxu0 0
  %372 = vmatprep.subr.bf16.mxu0 0
  %373 = vmatpush2.bf16.xpose.msra.mxu0 0
  %374 = vmatprep.subr.bf16.mxu0 0
  %375 = vmatpush2.bf16.xpose.msra.mxu0 0
  %376 = vmatprep.subr.bf16.mxu0 0
  %377 = vmatpush2.bf16.xpose.msra.mxu0 0
  %378 = vmatprep.subr.bf16.mxu0 0
  %379 = vmatpush2.bf16.xpose.msra.mxu0 0
  %380 = vmatprep.mubr.bf16.mxu0 0
  %381 = vmatmul.mubr.bf16.gmra.mxu0 %v292
  %v382 = vpop.f32.mrf.mxu0
  %v383 = vadd.f32 0.0, %v382
  %v384 = vpop.f32.mrf.mxu0
  %v385 = vpop.f32.mrf.mxu0
  %v386 = vadd.f32 0.0, %v385
  %v387 = vpop.f32.mrf.mxu0
  %388 = vmatprep.mubr.bf16.mxu0 0
  %389 = vmatmul.mubr.bf16.gmra.mxu0 %v293
  %v390 = vpop.f32.mrf.mxu0
  %v391 = vadd.f32 0.0, %v390
  %v392 = vpop.f32.mrf.mxu0
  %v393 = vpop.f32.mrf.mxu0
  %v394 = vadd.f32 0.0, %v393
  %v395 = vpop.f32.mrf.mxu0
  %396 = vmatprep.mubr.bf16.mxu0 0
  %397 = vmatmul.mubr.bf16.gmra.mxu0 %v294
  %v398 = vpop.f32.mrf.mxu0
  %v399 = vadd.f32 0.0, %v398
  %v400 = vpop.f32.mrf.mxu0
  %v401 = vpop.f32.mrf.mxu0
  %v402 = vadd.f32 0.0, %v401
  %v403 = vpop.f32.mrf.mxu0
  %404 = vmatprep.mubr.bf16.mxu0 0
  %405 = vmatmul.mubr.bf16.gmra.mxu0 %v295
  %v406 = vpop.f32.mrf.mxu0
  %v407 = vadd.f32 0.0, %v406
  %v408 = vpop.f32.mrf.mxu0
  %v409 = vpop.f32.mrf.mxu0
  %v410 = vadd.f32 0.0, %v409
  %v411 = vpop.f32.mrf.mxu0
  %412 = vmatprep.mubr.bf16.mxu0 0
  %413 = vmatmul.mubr.bf16.gmra.mxu0 %v296
  %v414 = vpop.f32.mrf.mxu0
  %v415 = vadd.f32 0.0, %v414
  %v416 = vpop.f32.mrf.mxu0
  %v417 = vpop.f32.mrf.mxu0
  %v418 = vadd.f32 0.0, %v417
  %v419 = vpop.f32.mrf.mxu0
  %420 = vmatprep.mubr.bf16.mxu0 0
  %421 = vmatmul.mubr.bf16.gmra.mxu0 %v297
  %v422 = vpop.f32.mrf.mxu0
  %v423 = vadd.f32 0.0, %v422
  %v424 = vpop.f32.mrf.mxu0
  %v425 = vpop.f32.mrf.mxu0
  %v426 = vadd.f32 0.0, %v425
  %v427 = vpop.f32.mrf.mxu0
  %428 = vmatprep.mubr.bf16.mxu0 0
  %429 = vmatmul.mubr.bf16.gmra.mxu0 %v298
  %v430 = vpop.f32.mrf.mxu0
  %v431 = vadd.f32 0.0, %v430
  %v432 = vpop.f32.mrf.mxu0
  %v433 = vpop.f32.mrf.mxu0
  %v434 = vadd.f32 0.0, %v433
  %v435 = vpop.f32.mrf.mxu0
  %436 = vmatprep.mubr.bf16.mxu0 0
  %437 = vmatmul.mubr.bf16.gmra.mxu0 %v299
  %v438 = vpop.f32.mrf.mxu0
  %v439 = vadd.f32 0.0, %v438
  %v440 = vpop.f32.mrf.mxu0
  %v441 = vpop.f32.mrf.mxu0
  %v442 = vadd.f32 0.0, %v441
  %v443 = vpop.f32.mrf.mxu0
  %444 = vdwg.mxu0
  %v445 = vlaneseq
  %v446 = vand.u32 %v445, 127
  %vm447 = vcmp.lt.s32.totalorder %v446, 16
  %v448 = vsel %vm447, %v383, -1e+30
  %v449 = vsel %vm447, %v386, -1e+30
  %v450 = vsel %vm447, %v391, -1e+30
  %v451 = vsel %vm447, %v394, -1e+30
  %v452 = vsel %vm447, %v399, -1e+30
  %v453 = vsel %vm447, %v402, -1e+30
  %v454 = vsel %vm447, %v407, -1e+30
  %v455 = vsel %vm447, %v410, -1e+30
  %v456 = vsel %vm447, %v415, -1e+30
  %v457 = vsel %vm447, %v418, -1e+30
  %v458 = vsel %vm447, %v423, -1e+30
  %v459 = vsel %vm447, %v426, -1e+30
  %v460 = vsel %vm447, %v431, -1e+30
  %v461 = vsel %vm447, %v434, -1e+30
  %v462 = vsel %vm447, %v439, -1e+30
  %v463 = vsel %vm447, %v442, -1e+30
  %464 = vmax.xlane.f32.xlu0 %v448
  %v465 = vpop.xlane.xlu0 %464
  %466 = vmax.xlane.f32.xlu0 %v449
  %v467 = vpop.xlane.xlu0 %466
  %468 = vmax.xlane.f32.xlu0 %v450
  %v469 = vpop.xlane.xlu0 %468
  %470 = vmax.xlane.f32.xlu0 %v451
  %v471 = vpop.xlane.xlu0 %470
  %472 = vmax.xlane.f32.xlu0 %v452
  %v473 = vpop.xlane.xlu0 %472
  %474 = vmax.xlane.f32.xlu0 %v453
  %v475 = vpop.xlane.xlu0 %474
  %476 = vmax.xlane.f32.xlu0 %v454
  %v477 = vpop.xlane.xlu0 %476
  %478 = vmax.xlane.f32.xlu0 %v455
  %v479 = vpop.xlane.xlu0 %478
  %480 = vmax.xlane.f32.xlu0 %v456
  %v481 = vpop.xlane.xlu0 %480
  %482 = vmax.xlane.f32.xlu0 %v457
  %v483 = vpop.xlane.xlu0 %482
  %484 = vmax.xlane.f32.xlu0 %v458
  %v485 = vpop.xlane.xlu0 %484
  %486 = vmax.xlane.f32.xlu0 %v459
  %v487 = vpop.xlane.xlu0 %486
  %488 = vmax.xlane.f32.xlu0 %v460
  %v489 = vpop.xlane.xlu0 %488
  %490 = vmax.xlane.f32.xlu0 %v461
  %v491 = vpop.xlane.xlu0 %490
  %492 = vmax.xlane.f32.xlu0 %v462
  %v493 = vpop.xlane.xlu0 %492
  %494 = vmax.xlane.f32.xlu0 %v463
  %v495 = vpop.xlane.xlu0 %494
  %v496 = vsub.f32 %v448, %v465
  %v497 = vsub.f32 %v449, %v467
  %v498 = vsub.f32 %v450, %v469
  %v499 = vsub.f32 %v451, %v471
  %v500 = vsub.f32 %v452, %v473
  %v501 = vsub.f32 %v453, %v475
  %v502 = vsub.f32 %v454, %v477
  %v503 = vsub.f32 %v455, %v479
  %v504 = vsub.f32 %v456, %v481
  %v505 = vsub.f32 %v457, %v483
  %v506 = vsub.f32 %v458, %v485
  %v507 = vsub.f32 %v459, %v487
  %v508 = vsub.f32 %v460, %v489
  %v509 = vsub.f32 %v461, %v491
  %v510 = vsub.f32 %v462, %v493
  %v511 = vsub.f32 %v463, %v495
  %v512 = vmul.f32 %v496, 1.442695
  %v513 = vpow.pop %v512
  %v514 = vmul.f32 %v497, 1.442695
  %v515 = vpow.pop %v514
  %v516 = vmul.f32 %v498, 1.442695
  %v517 = vpow.pop %v516
  %v518 = vmul.f32 %v499, 1.442695
  %v519 = vpow.pop %v518
  %v520 = vmul.f32 %v500, 1.442695
  %v521 = vpow.pop %v520
  %v522 = vmul.f32 %v501, 1.442695
  %v523 = vpow.pop %v522
  %v524 = vmul.f32 %v502, 1.442695
  %v525 = vpow.pop %v524
  %v526 = vmul.f32 %v503, 1.442695
  %v527 = vpow.pop %v526
  %v528 = vmul.f32 %v504, 1.442695
  %v529 = vpow.pop %v528
  %v530 = vmul.f32 %v505, 1.442695
  %v531 = vpow.pop %v530
  %v532 = vmul.f32 %v506, 1.442695
  %v533 = vpow.pop %v532
  %v534 = vmul.f32 %v507, 1.442695
  %v535 = vpow.pop %v534
  %v536 = vmul.f32 %v508, 1.442695
  %v537 = vpow.pop %v536
  %v538 = vmul.f32 %v509, 1.442695
  %v539 = vpow.pop %v538
  %v540 = vmul.f32 %v510, 1.442695
  %v541 = vpow.pop %v540
  %v542 = vmul.f32 %v511, 1.442695
  %v543 = vpow.pop %v542
  %544 = vadd.xlane.f32.xlu0 %v513
  %v545 = vpop.xlane.xlu0 %544
  %546 = vadd.xlane.f32.xlu0 %v515
  %v547 = vpop.xlane.xlu0 %546
  %548 = vadd.xlane.f32.xlu0 %v517
  %v549 = vpop.xlane.xlu0 %548
  %550 = vadd.xlane.f32.xlu0 %v519
  %v551 = vpop.xlane.xlu0 %550
  %552 = vadd.xlane.f32.xlu0 %v521
  %v553 = vpop.xlane.xlu0 %552
  %554 = vadd.xlane.f32.xlu0 %v523
  %v555 = vpop.xlane.xlu0 %554
  %556 = vadd.xlane.f32.xlu0 %v525
  %v557 = vpop.xlane.xlu0 %556
  %558 = vadd.xlane.f32.xlu0 %v527
  %v559 = vpop.xlane.xlu0 %558
  %560 = vadd.xlane.f32.xlu0 %v529
  %v561 = vpop.xlane.xlu0 %560
  %562 = vadd.xlane.f32.xlu0 %v531
  %v563 = vpop.xlane.xlu0 %562
  %564 = vadd.xlane.f32.xlu0 %v533
  %v565 = vpop.xlane.xlu0 %564
  %566 = vadd.xlane.f32.xlu0 %v535
  %v567 = vpop.xlane.xlu0 %566
  %568 = vadd.xlane.f32.xlu0 %v537
  %v569 = vpop.xlane.xlu0 %568
  %570 = vadd.xlane.f32.xlu0 %v539
  %v571 = vpop.xlane.xlu0 %570
  %572 = vadd.xlane.f32.xlu0 %v541
  %v573 = vpop.xlane.xlu0 %572
  %574 = vadd.xlane.f32.xlu0 %v543
  %v575 = vpop.xlane.xlu0 %574
  %v576 = vrcp.pop %v545
  %v577 = vrcp.pop %v547
  %v578 = vrcp.pop %v549
  %v579 = vrcp.pop %v551
  %v580 = vrcp.pop %v553
  %v581 = vrcp.pop %v555
  %v582 = vrcp.pop %v557
  %v583 = vrcp.pop %v559
  %v584 = vrcp.pop %v561
  %v585 = vrcp.pop %v563
  %v586 = vrcp.pop %v565
  %v587 = vrcp.pop %v567
  %v588 = vrcp.pop %v569
  %v589 = vrcp.pop %v571
  %v590 = vrcp.pop %v573
  %v591 = vrcp.pop %v575
  %v592 = vmul.f32 %v513, %v576
  %v593 = vmul.f32 %v515, %v577
  %v594 = vmul.f32 %v517, %v578
  %v595 = vmul.f32 %v519, %v579
  %v596 = vmul.f32 %v521, %v580
  %v597 = vmul.f32 %v523, %v581
  %v598 = vmul.f32 %v525, %v582
  %v599 = vmul.f32 %v527, %v583
  %v600 = vmul.f32 %v529, %v584
  %v601 = vmul.f32 %v531, %v585
  %v602 = vmul.f32 %v533, %v586
  %v603 = vmul.f32 %v535, %v587
  %v604 = vmul.f32 %v537, %v588
  %v605 = vmul.f32 %v539, %v589
  %v606 = vmul.f32 %v541, %v590
  %v607 = vmul.f32 %v543, %v591
  %v608 = vld [vmem:[%s2] sm:$0xf]
  %v609 = vld [vmem:[%s2 + $0x4] sm:$0xf]
  %v610 = vld [vmem:[%s2 + $0x8] sm:$0xf]
  %v611 = vld [vmem:[%s2 + $0xc] sm:$0xf]
  %v612 = vld [vmem:[%s2 + $0x10] sm:$0xf]
  %v613 = vld [vmem:[%s2 + $0x14] sm:$0xf]
  %v614 = vld [vmem:[%s2 + $0x18] sm:$0xf]
  %v615 = vld [vmem:[%s2 + $0x1c] sm:$0xf]
  %v616 = vld [vmem:[%s2 + $0x20] sm:$0xf]
  %v617 = vld [vmem:[%s2 + $0x24] sm:$0xf]
  %v618 = vld [vmem:[%s2 + $0x28] sm:$0xf]
  %v619 = vld [vmem:[%s2 + $0x2c] sm:$0xf]
  %v620 = vld [vmem:[%s2 + $0x30] sm:$0xf]
  %v621 = vld [vmem:[%s2 + $0x34] sm:$0xf]
  %v622 = vld [vmem:[%s2 + $0x38] sm:$0xf]
  %v623 = vld [vmem:[%s2 + $0x3c] sm:$0xf]
  %v624 = vpack.c.bf16 %v593, %v592
  %v625 = vpack.c.bf16 %v595, %v594
  %v626 = vpack.c.bf16 %v597, %v596
  %v627 = vpack.c.bf16 %v599, %v598
  %v628 = vpack.c.bf16 %v601, %v600
  %v629 = vpack.c.bf16 %v603, %v602
  %v630 = vpack.c.bf16 %v605, %v604
  %v631 = vpack.c.bf16 %v607, %v606
  %v632 = vunpack.c.l.bf16 %v44
  %v633 = vunpack.c.l.bf16 %v45
  %v634 = vunpack.c.l.bf16 %v46
  %v635 = vunpack.c.l.bf16 %v47
  %v636 = vunpack.c.l.bf16 %v48
  %v637 = vunpack.c.l.bf16 %v49
  %v638 = vunpack.c.l.bf16 %v50
  %v639 = vunpack.c.l.bf16 %v51
  %v640 = vunpack.c.l.bf16 %v52
  %v641 = vunpack.c.l.bf16 %v53
  %v642 = vunpack.c.l.bf16 %v54
  %v643 = vunpack.c.l.bf16 %v55
  %v644 = vunpack.c.l.bf16 %v56
  %v645 = vunpack.c.l.bf16 %v57
  %v646 = vunpack.c.l.bf16 %v58
  %v647 = vunpack.c.l.bf16 %v59
  %v664 = vunpack.c.l.b16 %v608
  %v665 = vunpack.c.l.b16 %v609
  %v666 = vunpack.c.l.b16 %v610
  %v667 = vunpack.c.l.b16 %v611
  %v668 = vunpack.c.l.b16 %v612
  %v669 = vunpack.c.l.b16 %v613
  %v670 = vunpack.c.l.b16 %v614
  %v671 = vunpack.c.l.b16 %v615
  %v672 = vunpack.c.l.b16 %v616
  %v673 = vunpack.c.l.b16 %v617
  %v674 = vunpack.c.l.b16 %v618
  %v675 = vunpack.c.l.b16 %v619
  %v676 = vunpack.c.l.b16 %v620
  %v677 = vunpack.c.l.b16 %v621
  %v678 = vunpack.c.l.b16 %v622
  %v679 = vunpack.c.l.b16 %v623
  %v680 = vpack.c.b16 %v665, %v664
  %v681 = vpack.c.b16 %v667, %v666
  %v682 = vpack.c.b16 %v669, %v668
  %v683 = vpack.c.b16 %v671, %v670
  %v684 = vpack.c.b16 %v673, %v672
  %v685 = vpack.c.b16 %v675, %v674
  %v686 = vpack.c.b16 %v677, %v676
  %v687 = vpack.c.b16 %v679, %v678
  %696 = vmatprep.subr.bf16.mxu0 0
  %697 = vmatpush1.bf16.msra.mxu0 %v687
  %698 = vmatprep.subr.bf16.mxu0 0
  %699 = vmatpush1.bf16.msra.mxu0 %v686
  %700 = vmatprep.subr.bf16.mxu0 0
  %701 = vmatpush1.bf16.msra.mxu0 %v685
  %702 = vmatprep.subr.bf16.mxu0 0
  %703 = vmatpush1.bf16.msra.mxu0 %v684
  %704 = vmatprep.subr.bf16.mxu0 0
  %705 = vmatpush1.bf16.msra.mxu0 %v683
  %706 = vmatprep.subr.bf16.mxu0 0
  %707 = vmatpush1.bf16.msra.mxu0 %v682
  %708 = vmatprep.subr.bf16.mxu0 0
  %709 = vmatpush1.bf16.msra.mxu0 %v681
  %710 = vmatprep.subr.bf16.mxu0 0
  %711 = vmatpush1.bf16.msra.mxu0 %v680
  %712 = vmatprep.subr.bf16.mxu0 0
  %713 = vmatpush2.bf16.msra.mxu0 0
  %714 = vmatprep.subr.bf16.mxu0 0
  %715 = vmatpush2.bf16.msra.mxu0 0
  %716 = vmatprep.subr.bf16.mxu0 0
  %717 = vmatpush2.bf16.msra.mxu0 0
  %718 = vmatprep.subr.bf16.mxu0 0
  %719 = vmatpush2.bf16.msra.mxu0 0
  %720 = vmatprep.subr.bf16.mxu0 0
  %721 = vmatpush2.bf16.msra.mxu0 0
  %722 = vmatprep.subr.bf16.mxu0 0
  %723 = vmatpush2.bf16.msra.mxu0 0
  %724 = vmatprep.subr.bf16.mxu0 0
  %725 = vmatpush2.bf16.msra.mxu0 0
  %726 = vmatprep.subr.bf16.mxu0 0
  %727 = vmatpush2.bf16.msra.mxu0 0
  %728 = vmatprep.mubr.bf16.mxu0 0
  %729 = vmatmul.mubr.bf16.gmra.mxu0 %v624
  %v730 = vpop.f32.mrf.mxu0
  %v731 = vadd.f32 %v632, %v730
  %v732 = vpop.f32.mrf.mxu0
  %v733 = vpop.f32.mrf.mxu0
  %v734 = vadd.f32 %v633, %v733
  %v735 = vpop.f32.mrf.mxu0
  %736 = vmatprep.mubr.bf16.mxu0 0
  %737 = vmatmul.mubr.bf16.gmra.mxu0 %v625
  %v738 = vpop.f32.mrf.mxu0
  %v739 = vadd.f32 %v634, %v738
  %v740 = vpop.f32.mrf.mxu0
  %v741 = vpop.f32.mrf.mxu0
  %v742 = vadd.f32 %v635, %v741
  %v743 = vpop.f32.mrf.mxu0
  %744 = vmatprep.mubr.bf16.mxu0 0
  %745 = vmatmul.mubr.bf16.gmra.mxu0 %v626
  %v746 = vpop.f32.mrf.mxu0
  %v747 = vadd.f32 %v636, %v746
  %v748 = vpop.f32.mrf.mxu0
  %v749 = vpop.f32.mrf.mxu0
  %v750 = vadd.f32 %v637, %v749
  %v751 = vpop.f32.mrf.mxu0
  %752 = vmatprep.mubr.bf16.mxu0 0
  %753 = vmatmul.mubr.bf16.gmra.mxu0 %v627
  %v754 = vpop.f32.mrf.mxu0
  %v755 = vadd.f32 %v638, %v754
  %v756 = vpop.f32.mrf.mxu0
  %v757 = vpop.f32.mrf.mxu0
  %v758 = vadd.f32 %v639, %v757
  %v759 = vpop.f32.mrf.mxu0
  %760 = vmatprep.mubr.bf16.mxu0 0
  %761 = vmatmul.mubr.bf16.gmra.mxu0 %v628
  %v762 = vpop.f32.mrf.mxu0
  %v763 = vadd.f32 %v640, %v762
  %v764 = vpop.f32.mrf.mxu0
  %v765 = vpop.f32.mrf.mxu0
  %v766 = vadd.f32 %v641, %v765
  %v767 = vpop.f32.mrf.mxu0
  %768 = vmatprep.mubr.bf16.mxu0 0
  %769 = vmatmul.mubr.bf16.gmra.mxu0 %v629
  %v770 = vpop.f32.mrf.mxu0
  %v771 = vadd.f32 %v642, %v770
  %v772 = vpop.f32.mrf.mxu0
  %v773 = vpop.f32.mrf.mxu0
  %v774 = vadd.f32 %v643, %v773
  %v775 = vpop.f32.mrf.mxu0
  %776 = vmatprep.mubr.bf16.mxu0 0
  %777 = vmatmul.mubr.bf16.gmra.mxu0 %v630
  %v778 = vpop.f32.mrf.mxu0
  %v779 = vadd.f32 %v644, %v778
  %v780 = vpop.f32.mrf.mxu0
  %v781 = vpop.f32.mrf.mxu0
  %v782 = vadd.f32 %v645, %v781
  %v783 = vpop.f32.mrf.mxu0
  %784 = vmatprep.mubr.bf16.mxu0 0
  %785 = vmatmul.mubr.bf16.gmra.mxu0 %v631
  %v786 = vpop.f32.mrf.mxu0
  %v787 = vadd.f32 %v646, %v786
  %v788 = vpop.f32.mrf.mxu0
  %v789 = vpop.f32.mrf.mxu0
  %v790 = vadd.f32 %v647, %v789
  %v791 = vpop.f32.mrf.mxu0
  %792 = vdwg.mxu0
  %v793 = vpack.c.bf16 %v734, %v731
  %v794 = vpack.c.bf16 %v742, %v739
  %v795 = vpack.c.bf16 %v750, %v747
  %v796 = vpack.c.bf16 %v758, %v755
  %v797 = vpack.c.bf16 %v766, %v763
  %v798 = vpack.c.bf16 %v774, %v771
  %v799 = vpack.c.bf16 %v782, %v779
  %v800 = vpack.c.bf16 %v790, %v787
  %v809 = vunpack.c.l.b16 %v793
  %v810 = vunpack.c.h.b16 %v793
  %v811 = vunpack.c.l.b16 %v794
  %v812 = vunpack.c.h.b16 %v794
  %v813 = vunpack.c.l.b16 %v795
  %v814 = vunpack.c.h.b16 %v795
  %v815 = vunpack.c.l.b16 %v796
  %v816 = vunpack.c.h.b16 %v796
  %v817 = vunpack.c.l.b16 %v797
  %v818 = vunpack.c.h.b16 %v797
  %v819 = vunpack.c.l.b16 %v798
  %v820 = vunpack.c.h.b16 %v798
  %v821 = vunpack.c.l.b16 %v799
  %v822 = vunpack.c.h.b16 %v799
  %v823 = vunpack.c.l.b16 %v800
  %v824 = vunpack.c.h.b16 %v800
  %v825 = vpack.c.b16 %v809, %v809
  %v826 = vpack.c.b16 %v810, %v810
  %v827 = vpack.c.b16 %v811, %v811
  %v828 = vpack.c.b16 %v812, %v812
  %v829 = vpack.c.b16 %v813, %v813
  %v830 = vpack.c.b16 %v814, %v814
  %v831 = vpack.c.b16 %v815, %v815
  %v832 = vpack.c.b16 %v816, %v816
  %v833 = vpack.c.b16 %v817, %v817
  %v834 = vpack.c.b16 %v818, %v818
  %v835 = vpack.c.b16 %v819, %v819
  %v836 = vpack.c.b16 %v820, %v820
  %v837 = vpack.c.b16 %v821, %v821
  %v838 = vpack.c.b16 %v822, %v822
  %v839 = vpack.c.b16 %v823, %v823
  %v840 = vpack.c.b16 %v824, %v824
  %857 = vst [vmem:[%s12] sm:$0xf] %v825
  %858 = vst [vmem:[%s12 + $0x4] sm:$0xf] %v826
  %859 = vst [vmem:[%s12 + $0x8] sm:$0xf] %v827
  %860 = vst [vmem:[%s12 + $0xc] sm:$0xf] %v828
  %861 = vst [vmem:[%s12 + $0x10] sm:$0xf] %v829
  %862 = vst [vmem:[%s12 + $0x14] sm:$0xf] %v830
  %863 = vst [vmem:[%s12 + $0x18] sm:$0xf] %v831
  %864 = vst [vmem:[%s12 + $0x1c] sm:$0xf] %v832
  %865 = vst [vmem:[%s12 + $0x20] sm:$0xf] %v833
  %866 = vst [vmem:[%s12 + $0x24] sm:$0xf] %v834
  %867 = vst [vmem:[%s12 + $0x28] sm:$0xf] %v835
  %868 = vst [vmem:[%s12 + $0x2c] sm:$0xf] %v836
  %869 = vst [vmem:[%s12 + $0x30] sm:$0xf] %v837
  %870 = vst [vmem:[%s12 + $0x34] sm:$0xf] %v838
  %871 = vst [vmem:[%s12 + $0x38] sm:$0xf] %v839
  %872 = vst [vmem:[%s12 + $0x3c] sm:$0xf] %v840
  %v873 = vld [vmem:[%s5] sm:$0xf]
  %v874 = vld [vmem:[%s5 + $0x4] sm:$0xf]
  %v875 = vld [vmem:[%s5 + $0x8] sm:$0xf]
  %v876 = vld [vmem:[%s5 + $0xc] sm:$0xf]
  %v877 = vld [vmem:[%s5 + $0x10] sm:$0xf]
  %v878 = vld [vmem:[%s5 + $0x14] sm:$0xf]
  %v879 = vld [vmem:[%s5 + $0x18] sm:$0xf]
  %v880 = vld [vmem:[%s5 + $0x1c] sm:$0xf]
  %v881 = vld [vmem:[%s5 + $0x20] sm:$0xf]
  %v882 = vld [vmem:[%s5 + $0x24] sm:$0xf]
  %v883 = vld [vmem:[%s5 + $0x28] sm:$0xf]
  %v884 = vld [vmem:[%s5 + $0x2c] sm:$0xf]
  %v885 = vld [vmem:[%s5 + $0x30] sm:$0xf]
  %v886 = vld [vmem:[%s5 + $0x34] sm:$0xf]
  %v887 = vld [vmem:[%s5 + $0x38] sm:$0xf]
  %v888 = vld [vmem:[%s5 + $0x3c] sm:$0xf]
  %v889 = vld [vmem:[%s6] sm:$0x1]
  %v891 = vlaneseq
  %v892 = vshrl.u32 %v891, 7
  %v893 = vsub.s32 0, %v892
  %v894 = vrot.slane %v889, %v893
  %v912 = vunpack.c.l.b16 %v873
  %v913 = vunpack.c.l.b16 %v874
  %v914 = vunpack.c.l.b16 %v875
  %v915 = vunpack.c.l.b16 %v876
  %v916 = vunpack.c.l.b16 %v877
  %v917 = vunpack.c.l.b16 %v878
  %v918 = vunpack.c.l.b16 %v879
  %v919 = vunpack.c.l.b16 %v880
  %v920 = vunpack.c.l.b16 %v881
  %v921 = vunpack.c.l.b16 %v882
  %v922 = vunpack.c.l.b16 %v883
  %v923 = vunpack.c.l.b16 %v884
  %v924 = vunpack.c.l.b16 %v885
  %v925 = vunpack.c.l.b16 %v886
  %v926 = vunpack.c.l.b16 %v887
  %v927 = vunpack.c.l.b16 %v888
  %v928 = vpack.c.b16 %v913, %v912
  %v929 = vpack.c.b16 %v915, %v914
  %v930 = vpack.c.b16 %v917, %v916
  %v931 = vpack.c.b16 %v919, %v918
  %v932 = vpack.c.b16 %v921, %v920
  %v933 = vpack.c.b16 %v923, %v922
  %v934 = vpack.c.b16 %v925, %v924
  %v935 = vpack.c.b16 %v927, %v926
  %944 = vmatprep.subr.bf16.mxu0 0
  %945 = vmatpush1.bf16.msra.mxu0 %v935
  %946 = vmatprep.subr.bf16.mxu0 0
  %947 = vmatpush1.bf16.msra.mxu0 %v934
  %948 = vmatprep.subr.bf16.mxu0 0
  %949 = vmatpush1.bf16.msra.mxu0 %v933
  %950 = vmatprep.subr.bf16.mxu0 0
  %951 = vmatpush1.bf16.msra.mxu0 %v932
  %952 = vmatprep.subr.bf16.mxu0 0
  %953 = vmatpush1.bf16.msra.mxu0 %v931
  %954 = vmatprep.subr.bf16.mxu0 0
  %955 = vmatpush1.bf16.msra.mxu0 %v930
  %956 = vmatprep.subr.bf16.mxu0 0
  %957 = vmatpush1.bf16.msra.mxu0 %v929
  %958 = vmatprep.subr.bf16.mxu0 0
  %959 = vmatpush1.bf16.msra.mxu0 %v928
  %960 = vmatprep.subr.bf16.mxu0 0
  %961 = vmatpush2.bf16.msra.mxu0 0
  %962 = vmatprep.subr.bf16.mxu0 0
  %963 = vmatpush2.bf16.msra.mxu0 0
  %964 = vmatprep.subr.bf16.mxu0 0
  %965 = vmatpush2.bf16.msra.mxu0 0
  %966 = vmatprep.subr.bf16.mxu0 0
  %967 = vmatpush2.bf16.msra.mxu0 0
  %968 = vmatprep.subr.bf16.mxu0 0
  %969 = vmatpush2.bf16.msra.mxu0 0
  %970 = vmatprep.subr.bf16.mxu0 0
  %971 = vmatpush2.bf16.msra.mxu0 0
  %972 = vmatprep.subr.bf16.mxu0 0
  %973 = vmatpush2.bf16.msra.mxu0 0
  %974 = vmatprep.subr.bf16.mxu0 0
  %975 = vmatpush2.bf16.msra.mxu0 0
  %976 = vmatprep.mubr.bf16.mxu0 0
  %977 = vmatmul.mubr.bf16.gmra.mxu0 %v793
  %v978 = vpop.f32.mrf.mxu0
  %v979 = vadd.f32 %v894, %v978
  %v980 = vpop.f32.mrf.mxu0
  %v981 = vpop.f32.mrf.mxu0
  %v982 = vadd.f32 %v894, %v981
  %v983 = vpop.f32.mrf.mxu0
  %984 = vmatprep.mubr.bf16.mxu0 0
  %985 = vmatmul.mubr.bf16.gmra.mxu0 %v794
  %v986 = vpop.f32.mrf.mxu0
  %v987 = vadd.f32 %v894, %v986
  %v988 = vpop.f32.mrf.mxu0
  %v989 = vpop.f32.mrf.mxu0
  %v990 = vadd.f32 %v894, %v989
  %v991 = vpop.f32.mrf.mxu0
  %992 = vmatprep.mubr.bf16.mxu0 0
  %993 = vmatmul.mubr.bf16.gmra.mxu0 %v795
  %v994 = vpop.f32.mrf.mxu0
  %v995 = vadd.f32 %v894, %v994
  %v996 = vpop.f32.mrf.mxu0
  %v997 = vpop.f32.mrf.mxu0
  %v998 = vadd.f32 %v894, %v997
  %v999 = vpop.f32.mrf.mxu0
  %1000 = vmatprep.mubr.bf16.mxu0 0
  %1001 = vmatmul.mubr.bf16.gmra.mxu0 %v796
  %v1002 = vpop.f32.mrf.mxu0
  %v1003 = vadd.f32 %v894, %v1002
  %v1004 = vpop.f32.mrf.mxu0
  %v1005 = vpop.f32.mrf.mxu0
  %v1006 = vadd.f32 %v894, %v1005
  %v1007 = vpop.f32.mrf.mxu0
  %1008 = vmatprep.mubr.bf16.mxu0 0
  %1009 = vmatmul.mubr.bf16.gmra.mxu0 %v797
  %v1010 = vpop.f32.mrf.mxu0
  %v1011 = vadd.f32 %v894, %v1010
  %v1012 = vpop.f32.mrf.mxu0
  %v1013 = vpop.f32.mrf.mxu0
  %v1014 = vadd.f32 %v894, %v1013
  %v1015 = vpop.f32.mrf.mxu0
  %1016 = vmatprep.mubr.bf16.mxu0 0
  %1017 = vmatmul.mubr.bf16.gmra.mxu0 %v798
  %v1018 = vpop.f32.mrf.mxu0
  %v1019 = vadd.f32 %v894, %v1018
  %v1020 = vpop.f32.mrf.mxu0
  %v1021 = vpop.f32.mrf.mxu0
  %v1022 = vadd.f32 %v894, %v1021
  %v1023 = vpop.f32.mrf.mxu0
  %1024 = vmatprep.mubr.bf16.mxu0 0
  %1025 = vmatmul.mubr.bf16.gmra.mxu0 %v799
  %v1026 = vpop.f32.mrf.mxu0
  %v1027 = vadd.f32 %v894, %v1026
  %v1028 = vpop.f32.mrf.mxu0
  %v1029 = vpop.f32.mrf.mxu0
  %v1030 = vadd.f32 %v894, %v1029
  %v1031 = vpop.f32.mrf.mxu0
  %1032 = vmatprep.mubr.bf16.mxu0 0
  %1033 = vmatmul.mubr.bf16.gmra.mxu0 %v800
  %v1034 = vpop.f32.mrf.mxu0
  %v1035 = vadd.f32 %v894, %v1034
  %v1036 = vpop.f32.mrf.mxu0
  %v1037 = vpop.f32.mrf.mxu0
  %v1038 = vadd.f32 %v894, %v1037
  %v1039 = vpop.f32.mrf.mxu0
  %1040 = vdwg.mxu0
  %v1041 = vmax.f32 %v979, 0.0
  %v1042 = vmax.f32 %v982, 0.0
  %v1043 = vmax.f32 %v987, 0.0
  %v1044 = vmax.f32 %v990, 0.0
  %v1045 = vmax.f32 %v995, 0.0
  %v1046 = vmax.f32 %v998, 0.0
  %v1047 = vmax.f32 %v1003, 0.0
  %v1048 = vmax.f32 %v1006, 0.0
  %v1049 = vmax.f32 %v1011, 0.0
  %v1050 = vmax.f32 %v1014, 0.0
  %v1051 = vmax.f32 %v1019, 0.0
  %v1052 = vmax.f32 %v1022, 0.0
  %v1053 = vmax.f32 %v1027, 0.0
  %v1054 = vmax.f32 %v1030, 0.0
  %v1055 = vmax.f32 %v1035, 0.0
  %v1056 = vmax.f32 %v1038, 0.0
  %v1057 = vld [vmem:[%s7] sm:$0xf]
  %v1058 = vld [vmem:[%s7 + $0x4] sm:$0xf]
  %v1059 = vld [vmem:[%s7 + $0x8] sm:$0xf]
  %v1060 = vld [vmem:[%s7 + $0xc] sm:$0xf]
  %v1061 = vld [vmem:[%s7 + $0x10] sm:$0xf]
  %v1062 = vld [vmem:[%s7 + $0x14] sm:$0xf]
  %v1063 = vld [vmem:[%s7 + $0x18] sm:$0xf]
  %v1064 = vld [vmem:[%s7 + $0x1c] sm:$0xf]
  %v1065 = vld [vmem:[%s7 + $0x20] sm:$0xf]
  %v1066 = vld [vmem:[%s7 + $0x24] sm:$0xf]
  %v1067 = vld [vmem:[%s7 + $0x28] sm:$0xf]
  %v1068 = vld [vmem:[%s7 + $0x2c] sm:$0xf]
  %v1069 = vld [vmem:[%s7 + $0x30] sm:$0xf]
  %v1070 = vld [vmem:[%s7 + $0x34] sm:$0xf]
  %v1071 = vld [vmem:[%s7 + $0x38] sm:$0xf]
  %v1072 = vld [vmem:[%s7 + $0x3c] sm:$0xf]
  %v1073 = vpack.c.bf16 %v1042, %v1041
  %v1074 = vpack.c.bf16 %v1044, %v1043
  %v1075 = vpack.c.bf16 %v1046, %v1045
  %v1076 = vpack.c.bf16 %v1048, %v1047
  %v1077 = vpack.c.bf16 %v1050, %v1049
  %v1078 = vpack.c.bf16 %v1052, %v1051
  %v1079 = vpack.c.bf16 %v1054, %v1053
  %v1080 = vpack.c.bf16 %v1056, %v1055
  %v1081 = vld [vmem:[%s8] sm:$0x1]
  %v1083 = vlaneseq
  %v1084 = vshrl.u32 %v1083, 7
  %v1085 = vsub.s32 0, %v1084
  %v1086 = vrot.slane %v1081, %v1085
  %v1104 = vunpack.c.l.b16 %v1057
  %v1105 = vunpack.c.l.b16 %v1058
  %v1106 = vunpack.c.l.b16 %v1059
  %v1107 = vunpack.c.l.b16 %v1060
  %v1108 = vunpack.c.l.b16 %v1061
  %v1109 = vunpack.c.l.b16 %v1062
  %v1110 = vunpack.c.l.b16 %v1063
  %v1111 = vunpack.c.l.b16 %v1064
  %v1112 = vunpack.c.l.b16 %v1065
  %v1113 = vunpack.c.l.b16 %v1066
  %v1114 = vunpack.c.l.b16 %v1067
  %v1115 = vunpack.c.l.b16 %v1068
  %v1116 = vunpack.c.l.b16 %v1069
  %v1117 = vunpack.c.l.b16 %v1070
  %v1118 = vunpack.c.l.b16 %v1071
  %v1119 = vunpack.c.l.b16 %v1072
  %v1120 = vpack.c.b16 %v1105, %v1104
  %v1121 = vpack.c.b16 %v1107, %v1106
  %v1122 = vpack.c.b16 %v1109, %v1108
  %v1123 = vpack.c.b16 %v1111, %v1110
  %v1124 = vpack.c.b16 %v1113, %v1112
  %v1125 = vpack.c.b16 %v1115, %v1114
  %v1126 = vpack.c.b16 %v1117, %v1116
  %v1127 = vpack.c.b16 %v1119, %v1118
  %1136 = vmatprep.subr.bf16.mxu0 0
  %1137 = vmatpush1.bf16.msra.mxu0 %v1127
  %1138 = vmatprep.subr.bf16.mxu0 0
  %1139 = vmatpush1.bf16.msra.mxu0 %v1126
  %1140 = vmatprep.subr.bf16.mxu0 0
  %1141 = vmatpush1.bf16.msra.mxu0 %v1125
  %1142 = vmatprep.subr.bf16.mxu0 0
  %1143 = vmatpush1.bf16.msra.mxu0 %v1124
  %1144 = vmatprep.subr.bf16.mxu0 0
  %1145 = vmatpush1.bf16.msra.mxu0 %v1123
  %1146 = vmatprep.subr.bf16.mxu0 0
  %1147 = vmatpush1.bf16.msra.mxu0 %v1122
  %1148 = vmatprep.subr.bf16.mxu0 0
  %1149 = vmatpush1.bf16.msra.mxu0 %v1121
  %1150 = vmatprep.subr.bf16.mxu0 0
  %1151 = vmatpush1.bf16.msra.mxu0 %v1120
  %1152 = vmatprep.subr.bf16.mxu0 0
  %1153 = vmatpush2.bf16.msra.mxu0 0
  %1154 = vmatprep.subr.bf16.mxu0 0
  %1155 = vmatpush2.bf16.msra.mxu0 0
  %1156 = vmatprep.subr.bf16.mxu0 0
  %1157 = vmatpush2.bf16.msra.mxu0 0
  %1158 = vmatprep.subr.bf16.mxu0 0
  %1159 = vmatpush2.bf16.msra.mxu0 0
  %1160 = vmatprep.subr.bf16.mxu0 0
  %1161 = vmatpush2.bf16.msra.mxu0 0
  %1162 = vmatprep.subr.bf16.mxu0 0
  %1163 = vmatpush2.bf16.msra.mxu0 0
  %1164 = vmatprep.subr.bf16.mxu0 0
  %1165 = vmatpush2.bf16.msra.mxu0 0
  %1166 = vmatprep.subr.bf16.mxu0 0
  %1167 = vmatpush2.bf16.msra.mxu0 0
  %1168 = vmatprep.mubr.bf16.mxu0 0
  %1169 = vmatmul.mubr.bf16.gmra.mxu0 %v1073
  %v1170 = vpop.f32.mrf.mxu0
  %v1171 = vadd.f32 %v1086, %v1170
  %v1172 = vpop.f32.mrf.mxu0
  %v1173 = vpop.f32.mrf.mxu0
  %v1174 = vadd.f32 %v1086, %v1173
  %v1175 = vpop.f32.mrf.mxu0
  %1176 = vmatprep.mubr.bf16.mxu0 0
  %1177 = vmatmul.mubr.bf16.gmra.mxu0 %v1074
  %v1178 = vpop.f32.mrf.mxu0
  %v1179 = vadd.f32 %v1086, %v1178
  %v1180 = vpop.f32.mrf.mxu0
  %v1181 = vpop.f32.mrf.mxu0
  %v1182 = vadd.f32 %v1086, %v1181
  %v1183 = vpop.f32.mrf.mxu0
  %1184 = vmatprep.mubr.bf16.mxu0 0
  %1185 = vmatmul.mubr.bf16.gmra.mxu0 %v1075
  %v1186 = vpop.f32.mrf.mxu0
  %v1187 = vadd.f32 %v1086, %v1186
  %v1188 = vpop.f32.mrf.mxu0
  %v1189 = vpop.f32.mrf.mxu0
  %v1190 = vadd.f32 %v1086, %v1189
  %v1191 = vpop.f32.mrf.mxu0
  %1192 = vmatprep.mubr.bf16.mxu0 0
  %1193 = vmatmul.mubr.bf16.gmra.mxu0 %v1076
  %v1194 = vpop.f32.mrf.mxu0
  %v1195 = vadd.f32 %v1086, %v1194
  %v1196 = vpop.f32.mrf.mxu0
  %v1197 = vpop.f32.mrf.mxu0
  %v1198 = vadd.f32 %v1086, %v1197
  %v1199 = vpop.f32.mrf.mxu0
  %1200 = vmatprep.mubr.bf16.mxu0 0
  %1201 = vmatmul.mubr.bf16.gmra.mxu0 %v1077
  %v1202 = vpop.f32.mrf.mxu0
  %v1203 = vadd.f32 %v1086, %v1202
  %v1204 = vpop.f32.mrf.mxu0
  %v1205 = vpop.f32.mrf.mxu0
  %v1206 = vadd.f32 %v1086, %v1205
  %v1207 = vpop.f32.mrf.mxu0
  %1208 = vmatprep.mubr.bf16.mxu0 0
  %1209 = vmatmul.mubr.bf16.gmra.mxu0 %v1078
  %v1210 = vpop.f32.mrf.mxu0
  %v1211 = vadd.f32 %v1086, %v1210
  %v1212 = vpop.f32.mrf.mxu0
  %v1213 = vpop.f32.mrf.mxu0
  %v1214 = vadd.f32 %v1086, %v1213
  %v1215 = vpop.f32.mrf.mxu0
  %1216 = vmatprep.mubr.bf16.mxu0 0
  %1217 = vmatmul.mubr.bf16.gmra.mxu0 %v1079
  %v1218 = vpop.f32.mrf.mxu0
  %v1219 = vadd.f32 %v1086, %v1218
  %v1220 = vpop.f32.mrf.mxu0
  %v1221 = vpop.f32.mrf.mxu0
  %v1222 = vadd.f32 %v1086, %v1221
  %v1223 = vpop.f32.mrf.mxu0
  %1224 = vmatprep.mubr.bf16.mxu0 0
  %1225 = vmatmul.mubr.bf16.gmra.mxu0 %v1080
  %v1226 = vpop.f32.mrf.mxu0
  %v1227 = vadd.f32 %v1086, %v1226
  %v1228 = vpop.f32.mrf.mxu0
  %v1229 = vpop.f32.mrf.mxu0
  %v1230 = vadd.f32 %v1086, %v1229
  %v1231 = vpop.f32.mrf.mxu0
  %1232 = vdwg.mxu0
  %v1233 = vmax.f32 %v1171, 0.0
  %v1234 = vmax.f32 %v1174, 0.0
  %v1235 = vmax.f32 %v1179, 0.0
  %v1236 = vmax.f32 %v1182, 0.0
  %v1237 = vmax.f32 %v1187, 0.0
  %v1238 = vmax.f32 %v1190, 0.0
  %v1239 = vmax.f32 %v1195, 0.0
  %v1240 = vmax.f32 %v1198, 0.0
  %v1241 = vmax.f32 %v1203, 0.0
  %v1242 = vmax.f32 %v1206, 0.0
  %v1243 = vmax.f32 %v1211, 0.0
  %v1244 = vmax.f32 %v1214, 0.0
  %v1245 = vmax.f32 %v1219, 0.0
  %v1246 = vmax.f32 %v1222, 0.0
  %v1247 = vmax.f32 %v1227, 0.0
  %v1248 = vmax.f32 %v1230, 0.0
  %v1249 = vld [vmem:[%s9] sm:$0xf]
  %v1250 = vld [vmem:[%s9 + $0x4] sm:$0xf]
  %v1251 = vld [vmem:[%s9 + $0x8] sm:$0xf]
  %v1252 = vld [vmem:[%s9 + $0xc] sm:$0xf]
  %v1253 = vld [vmem:[%s9 + $0x10] sm:$0xf]
  %v1254 = vld [vmem:[%s9 + $0x14] sm:$0xf]
  %v1255 = vld [vmem:[%s9 + $0x18] sm:$0xf]
  %v1256 = vld [vmem:[%s9 + $0x1c] sm:$0xf]
  %v1257 = vld [vmem:[%s9 + $0x20] sm:$0xf]
  %v1258 = vld [vmem:[%s9 + $0x24] sm:$0xf]
  %v1259 = vld [vmem:[%s9 + $0x28] sm:$0xf]
  %v1260 = vld [vmem:[%s9 + $0x2c] sm:$0xf]
  %v1261 = vld [vmem:[%s9 + $0x30] sm:$0xf]
  %v1262 = vld [vmem:[%s9 + $0x34] sm:$0xf]
  %v1263 = vld [vmem:[%s9 + $0x38] sm:$0xf]
  %v1264 = vld [vmem:[%s9 + $0x3c] sm:$0xf]
  %v1265 = vpack.c.bf16 %v1234, %v1233
  %v1266 = vpack.c.bf16 %v1236, %v1235
  %v1267 = vpack.c.bf16 %v1238, %v1237
  %v1268 = vpack.c.bf16 %v1240, %v1239
  %v1269 = vpack.c.bf16 %v1242, %v1241
  %v1270 = vpack.c.bf16 %v1244, %v1243
  %v1271 = vpack.c.bf16 %v1246, %v1245
  %v1272 = vpack.c.bf16 %v1248, %v1247
  %v1273 = vld [vmem:[%s10] sm:$0x1]
  %v1275 = vlaneseq
  %v1276 = vshrl.u32 %v1275, 7
  %v1277 = vsub.s32 0, %v1276
  %v1278 = vrot.slane %v1273, %v1277
  %v1296 = vunpack.c.l.b16 %v1249
  %v1297 = vunpack.c.l.b16 %v1250
  %v1298 = vunpack.c.l.b16 %v1251
  %v1299 = vunpack.c.l.b16 %v1252
  %v1300 = vunpack.c.l.b16 %v1253
  %v1301 = vunpack.c.l.b16 %v1254
  %v1302 = vunpack.c.l.b16 %v1255
  %v1303 = vunpack.c.l.b16 %v1256
  %v1304 = vunpack.c.l.b16 %v1257
  %v1305 = vunpack.c.l.b16 %v1258
  %v1306 = vunpack.c.l.b16 %v1259
  %v1307 = vunpack.c.l.b16 %v1260
  %v1308 = vunpack.c.l.b16 %v1261
  %v1309 = vunpack.c.l.b16 %v1262
  %v1310 = vunpack.c.l.b16 %v1263
  %v1311 = vunpack.c.l.b16 %v1264
  %v1312 = vpack.c.b16 %v1297, %v1296
  %v1313 = vpack.c.b16 %v1299, %v1298
  %v1314 = vpack.c.b16 %v1301, %v1300
  %v1315 = vpack.c.b16 %v1303, %v1302
  %v1316 = vpack.c.b16 %v1305, %v1304
  %v1317 = vpack.c.b16 %v1307, %v1306
  %v1318 = vpack.c.b16 %v1309, %v1308
  %v1319 = vpack.c.b16 %v1311, %v1310
  %1328 = vmatprep.subr.bf16.mxu0 0
  %1329 = vmatpush1.bf16.msra.mxu0 %v1319
  %1330 = vmatprep.subr.bf16.mxu0 0
  %1331 = vmatpush1.bf16.msra.mxu0 %v1318
  %1332 = vmatprep.subr.bf16.mxu0 0
  %1333 = vmatpush1.bf16.msra.mxu0 %v1317
  %1334 = vmatprep.subr.bf16.mxu0 0
  %1335 = vmatpush1.bf16.msra.mxu0 %v1316
  %1336 = vmatprep.subr.bf16.mxu0 0
  %1337 = vmatpush1.bf16.msra.mxu0 %v1315
  %1338 = vmatprep.subr.bf16.mxu0 0
  %1339 = vmatpush1.bf16.msra.mxu0 %v1314
  %1340 = vmatprep.subr.bf16.mxu0 0
  %1341 = vmatpush1.bf16.msra.mxu0 %v1313
  %1342 = vmatprep.subr.bf16.mxu0 0
  %1343 = vmatpush1.bf16.msra.mxu0 %v1312
  %1344 = vmatprep.subr.bf16.mxu0 0
  %1345 = vmatpush2.bf16.msra.mxu0 0
  %1346 = vmatprep.subr.bf16.mxu0 0
  %1347 = vmatpush2.bf16.msra.mxu0 0
  %1348 = vmatprep.subr.bf16.mxu0 0
  %1349 = vmatpush2.bf16.msra.mxu0 0
  %1350 = vmatprep.subr.bf16.mxu0 0
  %1351 = vmatpush2.bf16.msra.mxu0 0
  %1352 = vmatprep.subr.bf16.mxu0 0
  %1353 = vmatpush2.bf16.msra.mxu0 0
  %1354 = vmatprep.subr.bf16.mxu0 0
  %1355 = vmatpush2.bf16.msra.mxu0 0
  %1356 = vmatprep.subr.bf16.mxu0 0
  %1357 = vmatpush2.bf16.msra.mxu0 0
  %1358 = vmatprep.subr.bf16.mxu0 0
  %1359 = vmatpush2.bf16.msra.mxu0 0
  %1360 = vmatprep.mubr.bf16.mxu0 0
  %1361 = vmatmul.mubr.bf16.gmra.mxu0 %v1265
  %v1362 = vpop.f32.mrf.mxu0
  %v1363 = vadd.f32 %v1278, %v1362
  %v1364 = vpop.f32.mrf.mxu0
  %v1365 = vpop.f32.mrf.mxu0
  %v1366 = vadd.f32 %v1278, %v1365
  %v1367 = vpop.f32.mrf.mxu0
  %1368 = vmatprep.mubr.bf16.mxu0 0
  %1369 = vmatmul.mubr.bf16.gmra.mxu0 %v1266
  %v1370 = vpop.f32.mrf.mxu0
  %v1371 = vadd.f32 %v1278, %v1370
  %v1372 = vpop.f32.mrf.mxu0
  %v1373 = vpop.f32.mrf.mxu0
  %v1374 = vadd.f32 %v1278, %v1373
  %v1375 = vpop.f32.mrf.mxu0
  %1376 = vmatprep.mubr.bf16.mxu0 0
  %1377 = vmatmul.mubr.bf16.gmra.mxu0 %v1267
  %v1378 = vpop.f32.mrf.mxu0
  %v1379 = vadd.f32 %v1278, %v1378
  %v1380 = vpop.f32.mrf.mxu0
  %v1381 = vpop.f32.mrf.mxu0
  %v1382 = vadd.f32 %v1278, %v1381
  %v1383 = vpop.f32.mrf.mxu0
  %1384 = vmatprep.mubr.bf16.mxu0 0
  %1385 = vmatmul.mubr.bf16.gmra.mxu0 %v1268
  %v1386 = vpop.f32.mrf.mxu0
  %v1387 = vadd.f32 %v1278, %v1386
  %v1388 = vpop.f32.mrf.mxu0
  %v1389 = vpop.f32.mrf.mxu0
  %v1390 = vadd.f32 %v1278, %v1389
  %v1391 = vpop.f32.mrf.mxu0
  %1392 = vmatprep.mubr.bf16.mxu0 0
  %1393 = vmatmul.mubr.bf16.gmra.mxu0 %v1269
  %v1394 = vpop.f32.mrf.mxu0
  %v1395 = vadd.f32 %v1278, %v1394
  %v1396 = vpop.f32.mrf.mxu0
  %v1397 = vpop.f32.mrf.mxu0
  %v1398 = vadd.f32 %v1278, %v1397
  %v1399 = vpop.f32.mrf.mxu0
  %1400 = vmatprep.mubr.bf16.mxu0 0
  %1401 = vmatmul.mubr.bf16.gmra.mxu0 %v1270
  %v1402 = vpop.f32.mrf.mxu0
  %v1403 = vadd.f32 %v1278, %v1402
  %v1404 = vpop.f32.mrf.mxu0
  %v1405 = vpop.f32.mrf.mxu0
  %v1406 = vadd.f32 %v1278, %v1405
  %v1407 = vpop.f32.mrf.mxu0
  %1408 = vmatprep.mubr.bf16.mxu0 0
  %1409 = vmatmul.mubr.bf16.gmra.mxu0 %v1271
  %v1410 = vpop.f32.mrf.mxu0
  %v1411 = vadd.f32 %v1278, %v1410
  %v1412 = vpop.f32.mrf.mxu0
  %v1413 = vpop.f32.mrf.mxu0
  %v1414 = vadd.f32 %v1278, %v1413
  %v1415 = vpop.f32.mrf.mxu0
  %1416 = vmatprep.mubr.bf16.mxu0 0
  %1417 = vmatmul.mubr.bf16.gmra.mxu0 %v1272
  %v1418 = vpop.f32.mrf.mxu0
  %v1419 = vadd.f32 %v1278, %v1418
  %v1420 = vpop.f32.mrf.mxu0
  %v1421 = vpop.f32.mrf.mxu0
  %v1422 = vadd.f32 %v1278, %v1421
  %v1423 = vpop.f32.mrf.mxu0
  %1424 = vdwg.mxu0
  %v1425 = vmax.f32 %v1363, 0.0
  %v1426 = vmax.f32 %v1366, 0.0
  %v1427 = vmax.f32 %v1371, 0.0
  %v1428 = vmax.f32 %v1374, 0.0
  %v1429 = vmax.f32 %v1379, 0.0
  %v1430 = vmax.f32 %v1382, 0.0
  %v1431 = vmax.f32 %v1387, 0.0
  %v1432 = vmax.f32 %v1390, 0.0
  %v1433 = vmax.f32 %v1395, 0.0
  %v1434 = vmax.f32 %v1398, 0.0
  %v1435 = vmax.f32 %v1403, 0.0
  %v1436 = vmax.f32 %v1406, 0.0
  %v1437 = vmax.f32 %v1411, 0.0
  %v1438 = vmax.f32 %v1414, 0.0
  %v1439 = vmax.f32 %v1419, 0.0
  %v1440 = vmax.f32 %v1422, 0.0
  %v1441 = vld [vmem:[%s11] sm:$0xf]
  %v1442 = vld [vmem:[%s11 + $0x4] sm:$0xf]
  %v1443 = vld [vmem:[%s11 + $0x8] sm:$0xf]
  %v1444 = vld [vmem:[%s11 + $0xc] sm:$0xf]
  %v1445 = vld [vmem:[%s11 + $0x10] sm:$0xf]
  %v1446 = vld [vmem:[%s11 + $0x14] sm:$0xf]
  %v1447 = vld [vmem:[%s11 + $0x18] sm:$0xf]
  %v1448 = vld [vmem:[%s11 + $0x1c] sm:$0xf]
  %v1449 = vld [vmem:[%s11 + $0x20] sm:$0xf]
  %v1450 = vld [vmem:[%s11 + $0x24] sm:$0xf]
  %v1451 = vld [vmem:[%s11 + $0x28] sm:$0xf]
  %v1452 = vld [vmem:[%s11 + $0x2c] sm:$0xf]
  %v1453 = vld [vmem:[%s11 + $0x30] sm:$0xf]
  %v1454 = vld [vmem:[%s11 + $0x34] sm:$0xf]
  %v1455 = vld [vmem:[%s11 + $0x38] sm:$0xf]
  %v1456 = vld [vmem:[%s11 + $0x3c] sm:$0xf]
  %v1457 = vpack.c.bf16 %v1426, %v1425
  %v1458 = vpack.c.bf16 %v1428, %v1427
  %v1459 = vpack.c.bf16 %v1430, %v1429
  %v1460 = vpack.c.bf16 %v1432, %v1431
  %v1461 = vpack.c.bf16 %v1434, %v1433
  %v1462 = vpack.c.bf16 %v1436, %v1435
  %v1463 = vpack.c.bf16 %v1438, %v1437
  %v1464 = vpack.c.bf16 %v1440, %v1439
  %v1481 = vunpack.c.l.b16 %v1441
  %v1482 = vunpack.c.l.b16 %v1442
  %v1483 = vunpack.c.l.b16 %v1443
  %v1484 = vunpack.c.l.b16 %v1444
  %v1485 = vunpack.c.l.b16 %v1445
  %v1486 = vunpack.c.l.b16 %v1446
  %v1487 = vunpack.c.l.b16 %v1447
  %v1488 = vunpack.c.l.b16 %v1448
  %v1489 = vunpack.c.l.b16 %v1449
  %v1490 = vunpack.c.l.b16 %v1450
  %v1491 = vunpack.c.l.b16 %v1451
  %v1492 = vunpack.c.l.b16 %v1452
  %v1493 = vunpack.c.l.b16 %v1453
  %v1494 = vunpack.c.l.b16 %v1454
  %v1495 = vunpack.c.l.b16 %v1455
  %v1496 = vunpack.c.l.b16 %v1456
  %v1497 = vpack.c.b16 %v1482, %v1481
  %v1498 = vpack.c.b16 %v1484, %v1483
  %v1499 = vpack.c.b16 %v1486, %v1485
  %v1500 = vpack.c.b16 %v1488, %v1487
  %v1501 = vpack.c.b16 %v1490, %v1489
  %v1502 = vpack.c.b16 %v1492, %v1491
  %v1503 = vpack.c.b16 %v1494, %v1493
  %v1504 = vpack.c.b16 %v1496, %v1495
  %1513 = vmatprep.subr.bf16.mxu0 0
  %1514 = vmatpush1.bf16.msra.mxu0 %v1504
  %1515 = vmatprep.subr.bf16.mxu0 0
  %1516 = vmatpush1.bf16.msra.mxu0 %v1503
  %1517 = vmatprep.subr.bf16.mxu0 0
  %1518 = vmatpush1.bf16.msra.mxu0 %v1502
  %1519 = vmatprep.subr.bf16.mxu0 0
  %1520 = vmatpush1.bf16.msra.mxu0 %v1501
  %1521 = vmatprep.subr.bf16.mxu0 0
  %1522 = vmatpush1.bf16.msra.mxu0 %v1500
  %1523 = vmatprep.subr.bf16.mxu0 0
  %1524 = vmatpush1.bf16.msra.mxu0 %v1499
  %1525 = vmatprep.subr.bf16.mxu0 0
  %1526 = vmatpush1.bf16.msra.mxu0 %v1498
  %1527 = vmatprep.subr.bf16.mxu0 0
  %1528 = vmatpush1.bf16.msra.mxu0 %v1497
  %1529 = vmatprep.subr.bf16.mxu0 0
  %1530 = vmatpush2.bf16.msra.mxu0 0
  %1531 = vmatprep.subr.bf16.mxu0 0
  %1532 = vmatpush2.bf16.msra.mxu0 0
  %1533 = vmatprep.subr.bf16.mxu0 0
  %1534 = vmatpush2.bf16.msra.mxu0 0
  %1535 = vmatprep.subr.bf16.mxu0 0
  %1536 = vmatpush2.bf16.msra.mxu0 0
  %1537 = vmatprep.subr.bf16.mxu0 0
  %1538 = vmatpush2.bf16.msra.mxu0 0
  %1539 = vmatprep.subr.bf16.mxu0 0
  %1540 = vmatpush2.bf16.msra.mxu0 0
  %1541 = vmatprep.subr.bf16.mxu0 0
  %1542 = vmatpush2.bf16.msra.mxu0 0
  %1543 = vmatprep.subr.bf16.mxu0 0
  %1544 = vmatpush2.bf16.msra.mxu0 0
  %1545 = vmatprep.mubr.bf16.mxu0 0
  %1546 = vmatmul.mubr.bf16.gmra.mxu0 %v1457
  %v1547 = vpop.f32.mrf.mxu0
  %v1548 = vadd.f32 0.0, %v1547
  %v1549 = vpop.f32.mrf.mxu0
  %v1550 = vpop.f32.mrf.mxu0
  %v1551 = vadd.f32 0.0, %v1550
  %v1552 = vpop.f32.mrf.mxu0
  %1553 = vmatprep.mubr.bf16.mxu0 0
  %1554 = vmatmul.mubr.bf16.gmra.mxu0 %v1458
  %v1555 = vpop.f32.mrf.mxu0
  %v1556 = vadd.f32 0.0, %v1555
  %v1557 = vpop.f32.mrf.mxu0
  %v1558 = vpop.f32.mrf.mxu0
  %v1559 = vadd.f32 0.0, %v1558
  %v1560 = vpop.f32.mrf.mxu0
  %1561 = vmatprep.mubr.bf16.mxu0 0
  %1562 = vmatmul.mubr.bf16.gmra.mxu0 %v1459
  %v1563 = vpop.f32.mrf.mxu0
  %v1564 = vadd.f32 0.0, %v1563
  %v1565 = vpop.f32.mrf.mxu0
  %v1566 = vpop.f32.mrf.mxu0
  %v1567 = vadd.f32 0.0, %v1566
  %v1568 = vpop.f32.mrf.mxu0
  %1569 = vmatprep.mubr.bf16.mxu0 0
  %1570 = vmatmul.mubr.bf16.gmra.mxu0 %v1460
  %v1571 = vpop.f32.mrf.mxu0
  %v1572 = vadd.f32 0.0, %v1571
  %v1573 = vpop.f32.mrf.mxu0
  %v1574 = vpop.f32.mrf.mxu0
  %v1575 = vadd.f32 0.0, %v1574
  %v1576 = vpop.f32.mrf.mxu0
  %1577 = vmatprep.mubr.bf16.mxu0 0
  %1578 = vmatmul.mubr.bf16.gmra.mxu0 %v1461
  %v1579 = vpop.f32.mrf.mxu0
  %v1580 = vadd.f32 0.0, %v1579
  %v1581 = vpop.f32.mrf.mxu0
  %v1582 = vpop.f32.mrf.mxu0
  %v1583 = vadd.f32 0.0, %v1582
  %v1584 = vpop.f32.mrf.mxu0
  %1585 = vmatprep.mubr.bf16.mxu0 0
  %1586 = vmatmul.mubr.bf16.gmra.mxu0 %v1462
  %v1587 = vpop.f32.mrf.mxu0
  %v1588 = vadd.f32 0.0, %v1587
  %v1589 = vpop.f32.mrf.mxu0
  %v1590 = vpop.f32.mrf.mxu0
  %v1591 = vadd.f32 0.0, %v1590
  %v1592 = vpop.f32.mrf.mxu0
  %1593 = vmatprep.mubr.bf16.mxu0 0
  %1594 = vmatmul.mubr.bf16.gmra.mxu0 %v1463
  %v1595 = vpop.f32.mrf.mxu0
  %v1596 = vadd.f32 0.0, %v1595
  %v1597 = vpop.f32.mrf.mxu0
  %v1598 = vpop.f32.mrf.mxu0
  %v1599 = vadd.f32 0.0, %v1598
  %v1600 = vpop.f32.mrf.mxu0
  %1601 = vmatprep.mubr.bf16.mxu0 0
  %1602 = vmatmul.mubr.bf16.gmra.mxu0 %v1464
  %v1603 = vpop.f32.mrf.mxu0
  %v1604 = vadd.f32 0.0, %v1603
  %v1605 = vpop.f32.mrf.mxu0
  %v1606 = vpop.f32.mrf.mxu0
  %v1607 = vadd.f32 0.0, %v1606
  %v1608 = vpop.f32.mrf.mxu0
  %1609 = vdwg.mxu0
  %v1610 = vpack.c.bf16 %v1551, %v1548
  %v1611 = vpack.c.bf16 %v1559, %v1556
  %v1612 = vpack.c.bf16 %v1567, %v1564
  %v1613 = vpack.c.bf16 %v1575, %v1572
  %v1614 = vpack.c.bf16 %v1583, %v1580
  %v1615 = vpack.c.bf16 %v1591, %v1588
  %v1616 = vpack.c.bf16 %v1599, %v1596
  %v1617 = vpack.c.bf16 %v1607, %v1604
  %v1626 = vunpack.c.l.b16 %v1610
  %v1627 = vunpack.c.h.b16 %v1610
  %v1628 = vunpack.c.l.b16 %v1611
  %v1629 = vunpack.c.h.b16 %v1611
  %v1630 = vunpack.c.l.b16 %v1612
  %v1631 = vunpack.c.h.b16 %v1612
  %v1632 = vunpack.c.l.b16 %v1613
  %v1633 = vunpack.c.h.b16 %v1613
  %v1634 = vunpack.c.l.b16 %v1614
  %v1635 = vunpack.c.h.b16 %v1614
  %v1636 = vunpack.c.l.b16 %v1615
  %v1637 = vunpack.c.h.b16 %v1615
  %v1638 = vunpack.c.l.b16 %v1616
  %v1639 = vunpack.c.h.b16 %v1616
  %v1640 = vunpack.c.l.b16 %v1617
  %v1641 = vunpack.c.h.b16 %v1617
  %v1642 = vpack.c.b16 %v1626, %v1626
  %v1643 = vpack.c.b16 %v1627, %v1627
  %v1644 = vpack.c.b16 %v1628, %v1628
  %v1645 = vpack.c.b16 %v1629, %v1629
  %v1646 = vpack.c.b16 %v1630, %v1630
  %v1647 = vpack.c.b16 %v1631, %v1631
  %v1648 = vpack.c.b16 %v1632, %v1632
  %v1649 = vpack.c.b16 %v1633, %v1633
  %v1650 = vpack.c.b16 %v1634, %v1634
  %v1651 = vpack.c.b16 %v1635, %v1635
  %v1652 = vpack.c.b16 %v1636, %v1636
  %v1653 = vpack.c.b16 %v1637, %v1637
  %v1654 = vpack.c.b16 %v1638, %v1638
  %v1655 = vpack.c.b16 %v1639, %v1639
  %v1656 = vpack.c.b16 %v1640, %v1640
  %v1657 = vpack.c.b16 %v1641, %v1641
  %1674 = vst [vmem:[%s13] sm:$0xf] %v1642
  %1675 = vst [vmem:[%s13 + $0x4] sm:$0xf] %v1643
  %1676 = vst [vmem:[%s13 + $0x8] sm:$0xf] %v1644
  %1677 = vst [vmem:[%s13 + $0xc] sm:$0xf] %v1645
  %1678 = vst [vmem:[%s13 + $0x10] sm:$0xf] %v1646
  %1679 = vst [vmem:[%s13 + $0x14] sm:$0xf] %v1647
  %1680 = vst [vmem:[%s13 + $0x18] sm:$0xf] %v1648
  %1681 = vst [vmem:[%s13 + $0x1c] sm:$0xf] %v1649
  %1682 = vst [vmem:[%s13 + $0x20] sm:$0xf] %v1650
  %1683 = vst [vmem:[%s13 + $0x24] sm:$0xf] %v1651
  %1684 = vst [vmem:[%s13 + $0x28] sm:$0xf] %v1652
  %1685 = vst [vmem:[%s13 + $0x2c] sm:$0xf] %v1653
  %1686 = vst [vmem:[%s13 + $0x30] sm:$0xf] %v1654
  %1687 = vst [vmem:[%s13 + $0x34] sm:$0xf] %v1655
  %1688 = vst [vmem:[%s13 + $0x38] sm:$0xf] %v1656
  %1689 = vst [vmem:[%s13 + $0x3c] sm:$0xf] %v1657
  // Predicated region
  $region50: #{densenet3_forward.9} parent=0 // pred_check
    _
  $region51: #{densenet3_forward.9} parent=0 // pred_check_branch
    %1691 = sbr.rel (0) target = $region53
  $region52: #{densenet3_forward.9} parent=0 // pred_region
    _
  $region53: #{densenet3_forward.9} parent=0 // pred_fallthru
    _
  // Predicated region
  $region54: #{densenet3_forward.9} parent=0 // pred_check
    _
  $region55: #{densenet3_forward.9} parent=0 // pred_check_branch
    %1693 = sbr.rel (0) target = $region57
  $region56: #{densenet3_forward.9} parent=0 // pred_region
    _
  $region57: #{densenet3_forward.9} parent=0 // pred_fallthru
    _
  // Predicated region
  $region58: #{densenet3_forward.9} parent=0 // pred_check
    _
  $region59: #{densenet3_forward.9} parent=0 // pred_check_branch
    %1695 = sbr.rel (0) target = $region61
  $region60: #{densenet3_forward.9} parent=0 // pred_region
    _
  $region61: #{densenet3_forward.9} parent=0 // pred_fallthru
    _
  // Predicated region
  $region62: #{densenet3_forward.9} parent=0 // pred_check
    _
  $region63: #{densenet3_forward.9} parent=0 // pred_check_branch
    %1697 = sbr.rel (0) target = $region65
  $region64: #{densenet3_forward.9} parent=0 // pred_region
    _
  $region65: #{densenet3_forward.9} parent=0 // pred_fallthru
    _

</llo_original>
